<compile_context>
chip_gen: v7x
topology: tpu7x:2x2x1
jax: 0.10.0
libtpu: 0.0.40
codegen_flags: <defaults>
</compile_context>

<pallas_src>
import math

import numpy as np

import jax
import jax.numpy as jnp
from jax.experimental import pallas as pl
from jax.experimental.pallas import tpu as pltpu


# ----------------------------------------------------------------------------
# Glue: exact affine_grid + grid_sample (align_corners=False) as a dense matrix
# ----------------------------------------------------------------------------
def build_grid_sample_matrix(block_size, radian):
    """Dense (P, P) matrix M with out_flat = M @ in_flat reproducing
    F.grid_sample(F.affine_grid(theta, ...), bilinear, zeros, align_corners=False)
    for theta = [[cos, -sin*h/w, 0], [sin*w/h, cos, 0]] on a square block."""
    H = W = block_size
    P = H * W
    xs = (2.0 * np.arange(W) + 1.0) / W - 1.0          # base grid x (align_corners=False)
    ys = (2.0 * np.arange(H) + 1.0) / H - 1.0          # base grid y
    cos_r, sin_r = math.cos(radian), math.sin(radian)
    gx = cos_r * xs[None, :] + (-sin_r) * (H / W) * ys[:, None]
    gy = sin_r * (W / H) * xs[None, :] + cos_r * ys[:, None]
    ix = ((gx + 1.0) * W - 1.0) / 2.0                  # unnormalize (align_corners=False)
    iy = ((gy + 1.0) * H - 1.0) / 2.0
    x0 = np.floor(ix).astype(np.int64)
    y0 = np.floor(iy).astype(np.int64)
    M = np.zeros((P, P), dtype=np.float64)
    for i in range(H):
        for j in range(W):
            q = i * W + j
            xx0, yy0 = x0[i, j], y0[i, j]
            wx1 = ix[i, j] - xx0
            wx0 = 1.0 - wx1
            wy1 = iy[i, j] - yy0
            wy0 = 1.0 - wy1
            for (yy, wy) in ((yy0, wy0), (yy0 + 1, wy1)):
                for (xx, wx) in ((xx0, wx0), (xx0 + 1, wx1)):
                    if 0 <= yy < H and 0 <= xx < W:
                        M[q, yy * W + xx] += wy * wx   # zero padding outside
    return M


def _clamp_start(start, size, limit):
    if start < 0:
        return 0
    if start + size > limit:
        return limit - size
    return start


def _ceil_to(x, m):
    return ((x + m - 1) // m) * m


# ----------------------------------------------------------------------------
# Pallas kernel: BB packed image blocks per grid step, one angle chunk.
# ----------------------------------------------------------------------------
def _block_affine_kernel(fm1_ref, fm2_ref, rep_ref, w_ref, mv_ref, out_ref):
    """Fused rotate+shift candidate evaluation for a packed group of blocks.

    fm1_ref: (P, BB*R)        fm1 tiles of the packed blocks (f32, NOT shift-replicated)
    fm2_ref: (P, BBLpad)      NS shifted fm2 windows of BB blocks packed on lanes (bf16)
    rep_ref: (BB*R, BBLpad)   constant 0/1 replication matrix (bf16)
    w_ref:   (NAC8*P, P)      angle-chunk of stacked grid_sample matrices (bf16, resident)
    mv_ref:  (NAC8*P, 1)      per-angle per-pixel mask weight, denominator folded (f32)
    out_ref: (NAC8, BBLpad)   pixel-summed weighted SE per (angle, lane)
    """
    nap, p = w_ref.shape
    na = nap // p                        # NAC8 (sublane-padded; padded rows have mv == 0)
    lanes = fm2_ref.shape[-1]

    # (1) All angles x all (shift, block, batch, chan) candidates in ONE MXU matmul.
    r = jnp.dot(w_ref[...], fm2_ref[...],
                preferred_element_type=jnp.float32)               # (na*p, lanes)

    # (2) Replicate the fm1 tile across the NS shift lane-groups with a constant 0/1
    #     matrix on the MXU (MXU has slack; avoids host-side NS-fold fm1 duplication and
    #     unaligned lane concatenation).  hi + residual bf16 passes keep ~f32 fidelity.
    f1 = fm1_ref[...]
    f1_hi = f1.astype(jnp.bfloat16)
    f1_lo = (f1 - f1_hi.astype(jnp.float32)).astype(jnp.bfloat16)
    rep = rep_ref[...]
    f1t = (jnp.dot(f1_hi, rep, preferred_element_type=jnp.float32)
           + jnp.dot(f1_lo, rep, preferred_element_type=jnp.float32))   # (p, lanes)

    # (3) Masked, denominator-folded squared error; pixel reduction on the VPU.
    d = r.reshape(na, p, lanes) - f1t[None, :, :]
    se = d * d * mv_ref[...].reshape(na, p, 1)
    out_ref[...] = jnp.sum(se, axis=1)                            # lane/sublane-dense store


# ----------------------------------------------------------------------------
# Module wrapper
# ----------------------------------------------------------------------------
class ImageBlockRotationAndTranslationPallas:
    def __init__(self, i_block_size, i_v_shift, i_h_shift, i_angle, i_topk=16):
        self.block_size = i_block_size
        self.v_shift = i_v_shift
        self.h_shift = i_h_shift
        self.angle = i_angle
        self.topk = i_topk
        self._mats, self._mvecs = [], []
        for a in range(-i_angle, i_angle + 1):
            M = build_grid_sample_matrix(i_block_size, a * math.pi / 180.0)
            self._mats.append(M.astype(np.float32))
            self._mvecs.append(M.sum(axis=1).astype(np.float32))   # r_mask (ones sampled)

    def __call__(self, i_fm1, i_fm2, training=True):
        b, c, h, w = i_fm1.shape
        bs = self.block_size
        P = bs * bs
        R = b * c
        NA = 2 * self.angle + 1
        NS = (2 * self.h_shift + 1) * (2 * self.v_shift + 1)

        if self.v_shift == self.h_shift == self.angle == 0:
            # mse_loss fallback path (no affine search) -- plain JAX glue.
            se = (i_fm1 - i_fm2) ** 2
            return se.reshape(b, -1).sum(axis=1) / i_fm1.size * b

        # TODO(synk): ragged (non block_size-divisible) maps use a different slicing rule
        # in the reference; not supported by the index-table construction below.
        assert h % bs == 0 and w % bs == 0, "h, w must be divisible by block_size"

        # ---- VMEM budget: query hardware (v7x has only 64 MiB per TensorCore) ----
        try:
            vmem_cap = int(pltpu.get_tpu_info().vmem_capacity_bytes)
        except Exception:
            vmem_cap = 64 * 1024 * 1024
        vmem_limit = int(min((vmem_cap * 3) // 4, 100 * 1024 * 1024))

        # ---- angle chunking so the resident W stack fits the VMEM budget (v7x) ----
        per_angle_bytes = 2 * (P * P * 2 + P * 128 * 4)   # bf16 W + lane-padded f32 mv, x2 bufs
        NAC = int(max(1, min(NA, (vmem_limit // 4) // per_angle_bytes)))
        AG = -(-NA // NAC)
        NAC8 = _ceil_to(NAC, 8)                           # sublane-dense output / W rows

        # ---- block packing along the lane axis (biggest lever per the perf review) ----
        p_dy = np.arange(P) // bs
        p_dx = np.arange(P) % bs
        blocks = [(sy, sx) for sx in range(0, w, bs) for sy in range(0, h, bs)]
        NB = len(blocks)
        L = NS * R
        bb_cap = (NB + 1) // 2 if NB >= 2 else 1          # keep >= 2 grid steps for v7x megacore
        BB = max(1, min(bb_cap, -(-512 // L)))            # target >= 512 lanes per matmul

        def _step_bytes(bb):
            bblp = _ceil_to(bb * L, 128)
            return 2 * (P * bblp * 2 + P * bb * R * 4 + NAC8 * bblp * 4 + bb * R * bblp * 2)

        while BB > 1 and _step_bytes(BB) > vmem_limit // 2:
            BB -= 1
        Gsteps = -(-NB // BB)
        NBp = Gsteps * BB
        BBR = BB * R
        BBL = BB * L
        BBLpad = _ceil_to(BBL, 128)

        # ---- static (block, shift) -> flat pixel index tables (clamped boundary rule) ----
        fidx = np.empty((NBp, P), np.int32)
        gidx = np.empty((NBp, NS, P), np.int32)
        for bi in range(NBp):
            sy, sx = blocks[bi] if bi < NB else blocks[0]   # pad dummies with block 0
            fidx[bi] = (sy + p_dy) * w + (sx + p_dx)
            si = 0
            for dx in range(-self.h_shift, self.h_shift + 1):
                for dy in range(-self.v_shift, self.v_shift + 1):
                    y0 = _clamp_start(sy + dy, bs, h)
                    x0 = _clamp_start(sx + dx, bs, w)
                    gidx[bi, si] = (y0 + p_dy) * w + (x0 + p_dx)
                    si += 1

        # pixel-major / (batch*channel)-minor layout: lane axis carries batch*channel
        fm1_flat = jnp.transpose(i_fm1, (2, 3, 0, 1)).reshape(h * w, R).astype(jnp.float32)
        fm2_flat = jnp.transpose(i_fm2, (2, 3, 0, 1)).reshape(h * w, R).astype(jnp.bfloat16)

        # fm2: NS shifted windows of BB blocks packed along lanes, (shift, block, b*c) order.
        # TODO(synk): this host-side gather still materializes an NS-fold duplicated fm2 slab
        # in HBM; for large maps move it in-kernel (fm2 in pl.ANY + scalar-prefetched window
        # offsets + pltpu.make_async_copy) to cut fm2 HBM reads ~NS x.
        g = fm2_flat[jnp.asarray(gidx)]                                   # (NBp, NS, P, R)
        g = g.reshape(Gsteps, BB, NS, P, R)
        g = jnp.transpose(g, (0, 3, 2, 1, 4)).reshape(Gsteps, P, BBL)
        if BBLpad != BBL:
            g = jnp.pad(g, ((0, 0), (0, 0), (0, BBLpad - BBL)))
        fm2_slab = g

        # fm1: one (P, BB*R) tile per step -- NOT shift-replicated (done in-kernel via rep).
        f = fm1_flat[jnp.asarray(fidx)]                                   # (NBp, P, R)
        fm1_slab = (f.reshape(Gsteps, BB, P, R)
                     .transpose(0, 2, 1, 3).reshape(Gsteps, P, BBR))

        # constant 0/1 lane-replication matrix: rep[j, s*BBR + j] = 1
        rep_np = np.zeros((BBR, BBLpad), np.float32)
        for s in range(NS):
            rep_np[np.arange(BBR), s * BBR + np.arange(BBR)] = 1.0
        rep = jnp.asarray(rep_np).astype(jnp.bfloat16)

        # angle-chunked W stack (bf16) and mask weights with the denominator folded in
        w_np = np.zeros((AG, NAC8 * P, P), np.float32)
        mv_np = np.zeros((AG, NAC8 * P, 1), np.float32)
        for a in range(NA):
            ac, al = divmod(a, NAC)
            w_np[ac, al * P:(al + 1) * P, :] = self._mats[a]
            mv_np[ac, al * P:(al + 1) * P, 0] = (
                self._mvecs[a] / (c * float(self._mvecs[a].sum()) + 1e-11))
        w_stack = jnp.asarray(w_np).astype(jnp.bfloat16)
        mv_stack = jnp.asarray(mv_np)

        cost = pl.CostEstimate(
            flops=int(AG * Gsteps * (2 * NAC8 * P * P * BBLpad
                                     + 4 * P * BBR * BBLpad
                                     + 3 * NAC8 * P * BBLpad)),
            transcendentals=0,
            bytes_accessed=int(AG * Gsteps * (P * BBLpad * 2 + P * BBR * 4
                                              + NAC8 * BBLpad * 4)
                               + AG * NAC8 * P * (P * 2 + 4)
                               + BBR * BBLpad * 2))

        def _resident_spec(block_shape, index_map, single_buffer):
            # Constant/slow-changing inputs don't need a second pipeline buffer (perf
            # feedback): halves their VMEM reservation, which matters on v7x (64 MiB).
            if single_buffer:
                return pl.BlockSpec(block_shape, index_map, pipeline_mode=pl.Buffered(1))
            return pl.BlockSpec(block_shape, index_map)

        def _build(single_buffer):
            return pl.pallas_call(
                _block_affine_kernel,
                out_shape=jax.ShapeDtypeStruct((AG, Gsteps, NAC8, BBLpad), jnp.float32),
                grid=(AG, Gsteps),
                in_specs=[
                    pl.BlockSpec((None, P, BBR), lambda a, i: (i, 0, 0)),     # fm1 tiles
                    pl.BlockSpec((None, P, BBLpad), lambda a, i: (i, 0, 0)),  # fm2 slab
                    _resident_spec((BBR, BBLpad), lambda a, i: (0, 0), single_buffer),
                    _resident_spec((None, NAC8 * P, P), lambda a, i: (a, 0, 0), single_buffer),
                    _resident_spec((None, NAC8 * P, 1), lambda a, i: (a, 0, 0), single_buffer),
                ],
                out_specs=pl.BlockSpec((None, None, NAC8, BBLpad),
                                       lambda a, i: (a, i, 0, 0)),
                compiler_params=pltpu.CompilerParams(
                    # blocks axis "parallel" -> v7x megacore shards the >=2 grid steps
                    dimension_semantics=("arbitrary", "parallel"),
                    vmem_limit_bytes=vmem_limit),
                cost_estimate=cost,
            )

        args = (fm1_slab, fm2_slab, rep, w_stack, mv_stack)
        try:
            per_step = _build(True)(*args)
        except Exception:
            # pipeline_mode / Buffered(1) unsupported in this Pallas build -> default pipeline
            per_step = _build(False)(*args)

        # Tiny final reductions in plain JAX: channel sum, min over (angle, shift), topk.
        x = per_step[..., :BBL]                                            # drop lane padding
        x = x.reshape(AG, Gsteps, NAC8, NS, BB, b, c).sum(axis=-1)         # channel sum
        x = jnp.transpose(x, (1, 4, 0, 2, 3, 5)).reshape(Gsteps * BB, AG * NAC8, NS, b)
        valid_angle_idx = np.concatenate(
            [ac * NAC8 + np.arange(min(NAC, NA - ac * NAC)) for ac in range(AG)])
        x = jnp.take(x[:NB], jnp.asarray(valid_angle_idx, dtype=np.int32), axis=1)
        min_dist = x.min(axis=(1, 2))                                      # (NB, b)

        if training:
            return jnp.sum(min_dist, axis=0)
        k = min(self.topk, NB)
        return jnp.sum(jnp.sort(min_dist, axis=0)[:k], axis=0)


# ----------------------------------------------------------------------------
# Pure numpy reference (mirrors the PyTorch forward semantics)
# ----------------------------------------------------------------------------
def reference_forward(fm1, fm2, block_size, v_shift, h_shift, angle, topk, training):
    fm1 = np.asarray(fm1, dtype=np.float64)
    fm2 = np.asarray(fm2, dtype=np.float64)
    b, c, h, w = fm1.shape
    bs = block_size
    P = bs * bs
    mats = [build_grid_sample_matrix(bs, a * math.pi / 180.0)
            for a in range(-angle, angle + 1)]
    block_mins = []
    for sub_x in range(0, w, bs):
        for sub_y in range(0, h, bs):
            sub1 = fm1[:, :, sub_y:sub_y + bs, sub_x:sub_x + bs].reshape(b, c, P)
            cands = []
            for dx in range(-h_shift, h_shift + 1):
                for dy in range(-v_shift, v_shift + 1):
                    y0 = _clamp_start(sub_y + dy, bs, h)
                    x0 = _clamp_start(sub_x + dx, bs, w)
                    sub2 = fm2[:, :, y0:y0 + bs, x0:x0 + bs].reshape(b, c, P)
                    for M in mats:
                        r2 = sub2 @ M.T
                        rmask = M.sum(axis=1)
                        num = (((sub1 - r2) ** 2) * rmask).reshape(b, -1).sum(axis=1)
                        den = c * rmask.sum() + 1e-11
                        cands.append(num / den)
            block_mins.append(np.min(np.stack(cands), axis=0))
    md = np.stack(block_mins)                                    # (NB, b)
    if training:
        return md.sum(axis=0)
    k = min(topk, md.shape[0])
    return np.sort(md, axis=0)[:k].sum(axis=0)


if __name__ == "__main__":
    B, C, H, W = 2, 4, 16, 16
    key = jax.random.PRNGKey(0)
    k1, k2 = jax.random.split(key)
    fm1 = jax.random.normal(k1, (B, C, H, W), dtype=jnp.float32)
    fm2 = jax.random.normal(k2, (B, C, H, W), dtype=jnp.float32)

    module = ImageBlockRotationAndTranslationPallas(
        i_block_size=8, i_v_shift=1, i_h_shift=1, i_angle=2, i_topk=2)

    # training mode (nn.Module default)
    out = jax.block_until_ready(module(fm1, fm2, training=True))
    ref = reference_forward(np.asarray(fm1), np.asarray(fm2),
                            block_size=8, v_shift=1, h_shift=1, angle=2,
                            topk=2, training=True)
    assert out.shape == (B,)
    # bf16 operand storage on the MXU path -> slightly looser tolerance than f64 reference
    assert np.allclose(np.asarray(out), ref, rtol=1e-2, atol=5e-3), (np.asarray(out), ref)

    # eval mode (topk over blocks)
    out_e = jax.block_until_ready(module(fm1, fm2, training=False))
    ref_e = reference_forward(np.asarray(fm1), np.asarray(fm2),
                              block_size=8, v_shift=1, h_shift=1, angle=2,
                              topk=2, training=False)
    assert out_e.shape == (B,)
    assert np.allclose(np.asarray(out_e), ref_e, rtol=1e-2, atol=5e-3), (np.asarray(out_e), ref_e)

    print("KERNEL_OK")
</pallas_src>

<mosaic_0001>
module attributes {stable_mosaic.version = 11 : i64} {
  func.func @_block_affine_kernel(%arg0: i32, %arg1: i32, %arg2: memref<1x64x16xf32, #tpu.memory_space<vmem>>, %arg3: memref<1x64x256xbf16, #tpu.memory_space<vmem>>, %arg4: memref<16x256xbf16, #tpu.memory_space<vmem>>, %arg5: memref<1x512x64xbf16, #tpu.memory_space<vmem>>, %arg6: memref<1x512x1xf32, #tpu.memory_space<vmem>>, %arg7: memref<1x1x8x256xf32, #tpu.memory_space<vmem>>) attributes {dimension_semantics = [#tpu.dimension_semantics<arbitrary>, #tpu.dimension_semantics<parallel>], iteration_bounds = array<i64: 1, 2>, scalar_prefetch = 0 : i64, scratch_operands = 0 : i64, tpu.core_type = #tpu.core_type<tc>, window_params = [{transform_indices = @transform_0, window_bounds = array<i64: 1, 64, 16>}, {transform_indices = @transform_1, window_bounds = array<i64: 1, 64, 256>}, {pipeline_mode = #tpu.pipeline_mode<synchronous>, transform_indices = @transform_2, window_bounds = array<i64: 16, 256>}, {pipeline_mode = #tpu.pipeline_mode<synchronous>, transform_indices = @transform_3, window_bounds = array<i64: 1, 512, 64>}, {pipeline_mode = #tpu.pipeline_mode<synchronous>, transform_indices = @transform_4, window_bounds = array<i64: 1, 512, 1>}, {transform_indices = @transform_5, window_bounds = array<i64: 1, 1, 8, 256>}]} {
    %c0 = arith.constant 0 : index
    %c0_0 = arith.constant 0 : index
    %c0_1 = arith.constant 0 : index
    %0 = vector.load %arg5[%c0, %c0_0, %c0_1] : memref<1x512x64xbf16, #tpu.memory_space<vmem>>, vector<1x512x64xbf16>
    %1 = vector.shape_cast %0 : vector<1x512x64xbf16> to vector<512x64xbf16>
    %c0_2 = arith.constant 0 : index
    %c0_3 = arith.constant 0 : index
    %c0_4 = arith.constant 0 : index
    %2 = vector.load %arg3[%c0_2, %c0_3, %c0_4] : memref<1x64x256xbf16, #tpu.memory_space<vmem>>, vector<1x64x256xbf16>
    %3 = vector.shape_cast %2 : vector<1x64x256xbf16> to vector<64x256xbf16>
    %cst = arith.constant dense<0.000000e+00> : vector<512x256xf32>
    %4 = tpu.matmul %1, %3, %cst {dimension_numbers = #tpu.dot_dimension_numbers<[1], [0], [0], [1], [0, 0, 1, 1], [], []>} : vector<512x64xbf16>, vector<64x256xbf16>, vector<512x256xf32> -> vector<512x256xf32>
    %c0_5 = arith.constant 0 : index
    %c0_6 = arith.constant 0 : index
    %c0_7 = arith.constant 0 : index
    %5 = vector.load %arg2[%c0_5, %c0_6, %c0_7] : memref<1x64x16xf32, #tpu.memory_space<vmem>>, vector<1x64x16xf32>
    %6 = vector.shape_cast %5 : vector<1x64x16xf32> to vector<64x16xf32>
    %7 = arith.truncf %6 : vector<64x16xf32> to vector<64x16xbf16>
    %8 = arith.extf %7 : vector<64x16xbf16> to vector<64x16xf32>
    %9 = arith.subf %6, %8 : vector<64x16xf32>
    %10 = arith.truncf %9 : vector<64x16xf32> to vector<64x16xbf16>
    %c0_8 = arith.constant 0 : index
    %c0_9 = arith.constant 0 : index
    %11 = vector.load %arg4[%c0_8, %c0_9] : memref<16x256xbf16, #tpu.memory_space<vmem>>, vector<16x256xbf16>
    %cst_10 = arith.constant dense<0.000000e+00> : vector<64x256xf32>
    %12 = tpu.matmul %7, %11, %cst_10 {dimension_numbers = #tpu.dot_dimension_numbers<[1], [0], [0], [1], [0, 0, 1, 1], [], []>} : vector<64x16xbf16>, vector<16x256xbf16>, vector<64x256xf32> -> vector<64x256xf32>
    %cst_11 = arith.constant dense<0.000000e+00> : vector<64x256xf32>
    %13 = tpu.matmul %10, %11, %cst_11 {dimension_numbers = #tpu.dot_dimension_numbers<[1], [0], [0], [1], [0, 0, 1, 1], [], []>} : vector<64x16xbf16>, vector<16x256xbf16>, vector<64x256xf32> -> vector<64x256xf32>
    %14 = arith.addf %12, %13 : vector<64x256xf32>
    %15 = vector.shape_cast %4 : vector<512x256xf32> to vector<8x64x256xf32>
    %16 = vector.shape_cast %14 : vector<64x256xf32> to vector<1x64x256xf32>
    %17 = vector.broadcast %16 : vector<1x64x256xf32> to vector<8x64x256xf32>
    %18 = arith.subf %15, %17 : vector<8x64x256xf32>
    %19 = arith.mulf %18, %18 : vector<8x64x256xf32>
    %c0_12 = arith.constant 0 : index
    %c0_13 = arith.constant 0 : index
    %c0_14 = arith.constant 0 : index
    %20 = vector.load %arg6[%c0_12, %c0_13, %c0_14] : memref<1x512x1xf32, #tpu.memory_space<vmem>>, vector<1x512x1xf32>
    %21 = vector.shape_cast %20 : vector<1x512x1xf32> to vector<512x1xf32>
    %22 = vector.shape_cast %21 : vector<512x1xf32> to vector<8x64x1xf32>
    %23 = vector.broadcast %22 : vector<8x64x1xf32> to vector<8x64x256xf32>
    %24 = arith.mulf %19, %23 : vector<8x64x256xf32>
    %cst_15 = arith.constant dense<0.000000e+00> : vector<8x256xf32>
    %25 = vector.multi_reduction <add>, %24, %cst_15 [1] : vector<8x64x256xf32> to vector<8x256xf32>
    %c0_16 = arith.constant 0 : index
    %c0_17 = arith.constant 0 : index
    %c0_18 = arith.constant 0 : index
    %c0_19 = arith.constant 0 : index
    %26 = vector.load %arg7[%c0_16, %c0_17, %c0_18, %c0_19] : memref<1x1x8x256xf32, #tpu.memory_space<vmem>>, vector<1x1x8x256xf32>
    %27 = vector.shape_cast %26 : vector<1x1x8x256xf32> to vector<8x256xf32>
    %28 = vector.shape_cast %25 : vector<8x256xf32> to vector<1x1x8x256xf32>
    tpu.vector_store %arg7[%c0_16, %c0_17, %c0_18, %c0_19], %28 {strides = array<i32>} : memref<1x1x8x256xf32, #tpu.memory_space<vmem>>, vector<1x1x8x256xf32>,
    return
  }
  func.func @transform_0(%arg0: i32, %arg1: i32) -> (i32, i32, i32) {
    %c0_i32 = arith.constant 0 : i32
    %c0_i32_0 = arith.constant 0 : i32
    %c0_i32_1 = arith.constant 0 : i32
    return %arg1, %c0_i32, %c0_i32_0 : i32, i32, i32
  }
  func.func @transform_1(%arg0: i32, %arg1: i32) -> (i32, i32, i32) {
    %c0_i32 = arith.constant 0 : i32
    %c0_i32_0 = arith.constant 0 : i32
    %c0_i32_1 = arith.constant 0 : i32
    return %arg1, %c0_i32, %c0_i32_0 : i32, i32, i32
  }
  func.func @transform_2(%arg0: i32, %arg1: i32) -> (i32, i32) {
    %c0_i32 = arith.constant 0 : i32
    %c0_i32_0 = arith.constant 0 : i32
    %c0_i32_1 = arith.constant 0 : i32
    return %c0_i32, %c0_i32_0 : i32, i32
  }
  func.func @transform_3(%arg0: i32, %arg1: i32) -> (i32, i32, i32) {
    %c0_i32 = arith.constant 0 : i32
    %c0_i32_0 = arith.constant 0 : i32
    %c0_i32_1 = arith.constant 0 : i32
    return %arg0, %c0_i32, %c0_i32_0 : i32, i32, i32
  }
  func.func @transform_4(%arg0: i32, %arg1: i32) -> (i32, i32, i32) {
    %c0_i32 = arith.constant 0 : i32
    %c0_i32_0 = arith.constant 0 : i32
    %c0_i32_1 = arith.constant 0 : i32
    return %arg0, %c0_i32, %c0_i32_0 : i32, i32, i32
  }
  func.func @transform_5(%arg0: i32, %arg1: i32) -> (i32, i32, i32, i32) {
    %c0_i32 = arith.constant 0 : i32
    %c0_i32_0 = arith.constant 0 : i32
    %c0_i32_1 = arith.constant 0 : i32
    return %arg0, %arg1, %c0_i32, %c0_i32_0 : i32, i32, i32, i32
  }
}

module attributes {stable_mosaic.version = 11 : i64} {
  func.func @_block_affine_kernel(%arg0: i32, %arg1: i32, %arg2: memref<1x64x16xf32, #tpu.memory_space<vmem>>, %arg3: memref<1x64x256xbf16, #tpu.memory_space<vmem>>, %arg4: memref<16x256xbf16, #tpu.memory_space<vmem>>, %arg5: memref<1x512x64xbf16, #tpu.memory_space<vmem>>, %arg6: memref<1x512x1xf32, #tpu.memory_space<vmem>>, %arg7: memref<1x1x8x256xf32, #tpu.memory_space<vmem>>) attributes {dimension_semantics = [#tpu.dimension_semantics<arbitrary>, #tpu.dimension_semantics<parallel>], iteration_bounds = array<i64: 1, 2>, scalar_prefetch = 0 : i64, scratch_operands = 0 : i64, tpu.core_type = #tpu.core_type<tc>, window_params = [{transform_indices = @transform_0, window_bounds = array<i64: 1, 64, 16>}, {transform_indices = @transform_1, window_bounds = array<i64: 1, 64, 256>}, {pipeline_mode = #tpu.pipeline_mode<synchronous>, transform_indices = @transform_2, window_bounds = array<i64: 16, 256>}, {transform_indices = @transform_3, window_bounds = array<i64: 1, 512, 64>}, {transform_indices = @transform_4, window_bounds = array<i64: 1, 512, 1>}, {transform_indices = @transform_5, window_bounds = array<i64: 1, 1, 8, 256>}]} {
    %c0 = arith.constant 0 : index
    %c0_0 = arith.constant 0 : index
    %c0_1 = arith.constant 0 : index
    %0 = vector.load %arg5[%c0, %c0_0, %c0_1] : memref<1x512x64xbf16, #tpu.memory_space<vmem>>, vector<1x512x64xbf16>
    %1 = vector.shape_cast %0 : vector<1x512x64xbf16> to vector<512x64xbf16>
    %c0_2 = arith.constant 0 : index
    %c0_3 = arith.constant 0 : index
    %c0_4 = arith.constant 0 : index
    %2 = vector.load %arg3[%c0_2, %c0_3, %c0_4] : memref<1x64x256xbf16, #tpu.memory_space<vmem>>, vector<1x64x256xbf16>
    %3 = vector.shape_cast %2 : vector<1x64x256xbf16> to vector<64x256xbf16>
    %cst = arith.constant dense<0.000000e+00> : vector<512x256xf32>
    %4 = tpu.matmul %1, %3, %cst {dimension_numbers = #tpu.dot_dimension_numbers<[1], [0], [0], [1], [0, 0, 1, 1], [], []>} : vector<512x64xbf16>, vector<64x256xbf16>, vector<512x256xf32> -> vector<512x256xf32>
    %c0_5 = arith.constant 0 : index
    %c0_6 = arith.constant 0 : index
    %c0_7 = arith.constant 0 : index
    %5 = vector.load %arg2[%c0_5, %c0_6, %c0_7] : memref<1x64x16xf32, #tpu.memory_space<vmem>>, vector<1x64x16xf32>
    %6 = vector.shape_cast %5 : vector<1x64x16xf32> to vector<64x16xf32>
    %7 = arith.truncf %6 : vector<64x16xf32> to vector<64x16xbf16>
    %8 = arith.extf %7 : vector<64x16xbf16> to vector<64x16xf32>
    %9 = arith.subf %6, %8 : vector<64x16xf32>
    %10 = arith.truncf %9 : vector<64x16xf32> to vector<64x16xbf16>
    %c0_8 = arith.constant 0 : index
    %c0_9 = arith.constant 0 : index
    %11 = vector.load %arg4[%c0_8, %c0_9] : memref<16x256xbf16, #tpu.memory_space<vmem>>, vector<16x256xbf16>
    %cst_10 = arith.constant dense<0.000000e+00> : vector<64x256xf32>
    %12 = tpu.matmul %7, %11, %cst_10 {dimension_numbers = #tpu.dot_dimension_numbers<[1], [0], [0], [1], [0, 0, 1, 1], [], []>} : vector<64x16xbf16>, vector<16x256xbf16>, vector<64x256xf32> -> vector<64x256xf32>
    %cst_11 = arith.constant dense<0.000000e+00> : vector<64x256xf32>
    %13 = tpu.matmul %10, %11, %cst_11 {dimension_numbers = #tpu.dot_dimension_numbers<[1], [0], [0], [1], [0, 0, 1, 1], [], []>} : vector<64x16xbf16>, vector<16x256xbf16>, vector<64x256xf32> -> vector<64x256xf32>
    %14 = arith.addf %12, %13 : vector<64x256xf32>
    %15 = vector.shape_cast %4 : vector<512x256xf32> to vector<8x64x256xf32>
    %16 = vector.shape_cast %14 : vector<64x256xf32> to vector<1x64x256xf32>
    %17 = vector.broadcast %16 : vector<1x64x256xf32> to vector<8x64x256xf32>
    %18 = arith.subf %15, %17 : vector<8x64x256xf32>
    %19 = arith.mulf %18, %18 : vector<8x64x256xf32>
    %c0_12 = arith.constant 0 : index
    %c0_13 = arith.constant 0 : index
    %c0_14 = arith.constant 0 : index
    %20 = vector.load %arg6[%c0_12, %c0_13, %c0_14] : memref<1x512x1xf32, #tpu.memory_space<vmem>>, vector<1x512x1xf32>
    %21 = vector.shape_cast %20 : vector<1x512x1xf32> to vector<512x1xf32>
    %22 = vector.shape_cast %21 : vector<512x1xf32> to vector<8x64x1xf32>
    %23 = vector.broadcast %22 : vector<8x64x1xf32> to vector<8x64x256xf32>
    %24 = arith.mulf %19, %23 : vector<8x64x256xf32>
    %cst_15 = arith.constant dense<0.000000e+00> : vector<8x256xf32>
    %25 = vector.multi_reduction <add>, %24, %cst_15 [1] : vector<8x64x256xf32> to vector<8x256xf32>
    %c0_16 = arith.constant 0 : index
    %c0_17 = arith.constant 0 : index
    %c0_18 = arith.constant 0 : index
    %c0_19 = arith.constant 0 : index
    %26 = vector.load %arg7[%c0_16, %c0_17, %c0_18, %c0_19] : memref<1x1x8x256xf32, #tpu.memory_space<vmem>>, vector<1x1x8x256xf32>
    %27 = vector.shape_cast %26 : vector<1x1x8x256xf32> to vector<8x256xf32>
    %28 = vector.shape_cast %25 : vector<8x256xf32> to vector<1x1x8x256xf32>
    tpu.vector_store %arg7[%c0_16, %c0_17, %c0_18, %c0_19], %28 {strides = array<i32>} : memref<1x1x8x256xf32, #tpu.memory_space<vmem>>, vector<1x1x8x256xf32>,
    return
  }
  func.func @transform_0(%arg0: i32, %arg1: i32) -> (i32, i32, i32) {
    %c0_i32 = arith.constant 0 : i32
    %c0_i32_0 = arith.constant 0 : i32
    %c0_i32_1 = arith.constant 0 : i32
    return %arg1, %c0_i32, %c0_i32_0 : i32, i32, i32
  }
  func.func @transform_1(%arg0: i32, %arg1: i32) -> (i32, i32, i32) {
    %c0_i32 = arith.constant 0 : i32
    %c0_i32_0 = arith.constant 0 : i32
    %c0_i32_1 = arith.constant 0 : i32
    return %arg1, %c0_i32, %c0_i32_0 : i32, i32, i32
  }
  func.func @transform_2(%arg0: i32, %arg1: i32) -> (i32, i32) {
    %c0_i32 = arith.constant 0 : i32
    %c0_i32_0 = arith.constant 0 : i32
    %c0_i32_1 = arith.constant 0 : i32
    return %c0_i32, %c0_i32_0 : i32, i32
  }
  func.func @transform_3(%arg0: i32, %arg1: i32) -> (i32, i32, i32) {
    %c0_i32 = arith.constant 0 : i32
    %c0_i32_0 = arith.constant 0 : i32
    %c0_i32_1 = arith.constant 0 : i32
    return %arg0, %c0_i32, %c0_i32_0 : i32, i32, i32
  }
  func.func @transform_4(%arg0: i32, %arg1: i32) -> (i32, i32, i32) {
    %c0_i32 = arith.constant 0 : i32
    %c0_i32_0 = arith.constant 0 : i32
    %c0_i32_1 = arith.constant 0 : i32
    return %arg0, %c0_i32, %c0_i32_0 : i32, i32, i32
  }
  func.func @transform_5(%arg0: i32, %arg1: i32) -> (i32, i32, i32, i32) {
    %c0_i32 = arith.constant 0 : i32
    %c0_i32_0 = arith.constant 0 : i32
    %c0_i32_1 = arith.constant 0 : i32
    return %arg0, %arg1, %c0_i32, %c0_i32_0 : i32, i32, i32, i32
  }
}

</mosaic_0001>

<llo_original>
// kernel: tpu_custom_call.1
$region0: #{tpu_custom_call.1}
  #allocation0 [shape = 'u32[]', space=smem, size = 0x4, offset = 0x4, fixed_abs, tag = 'smem constant byte address 0x4 - core index']
  #allocation1 [shape = 'u32[144,128]{1,0:T(1,128)}', space=vmem, size = 0x12000, scoped, tag = 'internal scratch']
  %s0 = inlined_call_operand.vmem [shape: f32[2,64,16], index: 0, kind: input, shape index: {}]
  %s1 = inlined_call_operand.vmem [shape: bf16[2,64,256], index: 1, kind: input, shape index: {}]
  %s2 = inlined_call_operand.vmem [shape: bf16[16,256], index: 2, kind: input, shape index: {}]
  %s3 = inlined_call_operand.vmem [shape: bf16[1,512,64], index: 3, kind: input, shape index: {}]
  %s4 = inlined_call_operand.vmem [shape: f32[1,512,1], index: 4, kind: input, shape index: {}]
  %s5 = inlined_call_operand.hbm [shape: f32[1,2,8,256], index: 5, kind: output, shape index: {}]
  %s6 = sld [smem:[#allocation0]]
  $region53: #{tpu_custom_call.1} parent=0
    _
  %s8 = ssub.s32 1, %s6
  %s9 = scalar_select 0, %s8, %s6
  $region1: #{tpu_custom_call.1} parent=0
    #allocation2 [shape = 'u8[16384]{0}', space=vmem, size = 0x4000, scoped, tag = 'output window, operand 0']
    #allocation3 [shape = 's32[2]{0}', space=sflag, size = 0x8, scoped, tag = 'scoped memory for tpu_custom_call.1']
    %10 = vsyncpa [#allocation3], 0
    %s11 = scalar_lea.sflag [#allocation3], 1
    %12 = vsyncpa %s11, 0
    loop: start=0, step=1, limit=4
    $region2: #{tpu_custom_call.1} parent=1 // loop_pre_header
      _
    $region3: #{tpu_custom_call.1} parent=1 // loop_header
      %s14 = sphi 0, %s18
      %p15 = scmp.ge.s32.totalorder %s14, 4
      %s21 = sphi 0, %s33
      %s22 = sphi 0, %s29
      %s23 = sphi 0, %s21
      %s24 = sphi 0, %s22
      %s25 = sphi 0, %s23
      %s26 = sphi 0, %s24
      %s36 = sphi 0, %s38
      %s39 = sphi 0, %s36
      %s40 = sphi 0, %s39
      %s56 = sphi 0, %s40
      %s62 = sphi 0, %s64
      %s65 = sphi 0, %s62
      %s66 = sphi 0, %s65
      %s82 = sphi 0, %s66
      %s86 = sphi 0, %s86
      %s88 = sphi 0, %s86
      %s89 = sphi 0, %s88
      %s103 = sphi 0, %s89
      %s109 = sphi 0, %s111
      %s112 = sphi 0, %s109
      %s113 = sphi 0, %s112
      %s129 = sphi 0, %s113
      %s135 = sphi 0, %s137
      %s138 = sphi 0, %s135
      %s139 = sphi 0, %s138
      %s155 = sphi 0, %s139
      %s163 = sphi 0, %s165
      %s166 = sphi 0, %s163
      %s167 = sphi 0, %s166
      %s183 = sphi 0, %s167
    $region4: #{tpu_custom_call.1} parent=1 // loop_header_branch
      %17 = sbr.rel (%p15) target = $region8
    $region5: #{tpu_custom_call.1} parent=1 // loop_body
      %s19 = ssub.s32 %s14, 1
      %s20 = ssub.s32 %s14, 2
      %s27 = sadd.s32 1, %s22
      %p28 = scmp.ge.s32.totalorder %s27, 2
      %s29 = scalar_select %p28, 0, %s27
      %s30 = sadd.s32 1, %s21
      %s31 = scalar_select %p28, %s30, %s21
      %p32 = scmp.ge.s32.totalorder %s31, 1
      %s33 = scalar_select %p32, 0, %s31
      %s34 = ssub.s32 %s22, %s29
      %p35 = scmp.eq.s32.totalorder %s34, 0
      %s37 = sadd.s32 %s36, 1
      %s38 = scalar_select %p35, %s36, %s37
      %p41 = pneg %p35
      %p42 = scmp.eq.s32.totalorder %s14, 1
      %p43 = por %p41, %p42
      %p44 = scmp.ne.s32.totalorder %s36, %s39
      %p45 = scmp.eq.s32.totalorder %s14, 0
      %p46 = por %p44, %p45
      %p47 = scmp.ne.s32.totalorder %s36, %s39
      %p48 = scmp.eq.s32.totalorder %s19, 1
      %p49 = por %p47, %p48
      %p50 = scmp.ne.s32.totalorder %s39, %s40
      %p51 = scmp.eq.s32.totalorder %s19, 0
      %p52 = por %p50, %p51
      %p53 = scmp.ne.s32.totalorder %s39, %s40
      %p54 = scmp.eq.s32.totalorder %s20, 1
      %p55 = por %p53, %p54
      %p57 = scmp.ne.s32.totalorder %s40, %s56
      %p58 = scmp.eq.s32.totalorder %s20, 0
      %p59 = por %p57, %p58
      %s60 = ssub.s32 %s22, %s29
      %p61 = scmp.eq.s32.totalorder %s60, 0
      %s63 = sadd.s32 %s62, 1
      %s64 = scalar_select %p61, %s62, %s63
      %p67 = pneg %p61
      %p68 = scmp.eq.s32.totalorder %s14, 1
      %p69 = por %p67, %p68
      %p70 = scmp.ne.s32.totalorder %s62, %s65
      %p71 = scmp.eq.s32.totalorder %s14, 0
      %p72 = por %p70, %p71
      %p73 = scmp.ne.s32.totalorder %s62, %s65
      %p74 = scmp.eq.s32.totalorder %s19, 1
      %p75 = por %p73, %p74
      %p76 = scmp.ne.s32.totalorder %s65, %s66
      %p77 = scmp.eq.s32.totalorder %s19, 0
      %p78 = por %p76, %p77
      %p79 = scmp.ne.s32.totalorder %s65, %s66
      %p80 = scmp.eq.s32.totalorder %s20, 1
      %p81 = por %p79, %p80
      %p83 = scmp.ne.s32.totalorder %s66, %s82
      %p84 = scmp.eq.s32.totalorder %s20, 0
      %p85 = por %p83, %p84
      %s87 = sadd.s32 %s86, 1
      %p90 = scmp.eq.s32.totalorder %s14, 1
      %p91 = scmp.ne.s32.totalorder %s86, %s88
      %p92 = scmp.eq.s32.totalorder %s14, 0
      %p93 = por %p91, %p92
      %p94 = scmp.ne.s32.totalorder %s86, %s88
      %p95 = scmp.eq.s32.totalorder %s19, 1
      %p96 = por %p94, %p95
      %p97 = scmp.ne.s32.totalorder %s88, %s89
      %p98 = scmp.eq.s32.totalorder %s19, 0
      %p99 = por %p97, %p98
      %p100 = scmp.ne.s32.totalorder %s88, %s89
      %p101 = scmp.eq.s32.totalorder %s20, 1
      %p102 = por %p100, %p101
      %p104 = scmp.ne.s32.totalorder %s89, %s103
      %p105 = scmp.eq.s32.totalorder %s20, 0
      %p106 = por %p104, %p105
      %s107 = ssub.s32 %s21, %s33
      %p108 = scmp.eq.s32.totalorder %s107, 0
      %s110 = sadd.s32 %s109, 1
      %s111 = scalar_select %p108, %s109, %s110
      %p114 = pneg %p108
      %p115 = scmp.eq.s32.totalorder %s14, 1
      %p116 = por %p114, %p115
      %p117 = scmp.ne.s32.totalorder %s109, %s112
      %p118 = scmp.eq.s32.totalorder %s14, 0
      %p119 = por %p117, %p118
      %p120 = scmp.ne.s32.totalorder %s109, %s112
      %p121 = scmp.eq.s32.totalorder %s19, 1
      %p122 = por %p120, %p121
      %p123 = scmp.ne.s32.totalorder %s112, %s113
      %p124 = scmp.eq.s32.totalorder %s19, 0
      %p125 = por %p123, %p124
      %p126 = scmp.ne.s32.totalorder %s112, %s113
      %p127 = scmp.eq.s32.totalorder %s20, 1
      %p128 = por %p126, %p127
      %p130 = scmp.ne.s32.totalorder %s113, %s129
      %p131 = scmp.eq.s32.totalorder %s20, 0
      %p132 = por %p130, %p131
      %s133 = ssub.s32 %s21, %s33
      %p134 = scmp.eq.s32.totalorder %s133, 0
      %s136 = sadd.s32 %s135, 1
      %s137 = scalar_select %p134, %s135, %s136
      %p140 = pneg %p134
      %p141 = scmp.eq.s32.totalorder %s14, 1
      %p142 = por %p140, %p141
      %p143 = scmp.ne.s32.totalorder %s135, %s138
      %p144 = scmp.eq.s32.totalorder %s14, 0
      %p145 = por %p143, %p144
      %p146 = scmp.ne.s32.totalorder %s135, %s138
      %p147 = scmp.eq.s32.totalorder %s19, 1
      %p148 = por %p146, %p147
      %p149 = scmp.ne.s32.totalorder %s138, %s139
      %p150 = scmp.eq.s32.totalorder %s19, 0
      %p151 = por %p149, %p150
      %p152 = scmp.ne.s32.totalorder %s138, %s139
      %p153 = scmp.eq.s32.totalorder %s20, 1
      %p154 = por %p152, %p153
      %p156 = scmp.ne.s32.totalorder %s139, %s155
      %p157 = scmp.eq.s32.totalorder %s20, 0
      %p158 = por %p156, %p157
      %s159 = ssub.s32 %s21, %s33
      %s160 = ssub.s32 %s22, %s29
      %s161 = sor.u32 %s159, %s160
      %p162 = scmp.eq.s32.totalorder %s161, 0
      %s164 = sadd.s32 %s163, 1
      %s165 = scalar_select %p162, %s163, %s164
      %p168 = pneg %p162
      %p169 = scmp.eq.s32.totalorder %s14, 1
      %p170 = por %p168, %p169
      %p171 = scmp.ne.s32.totalorder %s163, %s166
      %p172 = scmp.eq.s32.totalorder %s14, 0
      %p173 = por %p171, %p172
      %p174 = scmp.ne.s32.totalorder %s163, %s166
      %p175 = scmp.eq.s32.totalorder %s19, 1
      %p176 = por %p174, %p175
      %p177 = scmp.ne.s32.totalorder %s166, %s167
      %p178 = scmp.eq.s32.totalorder %s19, 0
      %p179 = por %p177, %p178
      %p180 = scmp.ne.s32.totalorder %s166, %s167
      %p181 = scmp.eq.s32.totalorder %s20, 1
      %p182 = por %p180, %p181
      %p184 = scmp.ne.s32.totalorder %s167, %s183
      %p185 = scmp.eq.s32.totalorder %s20, 0
      %p186 = por %p184, %p185
      %p187 = scmp.le.s32.totalorder 1, %s14
      %p188 = scmp.lt.s32.totalorder %s14, 3
      %p189 = pnand %p187, %p188
      %p190 = pneg %p189
      // Predicated region
      $region9: #{tpu_custom_call.1} parent=5 // pred_check
        _
      $region10: #{tpu_custom_call.1} parent=5 // pred_check_branch
        %192 = sbr.rel (%p189) target = $region12
      $region11: #{tpu_custom_call.1} parent=5 // pred_region
        %s193 = ssub.s32 %s14, 1
        // Predicated region
        $region13: #{tpu_custom_call.1} parent=11 // pred_check
          %p194 = pneg %p99
        $region14: #{tpu_custom_call.1} parent=11 // pred_check_branch
          %196 = sbr.rel (%p194) target = $region16
        $region15: #{tpu_custom_call.1} parent=11 // pred_region
          _
        $region16: #{tpu_custom_call.1} parent=11 // pred_fallthru
          _
        // Predicated region
        $region17: #{tpu_custom_call.1} parent=11 // pred_check
          %p197 = pneg %p125
        $region18: #{tpu_custom_call.1} parent=11 // pred_check_branch
          %199 = sbr.rel (%p197) target = $region20
        $region19: #{tpu_custom_call.1} parent=11 // pred_region
          %p200 = scmp.lt.s32.totalorder %s23, 0
          %s201 = scalar_select %p200, %s23, 0
          %s202 = smul.addr %s201, 64
          %s203 = smul.addr %s202, 4
          %s204 = scalar_lea.vmem %s3, %s203
        $region20: #{tpu_custom_call.1} parent=11 // pred_fallthru
          _
        // Predicated region
        $region21: #{tpu_custom_call.1} parent=11 // pred_check
          %p205 = pneg %p151
        $region22: #{tpu_custom_call.1} parent=11 // pred_check_branch
          %207 = sbr.rel (%p205) target = $region24
        $region23: #{tpu_custom_call.1} parent=11 // pred_region
          %p208 = scmp.lt.s32.totalorder %s23, 0
          %s209 = scalar_select %p208, %s23, 0
          %s210 = smul.addr %s209, 64
          %s211 = smul.addr %s210, 8
          %s212 = scalar_lea.vmem %s4, %s211
        $region24: #{tpu_custom_call.1} parent=11 // pred_fallthru
          _
      $region12: #{tpu_custom_call.1} parent=5 // pred_fallthru
        _
      %p213 = scmp.lt.s32.totalorder %s14, 2
      // Predicated region
      $region25: #{tpu_custom_call.1} parent=5 // pred_check
        %p214 = pneg %p213
      $region26: #{tpu_custom_call.1} parent=5 // pred_check_branch
        %216 = sbr.rel (%p214) target = $region28
      $region27: #{tpu_custom_call.1} parent=5 // pred_region
        // Predicated region
        $region29: #{tpu_custom_call.1} parent=27 // pred_check
          %p217 = pneg %p46
        $region30: #{tpu_custom_call.1} parent=27 // pred_check_branch
          %219 = sbr.rel (%p217) target = $region32
        $region31: #{tpu_custom_call.1} parent=27 // pred_region
          %p220 = scmp.lt.s32.totalorder %s22, 1
          %s221 = scalar_select %p220, %s22, 1
          %s222 = smul.addr %s221, 8
          %s223 = smul.addr %s222, 8
          %s224 = scalar_lea.vmem %s0, %s223
        $region32: #{tpu_custom_call.1} parent=27 // pred_fallthru
          _
        // Predicated region
        $region33: #{tpu_custom_call.1} parent=27 // pred_check
          %p225 = pneg %p72
        $region34: #{tpu_custom_call.1} parent=27 // pred_check_branch
          %227 = sbr.rel (%p225) target = $region36
        $region35: #{tpu_custom_call.1} parent=27 // pred_region
          %p228 = scmp.lt.s32.totalorder %s22, 1
          %s229 = scalar_select %p228, %s22, 1
          %s230 = smul.addr %s229, 16
          %s231 = smul.addr %s230, 4
          %s232 = scalar_lea.vmem %s1, %s231
        $region36: #{tpu_custom_call.1} parent=27 // pred_fallthru
          _
      $region28: #{tpu_custom_call.1} parent=5 // pred_fallthru
        _
      %p233 = scmp.le.s32.totalorder 1, %s14
      %p234 = scmp.lt.s32.totalorder %s14, 3
      %p235 = pnand %p233, %p234
      %p236 = pneg %p235
      // Predicated region
      $region37: #{tpu_custom_call.1} parent=5 // pred_check
        _
      $region38: #{tpu_custom_call.1} parent=5 // pred_check_branch
        %238 = sbr.rel (%p235) target = $region40
      $region39: #{tpu_custom_call.1} parent=5 // pred_region
        %s239 = ssub.s32 %s14, 1
        %p240 = scmp.lt.s32.totalorder %s24, 1
        %s241 = scalar_select %p240, %s24, 1
        %s242 = smul.addr %s241, 8
        %s243 = smul.addr %s242, 8
        %s244 = scalar_lea.vmem %s0, %s243
        %p245 = pneg %p52
        %p246 = pneg %p49
        %p247 = scmp.lt.s32.totalorder %s24, 1
        %s248 = scalar_select %p247, %s24, 1
        %s249 = smul.addr %s248, 16
        %s250 = smul.addr %s249, 4
        %s251 = scalar_lea.vmem %s1, %s250
        %p252 = pneg %p78
        %p253 = pneg %p75
        %p254 = pneg %p99
        %p255 = pneg %p96
        %p256 = scmp.lt.s32.totalorder %s23, 0
        %s257 = scalar_select %p256, %s23, 0
        %s258 = smul.addr %s257, 64
        %s259 = smul.addr %s258, 4
        %s260 = scalar_lea.vmem %s3, %s259
        %p261 = pneg %p125
        %p262 = pneg %p122
        %p263 = scmp.lt.s32.totalorder %s23, 0
        %s264 = scalar_select %p263, %s23, 0
        %s265 = smul.addr %s264, 64
        %s266 = smul.addr %s265, 8
        %s267 = scalar_lea.vmem %s4, %s266
        %p268 = pneg %p151
        %p269 = pneg %p148
        %p270 = pneg %p179
        %p271 = pneg %p176
        %s272 = sand.u32 %s166, 1
        %s273 = scalar_lea.sflag [#allocation3], %s272
        %s274 = sand.u32 %s166, 1
        %s275 = smul.addr %s274, 16
        %s276 = scalar_lea.vmem [#allocation2], %s275
        %p277 = scmp.lt.s32.totalorder %s24, 1
        %s278 = scalar_select %p277, %s24, 1
        %s279 = smul.addr %s278, 8
        %s280 = smul.addr %s279, 8
        %s281 = scalar_lea.vmem %s0, %s280
        %p282 = scmp.lt.s32.totalorder %s24, 1
        %s283 = scalar_select %p282, %s24, 1
        %s284 = smul.addr %s283, 16
        %s285 = smul.addr %s284, 4
        %s286 = scalar_lea.vmem %s1, %s285
        %p287 = scmp.lt.s32.totalorder %s23, 0
        %s288 = scalar_select %p287, %s23, 0
        %s289 = smul.addr %s288, 64
        %s290 = smul.addr %s289, 4
        %s291 = scalar_lea.vmem %s3, %s290
        %p292 = scmp.lt.s32.totalorder %s23, 0
        %s293 = scalar_select %p292, %s23, 0
        %s294 = smul.addr %s293, 64
        %s295 = smul.addr %s294, 8
        %s296 = scalar_lea.vmem %s4, %s295
        %v298 = vld [vmem:[%s291] sm:$0xf]
        %v299 = vld [vmem:[%s291 + $0x4] sm:$0xf]
        %v300 = vld [vmem:[%s291 + $0x8] sm:$0xf]
        %v301 = vld [vmem:[%s291 + $0xc] sm:$0xf]
        %v302 = vld [vmem:[%s291 + $0x10] sm:$0xf]
        %v303 = vld [vmem:[%s291 + $0x14] sm:$0xf]
        %v304 = vld [vmem:[%s291 + $0x18] sm:$0xf]
        %v305 = vld [vmem:[%s291 + $0x1c] sm:$0xf]
        %v306 = vld [vmem:[%s291 + $0x20] sm:$0xf]
        %v307 = vld [vmem:[%s291 + $0x24] sm:$0xf]
        %v308 = vld [vmem:[%s291 + $0x28] sm:$0xf]
        %v309 = vld [vmem:[%s291 + $0x2c] sm:$0xf]
        %v310 = vld [vmem:[%s291 + $0x30] sm:$0xf]
        %v311 = vld [vmem:[%s291 + $0x34] sm:$0xf]
        %v312 = vld [vmem:[%s291 + $0x38] sm:$0xf]
        %v313 = vld [vmem:[%s291 + $0x3c] sm:$0xf]
        %v314 = vld [vmem:[%s291 + $0x40] sm:$0xf]
        %v315 = vld [vmem:[%s291 + $0x44] sm:$0xf]
        %v316 = vld [vmem:[%s291 + $0x48] sm:$0xf]
        %v317 = vld [vmem:[%s291 + $0x4c] sm:$0xf]
        %v318 = vld [vmem:[%s291 + $0x50] sm:$0xf]
        %v319 = vld [vmem:[%s291 + $0x54] sm:$0xf]
        %v320 = vld [vmem:[%s291 + $0x58] sm:$0xf]
        %v321 = vld [vmem:[%s291 + $0x5c] sm:$0xf]
        %v322 = vld [vmem:[%s291 + $0x60] sm:$0xf]
        %v323 = vld [vmem:[%s291 + $0x64] sm:$0xf]
        %v324 = vld [vmem:[%s291 + $0x68] sm:$0xf]
        %v325 = vld [vmem:[%s291 + $0x6c] sm:$0xf]
        %v326 = vld [vmem:[%s291 + $0x70] sm:$0xf]
        %v327 = vld [vmem:[%s291 + $0x74] sm:$0xf]
        %v328 = vld [vmem:[%s291 + $0x78] sm:$0xf]
        %v329 = vld [vmem:[%s291 + $0x7c] sm:$0xf]
        %v330 = vld [vmem:[%s291 + $0x80] sm:$0xf]
        %v331 = vld [vmem:[%s291 + $0x84] sm:$0xf]
        %v332 = vld [vmem:[%s291 + $0x88] sm:$0xf]
        %v333 = vld [vmem:[%s291 + $0x8c] sm:$0xf]
        %v334 = vld [vmem:[%s291 + $0x90] sm:$0xf]
        %v335 = vld [vmem:[%s291 + $0x94] sm:$0xf]
        %v336 = vld [vmem:[%s291 + $0x98] sm:$0xf]
        %v337 = vld [vmem:[%s291 + $0x9c] sm:$0xf]
        %v338 = vld [vmem:[%s291 + $0xa0] sm:$0xf]
        %v339 = vld [vmem:[%s291 + $0xa4] sm:$0xf]
        %v340 = vld [vmem:[%s291 + $0xa8] sm:$0xf]
        %v341 = vld [vmem:[%s291 + $0xac] sm:$0xf]
        %v342 = vld [vmem:[%s291 + $0xb0] sm:$0xf]
        %v343 = vld [vmem:[%s291 + $0xb4] sm:$0xf]
        %v344 = vld [vmem:[%s291 + $0xb8] sm:$0xf]
        %v345 = vld [vmem:[%s291 + $0xbc] sm:$0xf]
        %v346 = vld [vmem:[%s291 + $0xc0] sm:$0xf]
        %v347 = vld [vmem:[%s291 + $0xc4] sm:$0xf]
        %v348 = vld [vmem:[%s291 + $0xc8] sm:$0xf]
        %v349 = vld [vmem:[%s291 + $0xcc] sm:$0xf]
        %v350 = vld [vmem:[%s291 + $0xd0] sm:$0xf]
        %v351 = vld [vmem:[%s291 + $0xd4] sm:$0xf]
        %v352 = vld [vmem:[%s291 + $0xd8] sm:$0xf]
        %v353 = vld [vmem:[%s291 + $0xdc] sm:$0xf]
        %v354 = vld [vmem:[%s291 + $0xe0] sm:$0xf]
        %v355 = vld [vmem:[%s291 + $0xe4] sm:$0xf]
        %v356 = vld [vmem:[%s291 + $0xe8] sm:$0xf]
        %v357 = vld [vmem:[%s291 + $0xec] sm:$0xf]
        %v358 = vld [vmem:[%s291 + $0xf0] sm:$0xf]
        %v359 = vld [vmem:[%s291 + $0xf4] sm:$0xf]
        %v360 = vld [vmem:[%s291 + $0xf8] sm:$0xf]
        %v361 = vld [vmem:[%s291 + $0xfc] sm:$0xf]
        %v362 = vld [vmem:[%s286] sm:$0xff]
        %v363 = vld [vmem:[%s286 + $0x8] sm:$0xff]
        %v364 = vld [vmem:[%s286 + $0x10] sm:$0xff]
        %v365 = vld [vmem:[%s286 + $0x18] sm:$0xff]
        %v366 = vld [vmem:[%s286 + $0x20] sm:$0xff]
        %v367 = vld [vmem:[%s286 + $0x28] sm:$0xff]
        %v368 = vld [vmem:[%s286 + $0x30] sm:$0xff]
        %v369 = vld [vmem:[%s286 + $0x38] sm:$0xff]
        %v434 = vunpack.c.l.b16 %v298
        %v435 = vunpack.c.l.b16 %v299
        %v436 = vunpack.c.l.b16 %v300
        %v437 = vunpack.c.l.b16 %v301
        %v438 = vunpack.c.l.b16 %v302
        %v439 = vunpack.c.l.b16 %v303
        %v440 = vunpack.c.l.b16 %v304
        %v441 = vunpack.c.l.b16 %v305
        %v442 = vunpack.c.l.b16 %v306
        %v443 = vunpack.c.l.b16 %v307
        %v444 = vunpack.c.l.b16 %v308
        %v445 = vunpack.c.l.b16 %v309
        %v446 = vunpack.c.l.b16 %v310
        %v447 = vunpack.c.l.b16 %v311
        %v448 = vunpack.c.l.b16 %v312
        %v449 = vunpack.c.l.b16 %v313
        %v450 = vunpack.c.l.b16 %v314
        %v451 = vunpack.c.l.b16 %v315
        %v452 = vunpack.c.l.b16 %v316
        %v453 = vunpack.c.l.b16 %v317
        %v454 = vunpack.c.l.b16 %v318
        %v455 = vunpack.c.l.b16 %v319
        %v456 = vunpack.c.l.b16 %v320
        %v457 = vunpack.c.l.b16 %v321
        %v458 = vunpack.c.l.b16 %v322
        %v459 = vunpack.c.l.b16 %v323
        %v460 = vunpack.c.l.b16 %v324
        %v461 = vunpack.c.l.b16 %v325
        %v462 = vunpack.c.l.b16 %v326
        %v463 = vunpack.c.l.b16 %v327
        %v464 = vunpack.c.l.b16 %v328
        %v465 = vunpack.c.l.b16 %v329
        %v466 = vunpack.c.l.b16 %v330
        %v467 = vunpack.c.l.b16 %v331
        %v468 = vunpack.c.l.b16 %v332
        %v469 = vunpack.c.l.b16 %v333
        %v470 = vunpack.c.l.b16 %v334
        %v471 = vunpack.c.l.b16 %v335
        %v472 = vunpack.c.l.b16 %v336
        %v473 = vunpack.c.l.b16 %v337
        %v474 = vunpack.c.l.b16 %v338
        %v475 = vunpack.c.l.b16 %v339
        %v476 = vunpack.c.l.b16 %v340
        %v477 = vunpack.c.l.b16 %v341
        %v478 = vunpack.c.l.b16 %v342
        %v479 = vunpack.c.l.b16 %v343
        %v480 = vunpack.c.l.b16 %v344
        %v481 = vunpack.c.l.b16 %v345
        %v482 = vunpack.c.l.b16 %v346
        %v483 = vunpack.c.l.b16 %v347
        %v484 = vunpack.c.l.b16 %v348
        %v485 = vunpack.c.l.b16 %v349
        %v486 = vunpack.c.l.b16 %v350
        %v487 = vunpack.c.l.b16 %v351
        %v488 = vunpack.c.l.b16 %v352
        %v489 = vunpack.c.l.b16 %v353
        %v490 = vunpack.c.l.b16 %v354
        %v491 = vunpack.c.l.b16 %v355
        %v492 = vunpack.c.l.b16 %v356
        %v493 = vunpack.c.l.b16 %v357
        %v494 = vunpack.c.l.b16 %v358
        %v495 = vunpack.c.l.b16 %v359
        %v496 = vunpack.c.l.b16 %v360
        %v497 = vunpack.c.l.b16 %v361
        %v498 = vpack.c.b16 %v435, %v434
        %v499 = vpack.c.b16 %v437, %v436
        %v500 = vpack.c.b16 %v439, %v438
        %v501 = vpack.c.b16 %v441, %v440
        %v502 = vpack.c.b16 %v443, %v442
        %v503 = vpack.c.b16 %v445, %v444
        %v504 = vpack.c.b16 %v447, %v446
        %v505 = vpack.c.b16 %v449, %v448
        %v506 = vpack.c.b16 %v451, %v450
        %v507 = vpack.c.b16 %v453, %v452
        %v508 = vpack.c.b16 %v455, %v454
        %v509 = vpack.c.b16 %v457, %v456
        %v510 = vpack.c.b16 %v459, %v458
        %v511 = vpack.c.b16 %v461, %v460
        %v512 = vpack.c.b16 %v463, %v462
        %v513 = vpack.c.b16 %v465, %v464
        %v514 = vpack.c.b16 %v467, %v466
        %v515 = vpack.c.b16 %v469, %v468
        %v516 = vpack.c.b16 %v471, %v470
        %v517 = vpack.c.b16 %v473, %v472
        %v518 = vpack.c.b16 %v475, %v474
        %v519 = vpack.c.b16 %v477, %v476
        %v520 = vpack.c.b16 %v479, %v478
        %v521 = vpack.c.b16 %v481, %v480
        %v522 = vpack.c.b16 %v483, %v482
        %v523 = vpack.c.b16 %v485, %v484
        %v524 = vpack.c.b16 %v487, %v486
        %v525 = vpack.c.b16 %v489, %v488
        %v526 = vpack.c.b16 %v491, %v490
        %v527 = vpack.c.b16 %v493, %v492
        %v528 = vpack.c.b16 %v495, %v494
        %v529 = vpack.c.b16 %v497, %v496
        %v538 = vunpack.c.l.b16 %v362
        %v539 = vunpack.c.h.b16 %v362
        %v540 = vunpack.c.l.b16 %v363
        %v541 = vunpack.c.h.b16 %v363
        %v542 = vunpack.c.l.b16 %v364
        %v543 = vunpack.c.h.b16 %v364
        %v544 = vunpack.c.l.b16 %v365
        %v545 = vunpack.c.h.b16 %v365
        %v546 = vunpack.c.l.b16 %v366
        %v547 = vunpack.c.h.b16 %v366
        %v548 = vunpack.c.l.b16 %v367
        %v549 = vunpack.c.h.b16 %v367
        %v550 = vunpack.c.l.b16 %v368
        %v551 = vunpack.c.h.b16 %v368
        %v552 = vunpack.c.l.b16 %v369
        %v553 = vunpack.c.h.b16 %v369
        %v554 = vpack.c.b16 %v540, %v538
        %v555 = vpack.c.b16 %v541, %v539
        %v556 = vpack.c.b16 %v544, %v542
        %v557 = vpack.c.b16 %v545, %v543
        %v558 = vpack.c.b16 %v548, %v546
        %v559 = vpack.c.b16 %v549, %v547
        %v560 = vpack.c.b16 %v552, %v550
        %v561 = vpack.c.b16 %v553, %v551
        %vm570 = vcmask 523264
        %v572 = vsel %vm570, %v498, 0
        %v575 = vsel %vm570, %v499, 0
        %v578 = vsel %vm570, %v500, 0
        %v581 = vsel %vm570, %v501, 0
        %v584 = vsel %vm570, %v502, 0
        %v587 = vsel %vm570, %v503, 0
        %v590 = vsel %vm570, %v504, 0
        %v593 = vsel %vm570, %v505, 0
        %v596 = vsel %vm570, %v506, 0
        %v599 = vsel %vm570, %v507, 0
        %v602 = vsel %vm570, %v508, 0
        %v605 = vsel %vm570, %v509, 0
        %v608 = vsel %vm570, %v510, 0
        %v611 = vsel %vm570, %v511, 0
        %v614 = vsel %vm570, %v512, 0
        %v617 = vsel %vm570, %v513, 0
        %v620 = vsel %vm570, %v514, 0
        %v623 = vsel %vm570, %v515, 0
        %v626 = vsel %vm570, %v516, 0
        %v629 = vsel %vm570, %v517, 0
        %v632 = vsel %vm570, %v518, 0
        %v635 = vsel %vm570, %v519, 0
        %v638 = vsel %vm570, %v520, 0
        %v641 = vsel %vm570, %v521, 0
        %v644 = vsel %vm570, %v522, 0
        %v647 = vsel %vm570, %v523, 0
        %v650 = vsel %vm570, %v524, 0
        %v653 = vsel %vm570, %v525, 0
        %v656 = vsel %vm570, %v526, 0
        %v659 = vsel %vm570, %v527, 0
        %v662 = vsel %vm570, %v528, 0
        %v665 = vsel %vm570, %v529, 0
        %667 = vmatprep.subr.bf16.mxu0 %v555
        %668 = vmatpush1.bf16.msra.mxu0 %v554
        %669 = vmatprep.subr.bf16.mxu0 %v557
        %670 = vmatpush1.bf16.msra.mxu0 %v556
        %671 = vmatprep.subr.bf16.mxu0 %v559
        %672 = vmatpush1.bf16.msra.mxu0 %v558
        %673 = vmatprep.subr.bf16.mxu0 %v561
        %674 = vmatpush1.bf16.msra.mxu0 %v560
        %675 = vmatprep.subr.bf16.mxu0 0
        %676 = vmatpush1.bf16.msra.mxu0 0
        %677 = vmatprep.subr.bf16.mxu0 0
        %678 = vmatpush1.bf16.msra.mxu0 0
        %679 = vmatprep.subr.bf16.mxu0 0
        %680 = vmatpush1.bf16.msra.mxu0 0
        %681 = vmatprep.subr.bf16.mxu0 0
        %682 = vmatpush1.bf16.msra.mxu0 0
        %683 = vmatprep.subr.bf16.mxu0 0
        %684 = vmatpush1.bf16.msra.mxu0 0
        %685 = vmatprep.subr.bf16.mxu0 0
        %686 = vmatpush1.bf16.msra.mxu0 0
        %687 = vmatprep.subr.bf16.mxu0 0
        %688 = vmatpush1.bf16.msra.mxu0 0
        %689 = vmatprep.subr.bf16.mxu0 0
        %690 = vmatpush1.bf16.msra.mxu0 0
        %691 = vmatprep.subr.bf16.mxu0 0
        %692 = vmatpush1.bf16.msra.mxu0 0
        %693 = vmatprep.subr.bf16.mxu0 0
        %694 = vmatpush1.bf16.msra.mxu0 0
        %695 = vmatprep.subr.bf16.mxu0 0
        %696 = vmatpush1.bf16.msra.mxu0 0
        %697 = vmatprep.subr.bf16.mxu0 0
        %698 = vmatpush1.bf16.msra.mxu0 0
        %699 = vmatprep.mubr.bf16.mxu0 0
        %700 = vmatmul.mubr.bf16.gmra.mrb[0].mxu0 %v572
        %v701 = vpop.f32.mrb[0].mxu0
        %v702 = vadd.f32 0.0, %v701
        %v703 = vpop.f32.mrb[0].mxu0
        %v704 = vadd.f32 0.0, %v703
        %v705 = vpop.f32.mrb[0].mxu0
        %v706 = vadd.f32 0.0, %v705
        %v707 = vpop.f32.mrb[0].mxu0
        %v708 = vadd.f32 0.0, %v707
        %709 = vmatprep.mubr.bf16.mxu0 0
        %710 = vmatmul.mubr.bf16.gmra.mrb[0].mxu0 %v575
        %v711 = vpop.f32.mrb[0].mxu0
        %v712 = vadd.f32 0.0, %v711
        %v713 = vpop.f32.mrb[0].mxu0
        %v714 = vadd.f32 0.0, %v713
        %v715 = vpop.f32.mrb[0].mxu0
        %v716 = vadd.f32 0.0, %v715
        %v717 = vpop.f32.mrb[0].mxu0
        %v718 = vadd.f32 0.0, %v717
        %719 = vmatprep.mubr.bf16.mxu0 0
        %720 = vmatmul.mubr.bf16.gmra.mrb[0].mxu0 %v578
        %v721 = vpop.f32.mrb[0].mxu0
        %v722 = vadd.f32 0.0, %v721
        %v723 = vpop.f32.mrb[0].mxu0
        %v724 = vadd.f32 0.0, %v723
        %v725 = vpop.f32.mrb[0].mxu0
        %v726 = vadd.f32 0.0, %v725
        %v727 = vpop.f32.mrb[0].mxu0
        %v728 = vadd.f32 0.0, %v727
        %729 = vmatprep.mubr.bf16.mxu0 0
        %730 = vmatmul.mubr.bf16.gmra.mrb[0].mxu0 %v581
        %v731 = vpop.f32.mrb[0].mxu0
        %v732 = vadd.f32 0.0, %v731
        %v733 = vpop.f32.mrb[0].mxu0
        %v734 = vadd.f32 0.0, %v733
        %v735 = vpop.f32.mrb[0].mxu0
        %v736 = vadd.f32 0.0, %v735
        %v737 = vpop.f32.mrb[0].mxu0
        %v738 = vadd.f32 0.0, %v737
        %739 = vmatprep.mubr.bf16.mxu0 0
        %740 = vmatmul.mubr.bf16.gmra.mrb[0].mxu0 %v584
        %v741 = vpop.f32.mrb[0].mxu0
        %v742 = vadd.f32 0.0, %v741
        %v743 = vpop.f32.mrb[0].mxu0
        %v744 = vadd.f32 0.0, %v743
        %v745 = vpop.f32.mrb[0].mxu0
        %v746 = vadd.f32 0.0, %v745
        %v747 = vpop.f32.mrb[0].mxu0
        %v748 = vadd.f32 0.0, %v747
        %749 = vmatprep.mubr.bf16.mxu0 0
        %750 = vmatmul.mubr.bf16.gmra.mrb[0].mxu0 %v587
        %v751 = vpop.f32.mrb[0].mxu0
        %v752 = vadd.f32 0.0, %v751
        %v753 = vpop.f32.mrb[0].mxu0
        %v754 = vadd.f32 0.0, %v753
        %v755 = vpop.f32.mrb[0].mxu0
        %v756 = vadd.f32 0.0, %v755
        %v757 = vpop.f32.mrb[0].mxu0
        %v758 = vadd.f32 0.0, %v757
        %759 = vmatprep.mubr.bf16.mxu0 0
        %760 = vmatmul.mubr.bf16.gmra.mrb[0].mxu0 %v590
        %v761 = vpop.f32.mrb[0].mxu0
        %v762 = vadd.f32 0.0, %v761
        %v763 = vpop.f32.mrb[0].mxu0
        %v764 = vadd.f32 0.0, %v763
        %v765 = vpop.f32.mrb[0].mxu0
        %v766 = vadd.f32 0.0, %v765
        %v767 = vpop.f32.mrb[0].mxu0
        %v768 = vadd.f32 0.0, %v767
        %769 = vmatprep.mubr.bf16.mxu0 0
        %770 = vmatmul.mubr.bf16.gmra.mrb[0].mxu0 %v593
        %v771 = vpop.f32.mrb[0].mxu0
        %v772 = vadd.f32 0.0, %v771
        %v773 = vpop.f32.mrb[0].mxu0
        %v774 = vadd.f32 0.0, %v773
        %v775 = vpop.f32.mrb[0].mxu0
        %v776 = vadd.f32 0.0, %v775
        %v777 = vpop.f32.mrb[0].mxu0
        %v778 = vadd.f32 0.0, %v777
        %779 = vmatprep.mubr.bf16.mxu0 0
        %780 = vmatmul.mubr.bf16.gmra.mrb[0].mxu0 %v596
        %v781 = vpop.f32.mrb[0].mxu0
        %v782 = vadd.f32 0.0, %v781
        %v783 = vpop.f32.mrb[0].mxu0
        %v784 = vadd.f32 0.0, %v783
        %v785 = vpop.f32.mrb[0].mxu0
        %v786 = vadd.f32 0.0, %v785
        %v787 = vpop.f32.mrb[0].mxu0
        %v788 = vadd.f32 0.0, %v787
        %789 = vmatprep.mubr.bf16.mxu0 0
        %790 = vmatmul.mubr.bf16.gmra.mrb[0].mxu0 %v599
        %v791 = vpop.f32.mrb[0].mxu0
        %v792 = vadd.f32 0.0, %v791
        %v793 = vpop.f32.mrb[0].mxu0
        %v794 = vadd.f32 0.0, %v793
        %v795 = vpop.f32.mrb[0].mxu0
        %v796 = vadd.f32 0.0, %v795
        %v797 = vpop.f32.mrb[0].mxu0
        %v798 = vadd.f32 0.0, %v797
        %799 = vmatprep.mubr.bf16.mxu0 0
        %800 = vmatmul.mubr.bf16.gmra.mrb[0].mxu0 %v602
        %v801 = vpop.f32.mrb[0].mxu0
        %v802 = vadd.f32 0.0, %v801
        %v803 = vpop.f32.mrb[0].mxu0
        %v804 = vadd.f32 0.0, %v803
        %v805 = vpop.f32.mrb[0].mxu0
        %v806 = vadd.f32 0.0, %v805
        %v807 = vpop.f32.mrb[0].mxu0
        %v808 = vadd.f32 0.0, %v807
        %809 = vmatprep.mubr.bf16.mxu0 0
        %810 = vmatmul.mubr.bf16.gmra.mrb[0].mxu0 %v605
        %v811 = vpop.f32.mrb[0].mxu0
        %v812 = vadd.f32 0.0, %v811
        %v813 = vpop.f32.mrb[0].mxu0
        %v814 = vadd.f32 0.0, %v813
        %v815 = vpop.f32.mrb[0].mxu0
        %v816 = vadd.f32 0.0, %v815
        %v817 = vpop.f32.mrb[0].mxu0
        %v818 = vadd.f32 0.0, %v817
        %819 = vmatprep.mubr.bf16.mxu0 0
        %820 = vmatmul.mubr.bf16.gmra.mrb[0].mxu0 %v608
        %v821 = vpop.f32.mrb[0].mxu0
        %v822 = vadd.f32 0.0, %v821
        %v823 = vpop.f32.mrb[0].mxu0
        %v824 = vadd.f32 0.0, %v823
        %v825 = vpop.f32.mrb[0].mxu0
        %v826 = vadd.f32 0.0, %v825
        %v827 = vpop.f32.mrb[0].mxu0
        %v828 = vadd.f32 0.0, %v827
        %829 = vmatprep.mubr.bf16.mxu0 0
        %830 = vmatmul.mubr.bf16.gmra.mrb[0].mxu0 %v611
        %v831 = vpop.f32.mrb[0].mxu0
        %v832 = vadd.f32 0.0, %v831
        %v833 = vpop.f32.mrb[0].mxu0
        %v834 = vadd.f32 0.0, %v833
        %v835 = vpop.f32.mrb[0].mxu0
        %v836 = vadd.f32 0.0, %v835
        %v837 = vpop.f32.mrb[0].mxu0
        %v838 = vadd.f32 0.0, %v837
        %839 = vmatprep.mubr.bf16.mxu0 0
        %840 = vmatmul.mubr.bf16.gmra.mrb[0].mxu0 %v614
        %v841 = vpop.f32.mrb[0].mxu0
        %v842 = vadd.f32 0.0, %v841
        %v843 = vpop.f32.mrb[0].mxu0
        %v844 = vadd.f32 0.0, %v843
        %v845 = vpop.f32.mrb[0].mxu0
        %v846 = vadd.f32 0.0, %v845
        %v847 = vpop.f32.mrb[0].mxu0
        %v848 = vadd.f32 0.0, %v847
        %849 = vmatprep.mubr.bf16.mxu0 0
        %850 = vmatmul.mubr.bf16.gmra.mrb[0].mxu0 %v617
        %v851 = vpop.f32.mrb[0].mxu0
        %v852 = vadd.f32 0.0, %v851
        %v853 = vpop.f32.mrb[0].mxu0
        %v854 = vadd.f32 0.0, %v853
        %v855 = vpop.f32.mrb[0].mxu0
        %v856 = vadd.f32 0.0, %v855
        %v857 = vpop.f32.mrb[0].mxu0
        %v858 = vadd.f32 0.0, %v857
        %859 = vmatprep.mubr.bf16.mxu0 0
        %860 = vmatmul.mubr.bf16.gmra.mrb[0].mxu0 %v620
        %v861 = vpop.f32.mrb[0].mxu0
        %v862 = vadd.f32 0.0, %v861
        %v863 = vpop.f32.mrb[0].mxu0
        %v864 = vadd.f32 0.0, %v863
        %v865 = vpop.f32.mrb[0].mxu0
        %v866 = vadd.f32 0.0, %v865
        %v867 = vpop.f32.mrb[0].mxu0
        %v868 = vadd.f32 0.0, %v867
        %869 = vmatprep.mubr.bf16.mxu0 0
        %870 = vmatmul.mubr.bf16.gmra.mrb[0].mxu0 %v623
        %v871 = vpop.f32.mrb[0].mxu0
        %v872 = vadd.f32 0.0, %v871
        %v873 = vpop.f32.mrb[0].mxu0
        %v874 = vadd.f32 0.0, %v873
        %v875 = vpop.f32.mrb[0].mxu0
        %v876 = vadd.f32 0.0, %v875
        %v877 = vpop.f32.mrb[0].mxu0
        %v878 = vadd.f32 0.0, %v877
        %879 = vmatprep.mubr.bf16.mxu0 0
        %880 = vmatmul.mubr.bf16.gmra.mrb[0].mxu0 %v626
        %v881 = vpop.f32.mrb[0].mxu0
        %v882 = vadd.f32 0.0, %v881
        %v883 = vpop.f32.mrb[0].mxu0
        %v884 = vadd.f32 0.0, %v883
        %v885 = vpop.f32.mrb[0].mxu0
        %v886 = vadd.f32 0.0, %v885
        %v887 = vpop.f32.mrb[0].mxu0
        %v888 = vadd.f32 0.0, %v887
        %889 = vmatprep.mubr.bf16.mxu0 0
        %890 = vmatmul.mubr.bf16.gmra.mrb[0].mxu0 %v629
        %v891 = vpop.f32.mrb[0].mxu0
        %v892 = vadd.f32 0.0, %v891
        %v893 = vpop.f32.mrb[0].mxu0
        %v894 = vadd.f32 0.0, %v893
        %v895 = vpop.f32.mrb[0].mxu0
        %v896 = vadd.f32 0.0, %v895
        %v897 = vpop.f32.mrb[0].mxu0
        %v898 = vadd.f32 0.0, %v897
        %899 = vmatprep.mubr.bf16.mxu0 0
        %900 = vmatmul.mubr.bf16.gmra.mrb[0].mxu0 %v632
        %v901 = vpop.f32.mrb[0].mxu0
        %v902 = vadd.f32 0.0, %v901
        %v903 = vpop.f32.mrb[0].mxu0
        %v904 = vadd.f32 0.0, %v903
        %v905 = vpop.f32.mrb[0].mxu0
        %v906 = vadd.f32 0.0, %v905
        %v907 = vpop.f32.mrb[0].mxu0
        %v908 = vadd.f32 0.0, %v907
        %909 = vmatprep.mubr.bf16.mxu0 0
        %910 = vmatmul.mubr.bf16.gmra.mrb[0].mxu0 %v635
        %v911 = vpop.f32.mrb[0].mxu0
        %v912 = vadd.f32 0.0, %v911
        %v913 = vpop.f32.mrb[0].mxu0
        %v914 = vadd.f32 0.0, %v913
        %v915 = vpop.f32.mrb[0].mxu0
        %v916 = vadd.f32 0.0, %v915
        %v917 = vpop.f32.mrb[0].mxu0
        %v918 = vadd.f32 0.0, %v917
        %919 = vmatprep.mubr.bf16.mxu0 0
        %920 = vmatmul.mubr.bf16.gmra.mrb[0].mxu0 %v638
        %v921 = vpop.f32.mrb[0].mxu0
        %v922 = vadd.f32 0.0, %v921
        %v923 = vpop.f32.mrb[0].mxu0
        %v924 = vadd.f32 0.0, %v923
        %v925 = vpop.f32.mrb[0].mxu0
        %v926 = vadd.f32 0.0, %v925
        %v927 = vpop.f32.mrb[0].mxu0
        %v928 = vadd.f32 0.0, %v927
        %929 = vmatprep.mubr.bf16.mxu0 0
        %930 = vmatmul.mubr.bf16.gmra.mrb[0].mxu0 %v641
        %v931 = vpop.f32.mrb[0].mxu0
        %v932 = vadd.f32 0.0, %v931
        %v933 = vpop.f32.mrb[0].mxu0
        %v934 = vadd.f32 0.0, %v933
        %v935 = vpop.f32.mrb[0].mxu0
        %v936 = vadd.f32 0.0, %v935
        %v937 = vpop.f32.mrb[0].mxu0
        %v938 = vadd.f32 0.0, %v937
        %939 = vmatprep.mubr.bf16.mxu0 0
        %940 = vmatmul.mubr.bf16.gmra.mrb[0].mxu0 %v644
        %v941 = vpop.f32.mrb[0].mxu0
        %v942 = vadd.f32 0.0, %v941
        %v943 = vpop.f32.mrb[0].mxu0
        %v944 = vadd.f32 0.0, %v943
        %v945 = vpop.f32.mrb[0].mxu0
        %v946 = vadd.f32 0.0, %v945
        %v947 = vpop.f32.mrb[0].mxu0
        %v948 = vadd.f32 0.0, %v947
        %949 = vmatprep.mubr.bf16.mxu0 0
        %950 = vmatmul.mubr.bf16.gmra.mrb[0].mxu0 %v647
        %v951 = vpop.f32.mrb[0].mxu0
        %v952 = vadd.f32 0.0, %v951
        %v953 = vpop.f32.mrb[0].mxu0
        %v954 = vadd.f32 0.0, %v953
        %v955 = vpop.f32.mrb[0].mxu0
        %v956 = vadd.f32 0.0, %v955
        %v957 = vpop.f32.mrb[0].mxu0
        %v958 = vadd.f32 0.0, %v957
        %959 = vmatprep.mubr.bf16.mxu0 0
        %960 = vmatmul.mubr.bf16.gmra.mrb[0].mxu0 %v650
        %v961 = vpop.f32.mrb[0].mxu0
        %v962 = vadd.f32 0.0, %v961
        %v963 = vpop.f32.mrb[0].mxu0
        %v964 = vadd.f32 0.0, %v963
        %v965 = vpop.f32.mrb[0].mxu0
        %v966 = vadd.f32 0.0, %v965
        %v967 = vpop.f32.mrb[0].mxu0
        %v968 = vadd.f32 0.0, %v967
        %969 = vmatprep.mubr.bf16.mxu0 0
        %970 = vmatmul.mubr.bf16.gmra.mrb[0].mxu0 %v653
        %v971 = vpop.f32.mrb[0].mxu0
        %v972 = vadd.f32 0.0, %v971
        %v973 = vpop.f32.mrb[0].mxu0
        %v974 = vadd.f32 0.0, %v973
        %v975 = vpop.f32.mrb[0].mxu0
        %v976 = vadd.f32 0.0, %v975
        %v977 = vpop.f32.mrb[0].mxu0
        %v978 = vadd.f32 0.0, %v977
        %979 = vmatprep.mubr.bf16.mxu0 0
        %980 = vmatmul.mubr.bf16.gmra.mrb[0].mxu0 %v656
        %v981 = vpop.f32.mrb[0].mxu0
        %v982 = vadd.f32 0.0, %v981
        %v983 = vpop.f32.mrb[0].mxu0
        %v984 = vadd.f32 0.0, %v983
        %v985 = vpop.f32.mrb[0].mxu0
        %v986 = vadd.f32 0.0, %v985
        %v987 = vpop.f32.mrb[0].mxu0
        %v988 = vadd.f32 0.0, %v987
        %989 = vmatprep.mubr.bf16.mxu0 0
        %990 = vmatmul.mubr.bf16.gmra.mrb[0].mxu0 %v659
        %v991 = vpop.f32.mrb[0].mxu0
        %v992 = vadd.f32 0.0, %v991
        %v993 = vpop.f32.mrb[0].mxu0
        %v994 = vadd.f32 0.0, %v993
        %v995 = vpop.f32.mrb[0].mxu0
        %v996 = vadd.f32 0.0, %v995
        %v997 = vpop.f32.mrb[0].mxu0
        %v998 = vadd.f32 0.0, %v997
        %999 = vmatprep.mubr.bf16.mxu0 0
        %1000 = vmatmul.mubr.bf16.gmra.mrb[0].mxu0 %v662
        %v1001 = vpop.f32.mrb[0].mxu0
        %v1002 = vadd.f32 0.0, %v1001
        %v1003 = vpop.f32.mrb[0].mxu0
        %v1004 = vadd.f32 0.0, %v1003
        %v1005 = vpop.f32.mrb[0].mxu0
        %v1006 = vadd.f32 0.0, %v1005
        %v1007 = vpop.f32.mrb[0].mxu0
        %v1008 = vadd.f32 0.0, %v1007
        %1009 = vmatprep.mubr.bf16.mxu0 0
        %1010 = vmatmul.mubr.bf16.gmra.mrb[0].mxu0 %v665
        %v1011 = vpop.f32.mrb[0].mxu0
        %v1012 = vadd.f32 0.0, %v1011
        %v1013 = vpop.f32.mrb[0].mxu0
        %v1014 = vadd.f32 0.0, %v1013
        %v1015 = vpop.f32.mrb[0].mxu0
        %v1016 = vadd.f32 0.0, %v1015
        %v1017 = vpop.f32.mrb[0].mxu0
        %v1018 = vadd.f32 0.0, %v1017
        %1019 = vdwg.mxu0
        %v1020 = vld [vmem:[%s281] sm:$0xff]
        %v1021 = vld [vmem:[%s281 + $0x8] sm:$0xff]
        %v1022 = vld [vmem:[%s281 + $0x10] sm:$0xff]
        %v1023 = vld [vmem:[%s281 + $0x18] sm:$0xff]
        %v1024 = vld [vmem:[%s281 + $0x20] sm:$0xff]
        %v1025 = vld [vmem:[%s281 + $0x28] sm:$0xff]
        %v1026 = vld [vmem:[%s281 + $0x30] sm:$0xff]
        %v1027 = vld [vmem:[%s281 + $0x38] sm:$0xff]
        %v1028 = vpack.c.bf16 %v1021, %v1020
        %v1029 = vpack.c.bf16 %v1023, %v1022
        %v1030 = vpack.c.bf16 %v1025, %v1024
        %v1031 = vpack.c.bf16 %v1027, %v1026
        %v1032 = vunpack.c.l.bf16 %v1028
        %v1033 = vunpack.c.h.bf16 %v1028
        %v1034 = vunpack.c.l.bf16 %v1029
        %v1035 = vunpack.c.h.bf16 %v1029
        %v1036 = vunpack.c.l.bf16 %v1030
        %v1037 = vunpack.c.h.bf16 %v1030
        %v1038 = vunpack.c.l.bf16 %v1031
        %v1039 = vunpack.c.h.bf16 %v1031
        %v1040 = vsub.f32 %v1020, %v1032
        %v1041 = vsub.f32 %v1021, %v1033
        %v1042 = vsub.f32 %v1022, %v1034
        %v1043 = vsub.f32 %v1023, %v1035
        %v1044 = vsub.f32 %v1024, %v1036
        %v1045 = vsub.f32 %v1025, %v1037
        %v1046 = vsub.f32 %v1026, %v1038
        %v1047 = vsub.f32 %v1027, %v1039
        %v1048 = vpack.c.bf16 %v1041, %v1040
        %v1049 = vpack.c.bf16 %v1043, %v1042
        %v1050 = vpack.c.bf16 %v1045, %v1044
        %v1051 = vpack.c.bf16 %v1047, %v1046
        %v1052 = vld [vmem:[%s2] sm:$0xff]
        %v1053 = vld [vmem:[%s2 + $0x8] sm:$0xff]
        %v1056 = vunpack.c.l.b16 %v1052
        %v1057 = vunpack.c.h.b16 %v1052
        %v1058 = vunpack.c.l.b16 %v1053
        %v1059 = vunpack.c.h.b16 %v1053
        %v1060 = vpack.c.b16 %v1058, %v1056
        %v1061 = vpack.c.b16 %v1059, %v1057
        %vm1064 = vcmask 130048
        %v1066 = vsel %vm1064, %v1048, 0
        %v1069 = vsel %vm1064, %v1049, 0
        %v1072 = vsel %vm1064, %v1050, 0
        %v1075 = vsel %vm1064, %v1051, 0
        %1077 = vmatprep.subr.bf16.mxu0 %v1061
        %1078 = vmatpush1.bf16.msra.mxu0 %v1060
        %1079 = vmatprep.subr.bf16.mxu0 0
        %1080 = vmatpush1.bf16.msra.mxu0 0
        %1081 = vmatprep.subr.bf16.mxu0 0
        %1082 = vmatpush1.bf16.msra.mxu0 0
        %1083 = vmatprep.subr.bf16.mxu0 0
        %1084 = vmatpush1.bf16.msra.mxu0 0
        %1085 = vmatprep.subr.bf16.mxu0 0
        %1086 = vmatpush1.bf16.msra.mxu0 0
        %1087 = vmatprep.subr.bf16.mxu0 0
        %1088 = vmatpush1.bf16.msra.mxu0 0
        %1089 = vmatprep.subr.bf16.mxu0 0
        %1090 = vmatpush1.bf16.msra.mxu0 0
        %1091 = vmatprep.subr.bf16.mxu0 0
        %1092 = vmatpush1.bf16.msra.mxu0 0
        %1093 = vmatprep.subr.bf16.mxu0 0
        %1094 = vmatpush1.bf16.msra.mxu0 0
        %1095 = vmatprep.subr.bf16.mxu0 0
        %1096 = vmatpush1.bf16.msra.mxu0 0
        %1097 = vmatprep.subr.bf16.mxu0 0
        %1098 = vmatpush1.bf16.msra.mxu0 0
        %1099 = vmatprep.subr.bf16.mxu0 0
        %1100 = vmatpush1.bf16.msra.mxu0 0
        %1101 = vmatprep.subr.bf16.mxu0 0
        %1102 = vmatpush1.bf16.msra.mxu0 0
        %1103 = vmatprep.subr.bf16.mxu0 0
        %1104 = vmatpush1.bf16.msra.mxu0 0
        %1105 = vmatprep.subr.bf16.mxu0 0
        %1106 = vmatpush1.bf16.msra.mxu0 0
        %1107 = vmatprep.subr.bf16.mxu0 0
        %1108 = vmatpush1.bf16.msra.mxu0 0
        %1109 = vmatprep.mubr.bf16.mxu0 0
        %1110 = vmatmul.mubr.bf16.gmra.mrb[0].mxu0 %v1066
        %v1111 = vpop.f32.mrb[0].mxu0
        %v1112 = vadd.f32 0.0, %v1111
        %v1113 = vpop.f32.mrb[0].mxu0
        %v1114 = vadd.f32 0.0, %v1113
        %v1115 = vpop.f32.mrb[0].mxu0
        %v1116 = vadd.f32 0.0, %v1115
        %v1117 = vpop.f32.mrb[0].mxu0
        %v1118 = vadd.f32 0.0, %v1117
        %1119 = vmatprep.mubr.bf16.mxu0 0
        %1120 = vmatmul.mubr.bf16.gmra.mrb[0].mxu0 %v1069
        %v1121 = vpop.f32.mrb[0].mxu0
        %v1122 = vadd.f32 0.0, %v1121
        %v1123 = vpop.f32.mrb[0].mxu0
        %v1124 = vadd.f32 0.0, %v1123
        %v1125 = vpop.f32.mrb[0].mxu0
        %v1126 = vadd.f32 0.0, %v1125
        %v1127 = vpop.f32.mrb[0].mxu0
        %v1128 = vadd.f32 0.0, %v1127
        %1129 = vmatprep.mubr.bf16.mxu0 0
        %1130 = vmatmul.mubr.bf16.gmra.mrb[0].mxu0 %v1072
        %v1131 = vpop.f32.mrb[0].mxu0
        %v1132 = vadd.f32 0.0, %v1131
        %v1133 = vpop.f32.mrb[0].mxu0
        %v1134 = vadd.f32 0.0, %v1133
        %v1135 = vpop.f32.mrb[0].mxu0
        %v1136 = vadd.f32 0.0, %v1135
        %v1137 = vpop.f32.mrb[0].mxu0
        %v1138 = vadd.f32 0.0, %v1137
        %1139 = vmatprep.mubr.bf16.mxu0 0
        %1140 = vmatmul.mubr.bf16.gmra.mrb[0].mxu0 %v1075
        %v1141 = vpop.f32.mrb[0].mxu0
        %v1142 = vadd.f32 0.0, %v1141
        %v1143 = vpop.f32.mrb[0].mxu0
        %v1144 = vadd.f32 0.0, %v1143
        %v1145 = vpop.f32.mrb[0].mxu0
        %v1146 = vadd.f32 0.0, %v1145
        %v1147 = vpop.f32.mrb[0].mxu0
        %v1148 = vadd.f32 0.0, %v1147
        %1149 = vdwg.mxu0
        %v1151 = vsel %vm1064, %v1028, 0
        %v1154 = vsel %vm1064, %v1029, 0
        %v1157 = vsel %vm1064, %v1030, 0
        %v1160 = vsel %vm1064, %v1031, 0
        %1162 = vmatprep.subr.bf16.mxu0 %v1061
        %1163 = vmatpush1.bf16.msra.mxu0 %v1060
        %1164 = vmatprep.subr.bf16.mxu0 0
        %1165 = vmatpush1.bf16.msra.mxu0 0
        %1166 = vmatprep.subr.bf16.mxu0 0
        %1167 = vmatpush1.bf16.msra.mxu0 0
        %1168 = vmatprep.subr.bf16.mxu0 0
        %1169 = vmatpush1.bf16.msra.mxu0 0
        %1170 = vmatprep.subr.bf16.mxu0 0
        %1171 = vmatpush1.bf16.msra.mxu0 0
        %1172 = vmatprep.subr.bf16.mxu0 0
        %1173 = vmatpush1.bf16.msra.mxu0 0
        %1174 = vmatprep.subr.bf16.mxu0 0
        %1175 = vmatpush1.bf16.msra.mxu0 0
        %1176 = vmatprep.subr.bf16.mxu0 0
        %1177 = vmatpush1.bf16.msra.mxu0 0
        %1178 = vmatprep.subr.bf16.mxu0 0
        %1179 = vmatpush1.bf16.msra.mxu0 0
        %1180 = vmatprep.subr.bf16.mxu0 0
        %1181 = vmatpush1.bf16.msra.mxu0 0
        %1182 = vmatprep.subr.bf16.mxu0 0
        %1183 = vmatpush1.bf16.msra.mxu0 0
        %1184 = vmatprep.subr.bf16.mxu0 0
        %1185 = vmatpush1.bf16.msra.mxu0 0
        %1186 = vmatprep.subr.bf16.mxu0 0
        %1187 = vmatpush1.bf16.msra.mxu0 0
        %1188 = vmatprep.subr.bf16.mxu0 0
        %1189 = vmatpush1.bf16.msra.mxu0 0
        %1190 = vmatprep.subr.bf16.mxu0 0
        %1191 = vmatpush1.bf16.msra.mxu0 0
        %1192 = vmatprep.subr.bf16.mxu0 0
        %1193 = vmatpush1.bf16.msra.mxu0 0
        %1194 = vmatprep.mubr.bf16.mxu0 0
        %1195 = vmatmul.mubr.bf16.gmra.mrb[0].mxu0 %v1151
        %v1196 = vpop.f32.mrb[0].mxu0
        %v1197 = vadd.f32 %v1112, %v1196
        %v1198 = vpop.f32.mrb[0].mxu0
        %v1199 = vadd.f32 %v1114, %v1198
        %v1200 = vpop.f32.mrb[0].mxu0
        %v1201 = vadd.f32 %v1116, %v1200
        %v1202 = vpop.f32.mrb[0].mxu0
        %v1203 = vadd.f32 %v1118, %v1202
        %1204 = vmatprep.mubr.bf16.mxu0 0
        %1205 = vmatmul.mubr.bf16.gmra.mrb[0].mxu0 %v1154
        %v1206 = vpop.f32.mrb[0].mxu0
        %v1207 = vadd.f32 %v1122, %v1206
        %v1208 = vpop.f32.mrb[0].mxu0
        %v1209 = vadd.f32 %v1124, %v1208
        %v1210 = vpop.f32.mrb[0].mxu0
        %v1211 = vadd.f32 %v1126, %v1210
        %v1212 = vpop.f32.mrb[0].mxu0
        %v1213 = vadd.f32 %v1128, %v1212
        %1214 = vmatprep.mubr.bf16.mxu0 0
        %1215 = vmatmul.mubr.bf16.gmra.mrb[0].mxu0 %v1157
        %v1216 = vpop.f32.mrb[0].mxu0
        %v1217 = vadd.f32 %v1132, %v1216
        %v1218 = vpop.f32.mrb[0].mxu0
        %v1219 = vadd.f32 %v1134, %v1218
        %v1220 = vpop.f32.mrb[0].mxu0
        %v1221 = vadd.f32 %v1136, %v1220
        %v1222 = vpop.f32.mrb[0].mxu0
        %v1223 = vadd.f32 %v1138, %v1222
        %1224 = vmatprep.mubr.bf16.mxu0 0
        %1225 = vmatmul.mubr.bf16.gmra.mrb[0].mxu0 %v1160
        %v1226 = vpop.f32.mrb[0].mxu0
        %v1227 = vadd.f32 %v1142, %v1226
        %v1228 = vpop.f32.mrb[0].mxu0
        %v1229 = vadd.f32 %v1144, %v1228
        %v1230 = vpop.f32.mrb[0].mxu0
        %v1231 = vadd.f32 %v1146, %v1230
        %v1232 = vpop.f32.mrb[0].mxu0
        %v1233 = vadd.f32 %v1148, %v1232
        %1234 = vdwg.mxu0
        %v1235 = vsub.f32 %v702, %v1197
        %v1236 = vsub.f32 %v704, %v1199
        %v1237 = vsub.f32 %v706, %v1201
        %v1238 = vsub.f32 %v708, %v1203
        %v1239 = vsub.f32 %v712, %v1207
        %v1240 = vsub.f32 %v714, %v1209
        %v1241 = vsub.f32 %v716, %v1211
        %v1242 = vsub.f32 %v718, %v1213
        %v1243 = vsub.f32 %v722, %v1217
        %v1244 = vsub.f32 %v724, %v1219
        %v1245 = vsub.f32 %v726, %v1221
        %v1246 = vsub.f32 %v728, %v1223
        %v1247 = vsub.f32 %v732, %v1227
        %v1248 = vsub.f32 %v734, %v1229
        %v1249 = vsub.f32 %v736, %v1231
        %v1250 = vsub.f32 %v738, %v1233
        %v1251 = vsub.f32 %v742, %v1197
        %v1252 = vsub.f32 %v744, %v1199
        %v1253 = vsub.f32 %v746, %v1201
        %v1254 = vsub.f32 %v748, %v1203
        %v1255 = vsub.f32 %v752, %v1207
        %v1256 = vsub.f32 %v754, %v1209
        %v1257 = vsub.f32 %v756, %v1211
        %v1258 = vsub.f32 %v758, %v1213
        %v1259 = vsub.f32 %v762, %v1217
        %v1260 = vsub.f32 %v764, %v1219
        %v1261 = vsub.f32 %v766, %v1221
        %v1262 = vsub.f32 %v768, %v1223
        %v1263 = vsub.f32 %v772, %v1227
        %v1264 = vsub.f32 %v774, %v1229
        %v1265 = vsub.f32 %v776, %v1231
        %v1266 = vsub.f32 %v778, %v1233
        %v1267 = vsub.f32 %v782, %v1197
        %v1268 = vsub.f32 %v784, %v1199
        %v1269 = vsub.f32 %v786, %v1201
        %v1270 = vsub.f32 %v788, %v1203
        %v1271 = vsub.f32 %v792, %v1207
        %v1272 = vsub.f32 %v794, %v1209
        %v1273 = vsub.f32 %v796, %v1211
        %v1274 = vsub.f32 %v798, %v1213
        %v1275 = vsub.f32 %v802, %v1217
        %v1276 = vsub.f32 %v804, %v1219
        %v1277 = vsub.f32 %v806, %v1221
        %v1278 = vsub.f32 %v808, %v1223
        %v1279 = vsub.f32 %v812, %v1227
        %v1280 = vsub.f32 %v814, %v1229
        %v1281 = vsub.f32 %v816, %v1231
        %v1282 = vsub.f32 %v818, %v1233
        %v1283 = vsub.f32 %v822, %v1197
        %v1284 = vsub.f32 %v824, %v1199
        %v1285 = vsub.f32 %v826, %v1201
        %v1286 = vsub.f32 %v828, %v1203
        %v1287 = vsub.f32 %v832, %v1207
        %v1288 = vsub.f32 %v834, %v1209
        %v1289 = vsub.f32 %v836, %v1211
        %v1290 = vsub.f32 %v838, %v1213
        %v1291 = vsub.f32 %v842, %v1217
        %v1292 = vsub.f32 %v844, %v1219
        %v1293 = vsub.f32 %v846, %v1221
        %v1294 = vsub.f32 %v848, %v1223
        %v1295 = vsub.f32 %v852, %v1227
        %v1296 = vsub.f32 %v854, %v1229
        %v1297 = vsub.f32 %v856, %v1231
        %v1298 = vsub.f32 %v858, %v1233
        %v1299 = vsub.f32 %v862, %v1197
        %v1300 = vsub.f32 %v864, %v1199
        %v1301 = vsub.f32 %v866, %v1201
        %v1302 = vsub.f32 %v868, %v1203
        %v1303 = vsub.f32 %v872, %v1207
        %v1304 = vsub.f32 %v874, %v1209
        %v1305 = vsub.f32 %v876, %v1211
        %v1306 = vsub.f32 %v878, %v1213
        %v1307 = vsub.f32 %v882, %v1217
        %v1308 = vsub.f32 %v884, %v1219
        %v1309 = vsub.f32 %v886, %v1221
        %v1310 = vsub.f32 %v888, %v1223
        %v1311 = vsub.f32 %v892, %v1227
        %v1312 = vsub.f32 %v894, %v1229
        %v1313 = vsub.f32 %v896, %v1231
        %v1314 = vsub.f32 %v898, %v1233
        %v1315 = vsub.f32 %v902, %v1197
        %v1316 = vsub.f32 %v904, %v1199
        %v1317 = vsub.f32 %v906, %v1201
        %v1318 = vsub.f32 %v908, %v1203
        %v1319 = vsub.f32 %v912, %v1207
        %v1320 = vsub.f32 %v914, %v1209
        %v1321 = vsub.f32 %v916, %v1211
        %v1322 = vsub.f32 %v918, %v1213
        %v1323 = vsub.f32 %v922, %v1217
        %v1324 = vsub.f32 %v924, %v1219
        %v1325 = vsub.f32 %v926, %v1221
        %v1326 = vsub.f32 %v928, %v1223
        %v1327 = vsub.f32 %v932, %v1227
        %v1328 = vsub.f32 %v934, %v1229
        %v1329 = vsub.f32 %v936, %v1231
        %v1330 = vsub.f32 %v938, %v1233
        %v1331 = vsub.f32 %v942, %v1197
        %v1332 = vsub.f32 %v944, %v1199
        %v1333 = vsub.f32 %v946, %v1201
        %v1334 = vsub.f32 %v948, %v1203
        %v1335 = vsub.f32 %v952, %v1207
        %v1336 = vsub.f32 %v954, %v1209
        %v1337 = vsub.f32 %v956, %v1211
        %v1338 = vsub.f32 %v958, %v1213
        %v1339 = vsub.f32 %v962, %v1217
        %v1340 = vsub.f32 %v964, %v1219
        %v1341 = vsub.f32 %v966, %v1221
        %v1342 = vsub.f32 %v968, %v1223
        %v1343 = vsub.f32 %v972, %v1227
        %v1344 = vsub.f32 %v974, %v1229
        %v1345 = vsub.f32 %v976, %v1231
        %v1346 = vsub.f32 %v978, %v1233
        %v1347 = vsub.f32 %v982, %v1197
        %v1348 = vsub.f32 %v984, %v1199
        %v1349 = vsub.f32 %v986, %v1201
        %v1350 = vsub.f32 %v988, %v1203
        %v1351 = vsub.f32 %v992, %v1207
        %v1352 = vsub.f32 %v994, %v1209
        %v1353 = vsub.f32 %v996, %v1211
        %v1354 = vsub.f32 %v998, %v1213
        %v1355 = vsub.f32 %v1002, %v1217
        %v1356 = vsub.f32 %v1004, %v1219
        %v1357 = vsub.f32 %v1006, %v1221
        %v1358 = vsub.f32 %v1008, %v1223
        %v1359 = vsub.f32 %v1012, %v1227
        %v1360 = vsub.f32 %v1014, %v1229
        %v1361 = vsub.f32 %v1016, %v1231
        %v1362 = vsub.f32 %v1018, %v1233
        %v1363 = vmul.f32 %v1235, %v1235
        %v1364 = vmul.f32 %v1236, %v1236
        %v1365 = vmul.f32 %v1237, %v1237
        %v1366 = vmul.f32 %v1238, %v1238
        %v1367 = vmul.f32 %v1239, %v1239
        %v1368 = vmul.f32 %v1240, %v1240
        %v1369 = vmul.f32 %v1241, %v1241
        %v1370 = vmul.f32 %v1242, %v1242
        %v1371 = vmul.f32 %v1243, %v1243
        %v1372 = vmul.f32 %v1244, %v1244
        %v1373 = vmul.f32 %v1245, %v1245
        %v1374 = vmul.f32 %v1246, %v1246
        %v1375 = vmul.f32 %v1247, %v1247
        %v1376 = vmul.f32 %v1248, %v1248
        %v1377 = vmul.f32 %v1249, %v1249
        %v1378 = vmul.f32 %v1250, %v1250
        %v1379 = vmul.f32 %v1251, %v1251
        %v1380 = vmul.f32 %v1252, %v1252
        %v1381 = vmul.f32 %v1253, %v1253
        %v1382 = vmul.f32 %v1254, %v1254
        %v1383 = vmul.f32 %v1255, %v1255
        %v1384 = vmul.f32 %v1256, %v1256
        %v1385 = vmul.f32 %v1257, %v1257
        %v1386 = vmul.f32 %v1258, %v1258
        %v1387 = vmul.f32 %v1259, %v1259
        %v1388 = vmul.f32 %v1260, %v1260
        %v1389 = vmul.f32 %v1261, %v1261
        %v1390 = vmul.f32 %v1262, %v1262
        %v1391 = vmul.f32 %v1263, %v1263
        %v1392 = vmul.f32 %v1264, %v1264
        %v1393 = vmul.f32 %v1265, %v1265
        %v1394 = vmul.f32 %v1266, %v1266
        %v1395 = vmul.f32 %v1267, %v1267
        %v1396 = vmul.f32 %v1268, %v1268
        %v1397 = vmul.f32 %v1269, %v1269
        %v1398 = vmul.f32 %v1270, %v1270
        %v1399 = vmul.f32 %v1271, %v1271
        %v1400 = vmul.f32 %v1272, %v1272
        %v1401 = vmul.f32 %v1273, %v1273
        %v1402 = vmul.f32 %v1274, %v1274
        %v1403 = vmul.f32 %v1275, %v1275
        %v1404 = vmul.f32 %v1276, %v1276
        %v1405 = vmul.f32 %v1277, %v1277
        %v1406 = vmul.f32 %v1278, %v1278
        %v1407 = vmul.f32 %v1279, %v1279
        %v1408 = vmul.f32 %v1280, %v1280
        %v1409 = vmul.f32 %v1281, %v1281
        %v1410 = vmul.f32 %v1282, %v1282
        %v1411 = vmul.f32 %v1283, %v1283
        %v1412 = vmul.f32 %v1284, %v1284
        %v1413 = vmul.f32 %v1285, %v1285
        %v1414 = vmul.f32 %v1286, %v1286
        %v1415 = vmul.f32 %v1287, %v1287
        %v1416 = vmul.f32 %v1288, %v1288
        %v1417 = vmul.f32 %v1289, %v1289
        %v1418 = vmul.f32 %v1290, %v1290
        %v1419 = vmul.f32 %v1291, %v1291
        %v1420 = vmul.f32 %v1292, %v1292
        %v1421 = vmul.f32 %v1293, %v1293
        %v1422 = vmul.f32 %v1294, %v1294
        %v1423 = vmul.f32 %v1295, %v1295
        %v1424 = vmul.f32 %v1296, %v1296
        %v1425 = vmul.f32 %v1297, %v1297
        %v1426 = vmul.f32 %v1298, %v1298
        %v1427 = vmul.f32 %v1299, %v1299
        %v1428 = vmul.f32 %v1300, %v1300
        %v1429 = vmul.f32 %v1301, %v1301
        %v1430 = vmul.f32 %v1302, %v1302
        %v1431 = vmul.f32 %v1303, %v1303
        %v1432 = vmul.f32 %v1304, %v1304
        %v1433 = vmul.f32 %v1305, %v1305
        %v1434 = vmul.f32 %v1306, %v1306
        %v1435 = vmul.f32 %v1307, %v1307
        %v1436 = vmul.f32 %v1308, %v1308
        %v1437 = vmul.f32 %v1309, %v1309
        %v1438 = vmul.f32 %v1310, %v1310
        %v1439 = vmul.f32 %v1311, %v1311
        %v1440 = vmul.f32 %v1312, %v1312
        %v1441 = vmul.f32 %v1313, %v1313
        %v1442 = vmul.f32 %v1314, %v1314
        %v1443 = vmul.f32 %v1315, %v1315
        %v1444 = vmul.f32 %v1316, %v1316
        %v1445 = vmul.f32 %v1317, %v1317
        %v1446 = vmul.f32 %v1318, %v1318
        %v1447 = vmul.f32 %v1319, %v1319
        %v1448 = vmul.f32 %v1320, %v1320
        %v1449 = vmul.f32 %v1321, %v1321
        %v1450 = vmul.f32 %v1322, %v1322
        %v1451 = vmul.f32 %v1323, %v1323
        %v1452 = vmul.f32 %v1324, %v1324
        %v1453 = vmul.f32 %v1325, %v1325
        %v1454 = vmul.f32 %v1326, %v1326
        %v1455 = vmul.f32 %v1327, %v1327
        %v1456 = vmul.f32 %v1328, %v1328
        %v1457 = vmul.f32 %v1329, %v1329
        %v1458 = vmul.f32 %v1330, %v1330
        %v1459 = vmul.f32 %v1331, %v1331
        %v1460 = vmul.f32 %v1332, %v1332
        %v1461 = vmul.f32 %v1333, %v1333
        %v1462 = vmul.f32 %v1334, %v1334
        %v1463 = vmul.f32 %v1335, %v1335
        %v1464 = vmul.f32 %v1336, %v1336
        %v1465 = vmul.f32 %v1337, %v1337
        %v1466 = vmul.f32 %v1338, %v1338
        %v1467 = vmul.f32 %v1339, %v1339
        %v1468 = vmul.f32 %v1340, %v1340
        %v1469 = vmul.f32 %v1341, %v1341
        %v1470 = vmul.f32 %v1342, %v1342
        %v1471 = vmul.f32 %v1343, %v1343
        %v1472 = vmul.f32 %v1344, %v1344
        %v1473 = vmul.f32 %v1345, %v1345
        %v1474 = vmul.f32 %v1346, %v1346
        %v1475 = vmul.f32 %v1347, %v1347
        %v1476 = vmul.f32 %v1348, %v1348
        %v1477 = vmul.f32 %v1349, %v1349
        %v1478 = vmul.f32 %v1350, %v1350
        %v1479 = vmul.f32 %v1351, %v1351
        %v1480 = vmul.f32 %v1352, %v1352
        %v1481 = vmul.f32 %v1353, %v1353
        %v1482 = vmul.f32 %v1354, %v1354
        %v1483 = vmul.f32 %v1355, %v1355
        %v1484 = vmul.f32 %v1356, %v1356
        %v1485 = vmul.f32 %v1357, %v1357
        %v1486 = vmul.f32 %v1358, %v1358
        %v1487 = vmul.f32 %v1359, %v1359
        %v1488 = vmul.f32 %v1360, %v1360
        %v1489 = vmul.f32 %v1361, %v1361
        %v1490 = vmul.f32 %v1362, %v1362
        %v1491 = vld [vmem:[%s296] sm:$0xff]
        %v1492 = vld [vmem:[%s296 + $0x8] sm:$0xff]
        %v1493 = vld [vmem:[%s296 + $0x10] sm:$0xff]
        %v1494 = vld [vmem:[%s296 + $0x18] sm:$0xff]
        %v1495 = vld [vmem:[%s296 + $0x20] sm:$0xff]
        %v1496 = vld [vmem:[%s296 + $0x28] sm:$0xff]
        %v1497 = vld [vmem:[%s296 + $0x30] sm:$0xff]
        %v1498 = vld [vmem:[%s296 + $0x38] sm:$0xff]
        %v1499 = vld [vmem:[%s296 + $0x40] sm:$0xff]
        %v1500 = vld [vmem:[%s296 + $0x48] sm:$0xff]
        %v1501 = vld [vmem:[%s296 + $0x50] sm:$0xff]
        %v1502 = vld [vmem:[%s296 + $0x58] sm:$0xff]
        %v1503 = vld [vmem:[%s296 + $0x60] sm:$0xff]
        %v1504 = vld [vmem:[%s296 + $0x68] sm:$0xff]
        %v1505 = vld [vmem:[%s296 + $0x70] sm:$0xff]
        %v1506 = vld [vmem:[%s296 + $0x78] sm:$0xff]
        %v1507 = vld [vmem:[%s296 + $0x80] sm:$0xff]
        %v1508 = vld [vmem:[%s296 + $0x88] sm:$0xff]
        %v1509 = vld [vmem:[%s296 + $0x90] sm:$0xff]
        %v1510 = vld [vmem:[%s296 + $0x98] sm:$0xff]
        %v1511 = vld [vmem:[%s296 + $0xa0] sm:$0xff]
        %v1512 = vld [vmem:[%s296 + $0xa8] sm:$0xff]
        %v1513 = vld [vmem:[%s296 + $0xb0] sm:$0xff]
        %v1514 = vld [vmem:[%s296 + $0xb8] sm:$0xff]
        %v1515 = vld [vmem:[%s296 + $0xc0] sm:$0xff]
        %v1516 = vld [vmem:[%s296 + $0xc8] sm:$0xff]
        %v1517 = vld [vmem:[%s296 + $0xd0] sm:$0xff]
        %v1518 = vld [vmem:[%s296 + $0xd8] sm:$0xff]
        %v1519 = vld [vmem:[%s296 + $0xe0] sm:$0xff]
        %v1520 = vld [vmem:[%s296 + $0xe8] sm:$0xff]
        %v1521 = vld [vmem:[%s296 + $0xf0] sm:$0xff]
        %v1522 = vld [vmem:[%s296 + $0xf8] sm:$0xff]
        %v1523 = vld [vmem:[%s296 + $0x100] sm:$0xff]
        %v1524 = vld [vmem:[%s296 + $0x108] sm:$0xff]
        %v1525 = vld [vmem:[%s296 + $0x110] sm:$0xff]
        %v1526 = vld [vmem:[%s296 + $0x118] sm:$0xff]
        %v1527 = vld [vmem:[%s296 + $0x120] sm:$0xff]
        %v1528 = vld [vmem:[%s296 + $0x128] sm:$0xff]
        %v1529 = vld [vmem:[%s296 + $0x130] sm:$0xff]
        %v1530 = vld [vmem:[%s296 + $0x138] sm:$0xff]
        %v1531 = vld [vmem:[%s296 + $0x140] sm:$0xff]
        %v1532 = vld [vmem:[%s296 + $0x148] sm:$0xff]
        %v1533 = vld [vmem:[%s296 + $0x150] sm:$0xff]
        %v1534 = vld [vmem:[%s296 + $0x158] sm:$0xff]
        %v1535 = vld [vmem:[%s296 + $0x160] sm:$0xff]
        %v1536 = vld [vmem:[%s296 + $0x168] sm:$0xff]
        %v1537 = vld [vmem:[%s296 + $0x170] sm:$0xff]
        %v1538 = vld [vmem:[%s296 + $0x178] sm:$0xff]
        %v1539 = vld [vmem:[%s296 + $0x180] sm:$0xff]
        %v1540 = vld [vmem:[%s296 + $0x188] sm:$0xff]
        %v1541 = vld [vmem:[%s296 + $0x190] sm:$0xff]
        %v1542 = vld [vmem:[%s296 + $0x198] sm:$0xff]
        %v1543 = vld [vmem:[%s296 + $0x1a0] sm:$0xff]
        %v1544 = vld [vmem:[%s296 + $0x1a8] sm:$0xff]
        %v1545 = vld [vmem:[%s296 + $0x1b0] sm:$0xff]
        %v1546 = vld [vmem:[%s296 + $0x1b8] sm:$0xff]
        %v1547 = vld [vmem:[%s296 + $0x1c0] sm:$0xff]
        %v1548 = vld [vmem:[%s296 + $0x1c8] sm:$0xff]
        %v1549 = vld [vmem:[%s296 + $0x1d0] sm:$0xff]
        %v1550 = vld [vmem:[%s296 + $0x1d8] sm:$0xff]
        %v1551 = vld [vmem:[%s296 + $0x1e0] sm:$0xff]
        %v1552 = vld [vmem:[%s296 + $0x1e8] sm:$0xff]
        %v1553 = vld [vmem:[%s296 + $0x1f0] sm:$0xff]
        %v1554 = vld [vmem:[%s296 + $0x1f8] sm:$0xff]
        %1556 = vset.pattern.permute.xlu0 0
        %1557 = vperm.xlu0 %1556, %v1491
        %v1558 = vpop.permute.xlu0 %1557
        %1561 = vset.pattern.permute.xlu0 0
        %1562 = vperm.xlu0 %1561, %v1492
        %v1563 = vpop.permute.xlu0 %1562
        %1566 = vset.pattern.permute.xlu0 0
        %1567 = vperm.xlu0 %1566, %v1493
        %v1568 = vpop.permute.xlu0 %1567
        %1571 = vset.pattern.permute.xlu0 0
        %1572 = vperm.xlu0 %1571, %v1494
        %v1573 = vpop.permute.xlu0 %1572
        %1576 = vset.pattern.permute.xlu0 0
        %1577 = vperm.xlu0 %1576, %v1495
        %v1578 = vpop.permute.xlu0 %1577
        %1581 = vset.pattern.permute.xlu0 0
        %1582 = vperm.xlu0 %1581, %v1496
        %v1583 = vpop.permute.xlu0 %1582
        %1586 = vset.pattern.permute.xlu0 0
        %1587 = vperm.xlu0 %1586, %v1497
        %v1588 = vpop.permute.xlu0 %1587
        %1591 = vset.pattern.permute.xlu0 0
        %1592 = vperm.xlu0 %1591, %v1498
        %v1593 = vpop.permute.xlu0 %1592
        %1596 = vset.pattern.permute.xlu0 0
        %1597 = vperm.xlu0 %1596, %v1499
        %v1598 = vpop.permute.xlu0 %1597
        %1601 = vset.pattern.permute.xlu0 0
        %1602 = vperm.xlu0 %1601, %v1500
        %v1603 = vpop.permute.xlu0 %1602
        %1606 = vset.pattern.permute.xlu0 0
        %1607 = vperm.xlu0 %1606, %v1501
        %v1608 = vpop.permute.xlu0 %1607
        %1611 = vset.pattern.permute.xlu0 0
        %1612 = vperm.xlu0 %1611, %v1502
        %v1613 = vpop.permute.xlu0 %1612
        %1616 = vset.pattern.permute.xlu0 0
        %1617 = vperm.xlu0 %1616, %v1503
        %v1618 = vpop.permute.xlu0 %1617
        %1621 = vset.pattern.permute.xlu0 0
        %1622 = vperm.xlu0 %1621, %v1504
        %v1623 = vpop.permute.xlu0 %1622
        %1626 = vset.pattern.permute.xlu0 0
        %1627 = vperm.xlu0 %1626, %v1505
        %v1628 = vpop.permute.xlu0 %1627
        %1631 = vset.pattern.permute.xlu0 0
        %1632 = vperm.xlu0 %1631, %v1506
        %v1633 = vpop.permute.xlu0 %1632
        %1636 = vset.pattern.permute.xlu0 0
        %1637 = vperm.xlu0 %1636, %v1507
        %v1638 = vpop.permute.xlu0 %1637
        %1641 = vset.pattern.permute.xlu0 0
        %1642 = vperm.xlu0 %1641, %v1508
        %v1643 = vpop.permute.xlu0 %1642
        %1646 = vset.pattern.permute.xlu0 0
        %1647 = vperm.xlu0 %1646, %v1509
        %v1648 = vpop.permute.xlu0 %1647
        %1651 = vset.pattern.permute.xlu0 0
        %1652 = vperm.xlu0 %1651, %v1510
        %v1653 = vpop.permute.xlu0 %1652
        %1656 = vset.pattern.permute.xlu0 0
        %1657 = vperm.xlu0 %1656, %v1511
        %v1658 = vpop.permute.xlu0 %1657
        %1661 = vset.pattern.permute.xlu0 0
        %1662 = vperm.xlu0 %1661, %v1512
        %v1663 = vpop.permute.xlu0 %1662
        %1666 = vset.pattern.permute.xlu0 0
        %1667 = vperm.xlu0 %1666, %v1513
        %v1668 = vpop.permute.xlu0 %1667
        %1671 = vset.pattern.permute.xlu0 0
        %1672 = vperm.xlu0 %1671, %v1514
        %v1673 = vpop.permute.xlu0 %1672
        %1676 = vset.pattern.permute.xlu0 0
        %1677 = vperm.xlu0 %1676, %v1515
        %v1678 = vpop.permute.xlu0 %1677
        %1681 = vset.pattern.permute.xlu0 0
        %1682 = vperm.xlu0 %1681, %v1516
        %v1683 = vpop.permute.xlu0 %1682
        %1686 = vset.pattern.permute.xlu0 0
        %1687 = vperm.xlu0 %1686, %v1517
        %v1688 = vpop.permute.xlu0 %1687
        %1691 = vset.pattern.permute.xlu0 0
        %1692 = vperm.xlu0 %1691, %v1518
        %v1693 = vpop.permute.xlu0 %1692
        %1696 = vset.pattern.permute.xlu0 0
        %1697 = vperm.xlu0 %1696, %v1519
        %v1698 = vpop.permute.xlu0 %1697
        %1701 = vset.pattern.permute.xlu0 0
        %1702 = vperm.xlu0 %1701, %v1520
        %v1703 = vpop.permute.xlu0 %1702
        %1706 = vset.pattern.permute.xlu0 0
        %1707 = vperm.xlu0 %1706, %v1521
        %v1708 = vpop.permute.xlu0 %1707
        %1711 = vset.pattern.permute.xlu0 0
        %1712 = vperm.xlu0 %1711, %v1522
        %v1713 = vpop.permute.xlu0 %1712
        %1716 = vset.pattern.permute.xlu0 0
        %1717 = vperm.xlu0 %1716, %v1523
        %v1718 = vpop.permute.xlu0 %1717
        %1721 = vset.pattern.permute.xlu0 0
        %1722 = vperm.xlu0 %1721, %v1524
        %v1723 = vpop.permute.xlu0 %1722
        %1726 = vset.pattern.permute.xlu0 0
        %1727 = vperm.xlu0 %1726, %v1525
        %v1728 = vpop.permute.xlu0 %1727
        %1731 = vset.pattern.permute.xlu0 0
        %1732 = vperm.xlu0 %1731, %v1526
        %v1733 = vpop.permute.xlu0 %1732
        %1736 = vset.pattern.permute.xlu0 0
        %1737 = vperm.xlu0 %1736, %v1527
        %v1738 = vpop.permute.xlu0 %1737
        %1741 = vset.pattern.permute.xlu0 0
        %1742 = vperm.xlu0 %1741, %v1528
        %v1743 = vpop.permute.xlu0 %1742
        %1746 = vset.pattern.permute.xlu0 0
        %1747 = vperm.xlu0 %1746, %v1529
        %v1748 = vpop.permute.xlu0 %1747
        %1751 = vset.pattern.permute.xlu0 0
        %1752 = vperm.xlu0 %1751, %v1530
        %v1753 = vpop.permute.xlu0 %1752
        %1756 = vset.pattern.permute.xlu0 0
        %1757 = vperm.xlu0 %1756, %v1531
        %v1758 = vpop.permute.xlu0 %1757
        %1761 = vset.pattern.permute.xlu0 0
        %1762 = vperm.xlu0 %1761, %v1532
        %v1763 = vpop.permute.xlu0 %1762
        %1766 = vset.pattern.permute.xlu0 0
        %1767 = vperm.xlu0 %1766, %v1533
        %v1768 = vpop.permute.xlu0 %1767
        %1771 = vset.pattern.permute.xlu0 0
        %1772 = vperm.xlu0 %1771, %v1534
        %v1773 = vpop.permute.xlu0 %1772
        %1776 = vset.pattern.permute.xlu0 0
        %1777 = vperm.xlu0 %1776, %v1535
        %v1778 = vpop.permute.xlu0 %1777
        %1781 = vset.pattern.permute.xlu0 0
        %1782 = vperm.xlu0 %1781, %v1536
        %v1783 = vpop.permute.xlu0 %1782
        %1786 = vset.pattern.permute.xlu0 0
        %1787 = vperm.xlu0 %1786, %v1537
        %v1788 = vpop.permute.xlu0 %1787
        %1791 = vset.pattern.permute.xlu0 0
        %1792 = vperm.xlu0 %1791, %v1538
        %v1793 = vpop.permute.xlu0 %1792
        %1796 = vset.pattern.permute.xlu0 0
        %1797 = vperm.xlu0 %1796, %v1539
        %v1798 = vpop.permute.xlu0 %1797
        %1801 = vset.pattern.permute.xlu0 0
        %1802 = vperm.xlu0 %1801, %v1540
        %v1803 = vpop.permute.xlu0 %1802
        %1806 = vset.pattern.permute.xlu0 0
        %1807 = vperm.xlu0 %1806, %v1541
        %v1808 = vpop.permute.xlu0 %1807
        %1811 = vset.pattern.permute.xlu0 0
        %1812 = vperm.xlu0 %1811, %v1542
        %v1813 = vpop.permute.xlu0 %1812
        %1816 = vset.pattern.permute.xlu0 0
        %1817 = vperm.xlu0 %1816, %v1543
        %v1818 = vpop.permute.xlu0 %1817
        %1821 = vset.pattern.permute.xlu0 0
        %1822 = vperm.xlu0 %1821, %v1544
        %v1823 = vpop.permute.xlu0 %1822
        %1826 = vset.pattern.permute.xlu0 0
        %1827 = vperm.xlu0 %1826, %v1545
        %v1828 = vpop.permute.xlu0 %1827
        %1831 = vset.pattern.permute.xlu0 0
        %1832 = vperm.xlu0 %1831, %v1546
        %v1833 = vpop.permute.xlu0 %1832
        %1836 = vset.pattern.permute.xlu0 0
        %1837 = vperm.xlu0 %1836, %v1547
        %v1838 = vpop.permute.xlu0 %1837
        %1841 = vset.pattern.permute.xlu0 0
        %1842 = vperm.xlu0 %1841, %v1548
        %v1843 = vpop.permute.xlu0 %1842
        %1846 = vset.pattern.permute.xlu0 0
        %1847 = vperm.xlu0 %1846, %v1549
        %v1848 = vpop.permute.xlu0 %1847
        %1851 = vset.pattern.permute.xlu0 0
        %1852 = vperm.xlu0 %1851, %v1550
        %v1853 = vpop.permute.xlu0 %1852
        %1856 = vset.pattern.permute.xlu0 0
        %1857 = vperm.xlu0 %1856, %v1551
        %v1858 = vpop.permute.xlu0 %1857
        %1861 = vset.pattern.permute.xlu0 0
        %1862 = vperm.xlu0 %1861, %v1552
        %v1863 = vpop.permute.xlu0 %1862
        %1866 = vset.pattern.permute.xlu0 0
        %1867 = vperm.xlu0 %1866, %v1553
        %v1868 = vpop.permute.xlu0 %1867
        %1871 = vset.pattern.permute.xlu0 0
        %1872 = vperm.xlu0 %1871, %v1554
        %v1873 = vpop.permute.xlu0 %1872
        %v1875 = vmul.f32 %v1363, %v1558
        %v1876 = vmul.f32 %v1364, %v1558
        %v1877 = vmul.f32 %v1365, %v1563
        %v1878 = vmul.f32 %v1366, %v1563
        %v1879 = vmul.f32 %v1367, %v1568
        %v1880 = vmul.f32 %v1368, %v1568
        %v1881 = vmul.f32 %v1369, %v1573
        %v1882 = vmul.f32 %v1370, %v1573
        %v1883 = vmul.f32 %v1371, %v1578
        %v1884 = vmul.f32 %v1372, %v1578
        %v1885 = vmul.f32 %v1373, %v1583
        %v1886 = vmul.f32 %v1374, %v1583
        %v1887 = vmul.f32 %v1375, %v1588
        %v1888 = vmul.f32 %v1376, %v1588
        %v1889 = vmul.f32 %v1377, %v1593
        %v1890 = vmul.f32 %v1378, %v1593
        %v1891 = vmul.f32 %v1379, %v1598
        %v1892 = vmul.f32 %v1380, %v1598
        %v1893 = vmul.f32 %v1381, %v1603
        %v1894 = vmul.f32 %v1382, %v1603
        %v1895 = vmul.f32 %v1383, %v1608
        %v1896 = vmul.f32 %v1384, %v1608
        %v1897 = vmul.f32 %v1385, %v1613
        %v1898 = vmul.f32 %v1386, %v1613
        %v1899 = vmul.f32 %v1387, %v1618
        %v1900 = vmul.f32 %v1388, %v1618
        %v1901 = vmul.f32 %v1389, %v1623
        %v1902 = vmul.f32 %v1390, %v1623
        %v1903 = vmul.f32 %v1391, %v1628
        %v1904 = vmul.f32 %v1392, %v1628
        %v1905 = vmul.f32 %v1393, %v1633
        %v1906 = vmul.f32 %v1394, %v1633
        %v1907 = vmul.f32 %v1395, %v1638
        %v1908 = vmul.f32 %v1396, %v1638
        %v1909 = vmul.f32 %v1397, %v1643
        %v1910 = vmul.f32 %v1398, %v1643
        %v1911 = vmul.f32 %v1399, %v1648
        %v1912 = vmul.f32 %v1400, %v1648
        %v1913 = vmul.f32 %v1401, %v1653
        %v1914 = vmul.f32 %v1402, %v1653
        %v1915 = vmul.f32 %v1403, %v1658
        %v1916 = vmul.f32 %v1404, %v1658
        %v1917 = vmul.f32 %v1405, %v1663
        %v1918 = vmul.f32 %v1406, %v1663
        %v1919 = vmul.f32 %v1407, %v1668
        %v1920 = vmul.f32 %v1408, %v1668
        %v1921 = vmul.f32 %v1409, %v1673
        %v1922 = vmul.f32 %v1410, %v1673
        %v1923 = vmul.f32 %v1411, %v1678
        %v1924 = vmul.f32 %v1412, %v1678
        %v1925 = vmul.f32 %v1413, %v1683
        %v1926 = vmul.f32 %v1414, %v1683
        %v1927 = vmul.f32 %v1415, %v1688
        %v1928 = vmul.f32 %v1416, %v1688
        %v1929 = vmul.f32 %v1417, %v1693
        %v1930 = vmul.f32 %v1418, %v1693
        %v1931 = vmul.f32 %v1419, %v1698
        %v1932 = vmul.f32 %v1420, %v1698
        %v1933 = vmul.f32 %v1421, %v1703
        %v1934 = vmul.f32 %v1422, %v1703
        %v1935 = vmul.f32 %v1423, %v1708
        %v1936 = vmul.f32 %v1424, %v1708
        %v1937 = vmul.f32 %v1425, %v1713
        %v1938 = vmul.f32 %v1426, %v1713
        %v1939 = vmul.f32 %v1427, %v1718
        %v1940 = vmul.f32 %v1428, %v1718
        %v1941 = vmul.f32 %v1429, %v1723
        %v1942 = vmul.f32 %v1430, %v1723
        %v1943 = vmul.f32 %v1431, %v1728
        %v1944 = vmul.f32 %v1432, %v1728
        %v1945 = vmul.f32 %v1433, %v1733
        %v1946 = vmul.f32 %v1434, %v1733
        %v1947 = vmul.f32 %v1435, %v1738
        %v1948 = vmul.f32 %v1436, %v1738
        %v1949 = vmul.f32 %v1437, %v1743
        %v1950 = vmul.f32 %v1438, %v1743
        %v1951 = vmul.f32 %v1439, %v1748
        %v1952 = vmul.f32 %v1440, %v1748
        %v1953 = vmul.f32 %v1441, %v1753
        %v1954 = vmul.f32 %v1442, %v1753
        %v1955 = vmul.f32 %v1443, %v1758
        %v1956 = vmul.f32 %v1444, %v1758
        %v1957 = vmul.f32 %v1445, %v1763
        %v1958 = vmul.f32 %v1446, %v1763
        %v1959 = vmul.f32 %v1447, %v1768
        %v1960 = vmul.f32 %v1448, %v1768
        %v1961 = vmul.f32 %v1449, %v1773
        %v1962 = vmul.f32 %v1450, %v1773
        %v1963 = vmul.f32 %v1451, %v1778
        %v1964 = vmul.f32 %v1452, %v1778
        %v1965 = vmul.f32 %v1453, %v1783
        %v1966 = vmul.f32 %v1454, %v1783
        %v1967 = vmul.f32 %v1455, %v1788
        %v1968 = vmul.f32 %v1456, %v1788
        %v1969 = vmul.f32 %v1457, %v1793
        %v1970 = vmul.f32 %v1458, %v1793
        %v1971 = vmul.f32 %v1459, %v1798
        %v1972 = vmul.f32 %v1460, %v1798
        %v1973 = vmul.f32 %v1461, %v1803
        %v1974 = vmul.f32 %v1462, %v1803
        %v1975 = vmul.f32 %v1463, %v1808
        %v1976 = vmul.f32 %v1464, %v1808
        %v1977 = vmul.f32 %v1465, %v1813
        %v1978 = vmul.f32 %v1466, %v1813
        %v1979 = vmul.f32 %v1467, %v1818
        %v1980 = vmul.f32 %v1468, %v1818
        %v1981 = vmul.f32 %v1469, %v1823
        %v1982 = vmul.f32 %v1470, %v1823
        %v1983 = vmul.f32 %v1471, %v1828
        %v1984 = vmul.f32 %v1472, %v1828
        %v1985 = vmul.f32 %v1473, %v1833
        %v1986 = vmul.f32 %v1474, %v1833
        %v1987 = vmul.f32 %v1475, %v1838
        %v1988 = vmul.f32 %v1476, %v1838
        %v1989 = vmul.f32 %v1477, %v1843
        %v1990 = vmul.f32 %v1478, %v1843
        %v1991 = vmul.f32 %v1479, %v1848
        %v1992 = vmul.f32 %v1480, %v1848
        %v1993 = vmul.f32 %v1481, %v1853
        %v1994 = vmul.f32 %v1482, %v1853
        %v1995 = vmul.f32 %v1483, %v1858
        %v1996 = vmul.f32 %v1484, %v1858
        %v1997 = vmul.f32 %v1485, %v1863
        %v1998 = vmul.f32 %v1486, %v1863
        %v1999 = vmul.f32 %v1487, %v1868
        %v2000 = vmul.f32 %v1488, %v1868
        %v2001 = vmul.f32 %v1489, %v1873
        %v2002 = vmul.f32 %v1490, %v1873
        %v2003 = vadd.f32 %v1875, %v1877
        %v2004 = vadd.f32 %v2003, %v1879
        %v2005 = vadd.f32 %v2004, %v1881
        %v2006 = vadd.f32 %v2005, %v1883
        %v2007 = vadd.f32 %v2006, %v1885
        %v2008 = vadd.f32 %v2007, %v1887
        %v2009 = vadd.f32 %v2008, %v1889
        %v2010 = vrot.slane %v2009, 4
        %v2011 = vadd.f32 %v2009, %v2010
        %v2012 = vrot.slane %v2011, 2
        %v2013 = vadd.f32 %v2011, %v2012
        %v2014 = vrot.slane %v2013, 1
        %v2015 = vadd.f32 %v2013, %v2014
        %v2016 = vadd.f32 %v1876, %v1878
        %v2017 = vadd.f32 %v2016, %v1880
        %v2018 = vadd.f32 %v2017, %v1882
        %v2019 = vadd.f32 %v2018, %v1884
        %v2020 = vadd.f32 %v2019, %v1886
        %v2021 = vadd.f32 %v2020, %v1888
        %v2022 = vadd.f32 %v2021, %v1890
        %v2023 = vrot.slane %v2022, 4
        %v2024 = vadd.f32 %v2022, %v2023
        %v2025 = vrot.slane %v2024, 2
        %v2026 = vadd.f32 %v2024, %v2025
        %v2027 = vrot.slane %v2026, 1
        %v2028 = vadd.f32 %v2026, %v2027
        %v2029 = vadd.f32 %v1891, %v1893
        %v2030 = vadd.f32 %v2029, %v1895
        %v2031 = vadd.f32 %v2030, %v1897
        %v2032 = vadd.f32 %v2031, %v1899
        %v2033 = vadd.f32 %v2032, %v1901
        %v2034 = vadd.f32 %v2033, %v1903
        %v2035 = vadd.f32 %v2034, %v1905
        %v2036 = vrot.slane %v2035, 4
        %v2037 = vadd.f32 %v2035, %v2036
        %v2038 = vrot.slane %v2037, 2
        %v2039 = vadd.f32 %v2037, %v2038
        %v2040 = vrot.slane %v2039, 1
        %v2041 = vadd.f32 %v2039, %v2040
        %v2042 = vadd.f32 %v1892, %v1894
        %v2043 = vadd.f32 %v2042, %v1896
        %v2044 = vadd.f32 %v2043, %v1898
        %v2045 = vadd.f32 %v2044, %v1900
        %v2046 = vadd.f32 %v2045, %v1902
        %v2047 = vadd.f32 %v2046, %v1904
        %v2048 = vadd.f32 %v2047, %v1906
        %v2049 = vrot.slane %v2048, 4
        %v2050 = vadd.f32 %v2048, %v2049
        %v2051 = vrot.slane %v2050, 2
        %v2052 = vadd.f32 %v2050, %v2051
        %v2053 = vrot.slane %v2052, 1
        %v2054 = vadd.f32 %v2052, %v2053
        %v2055 = vadd.f32 %v1907, %v1909
        %v2056 = vadd.f32 %v2055, %v1911
        %v2057 = vadd.f32 %v2056, %v1913
        %v2058 = vadd.f32 %v2057, %v1915
        %v2059 = vadd.f32 %v2058, %v1917
        %v2060 = vadd.f32 %v2059, %v1919
        %v2061 = vadd.f32 %v2060, %v1921
        %v2062 = vrot.slane %v2061, 4
        %v2063 = vadd.f32 %v2061, %v2062
        %v2064 = vrot.slane %v2063, 2
        %v2065 = vadd.f32 %v2063, %v2064
        %v2066 = vrot.slane %v2065, 1
        %v2067 = vadd.f32 %v2065, %v2066
        %v2068 = vadd.f32 %v1908, %v1910
        %v2069 = vadd.f32 %v2068, %v1912
        %v2070 = vadd.f32 %v2069, %v1914
        %v2071 = vadd.f32 %v2070, %v1916
        %v2072 = vadd.f32 %v2071, %v1918
        %v2073 = vadd.f32 %v2072, %v1920
        %v2074 = vadd.f32 %v2073, %v1922
        %v2075 = vrot.slane %v2074, 4
        %v2076 = vadd.f32 %v2074, %v2075
        %v2077 = vrot.slane %v2076, 2
        %v2078 = vadd.f32 %v2076, %v2077
        %v2079 = vrot.slane %v2078, 1
        %v2080 = vadd.f32 %v2078, %v2079
        %v2081 = vadd.f32 %v1923, %v1925
        %v2082 = vadd.f32 %v2081, %v1927
        %v2083 = vadd.f32 %v2082, %v1929
        %v2084 = vadd.f32 %v2083, %v1931
        %v2085 = vadd.f32 %v2084, %v1933
        %v2086 = vadd.f32 %v2085, %v1935
        %v2087 = vadd.f32 %v2086, %v1937
        %v2088 = vrot.slane %v2087, 4
        %v2089 = vadd.f32 %v2087, %v2088
        %v2090 = vrot.slane %v2089, 2
        %v2091 = vadd.f32 %v2089, %v2090
        %v2092 = vrot.slane %v2091, 1
        %v2093 = vadd.f32 %v2091, %v2092
        %v2094 = vadd.f32 %v1924, %v1926
        %v2095 = vadd.f32 %v2094, %v1928
        %v2096 = vadd.f32 %v2095, %v1930
        %v2097 = vadd.f32 %v2096, %v1932
        %v2098 = vadd.f32 %v2097, %v1934
        %v2099 = vadd.f32 %v2098, %v1936
        %v2100 = vadd.f32 %v2099, %v1938
        %v2101 = vrot.slane %v2100, 4
        %v2102 = vadd.f32 %v2100, %v2101
        %v2103 = vrot.slane %v2102, 2
        %v2104 = vadd.f32 %v2102, %v2103
        %v2105 = vrot.slane %v2104, 1
        %v2106 = vadd.f32 %v2104, %v2105
        %v2107 = vadd.f32 %v1939, %v1941
        %v2108 = vadd.f32 %v2107, %v1943
        %v2109 = vadd.f32 %v2108, %v1945
        %v2110 = vadd.f32 %v2109, %v1947
        %v2111 = vadd.f32 %v2110, %v1949
        %v2112 = vadd.f32 %v2111, %v1951
        %v2113 = vadd.f32 %v2112, %v1953
        %v2114 = vrot.slane %v2113, 4
        %v2115 = vadd.f32 %v2113, %v2114
        %v2116 = vrot.slane %v2115, 2
        %v2117 = vadd.f32 %v2115, %v2116
        %v2118 = vrot.slane %v2117, 1
        %v2119 = vadd.f32 %v2117, %v2118
        %v2120 = vadd.f32 %v1940, %v1942
        %v2121 = vadd.f32 %v2120, %v1944
        %v2122 = vadd.f32 %v2121, %v1946
        %v2123 = vadd.f32 %v2122, %v1948
        %v2124 = vadd.f32 %v2123, %v1950
        %v2125 = vadd.f32 %v2124, %v1952
        %v2126 = vadd.f32 %v2125, %v1954
        %v2127 = vrot.slane %v2126, 4
        %v2128 = vadd.f32 %v2126, %v2127
        %v2129 = vrot.slane %v2128, 2
        %v2130 = vadd.f32 %v2128, %v2129
        %v2131 = vrot.slane %v2130, 1
        %v2132 = vadd.f32 %v2130, %v2131
        %v2133 = vadd.f32 %v1955, %v1957
        %v2134 = vadd.f32 %v2133, %v1959
        %v2135 = vadd.f32 %v2134, %v1961
        %v2136 = vadd.f32 %v2135, %v1963
        %v2137 = vadd.f32 %v2136, %v1965
        %v2138 = vadd.f32 %v2137, %v1967
        %v2139 = vadd.f32 %v2138, %v1969
        %v2140 = vrot.slane %v2139, 4
        %v2141 = vadd.f32 %v2139, %v2140
        %v2142 = vrot.slane %v2141, 2
        %v2143 = vadd.f32 %v2141, %v2142
        %v2144 = vrot.slane %v2143, 1
        %v2145 = vadd.f32 %v2143, %v2144
        %v2146 = vadd.f32 %v1956, %v1958
        %v2147 = vadd.f32 %v2146, %v1960
        %v2148 = vadd.f32 %v2147, %v1962
        %v2149 = vadd.f32 %v2148, %v1964
        %v2150 = vadd.f32 %v2149, %v1966
        %v2151 = vadd.f32 %v2150, %v1968
        %v2152 = vadd.f32 %v2151, %v1970
        %v2153 = vrot.slane %v2152, 4
        %v2154 = vadd.f32 %v2152, %v2153
        %v2155 = vrot.slane %v2154, 2
        %v2156 = vadd.f32 %v2154, %v2155
        %v2157 = vrot.slane %v2156, 1
        %v2158 = vadd.f32 %v2156, %v2157
        %v2159 = vadd.f32 %v1971, %v1973
        %v2160 = vadd.f32 %v2159, %v1975
        %v2161 = vadd.f32 %v2160, %v1977
        %v2162 = vadd.f32 %v2161, %v1979
        %v2163 = vadd.f32 %v2162, %v1981
        %v2164 = vadd.f32 %v2163, %v1983
        %v2165 = vadd.f32 %v2164, %v1985
        %v2166 = vrot.slane %v2165, 4
        %v2167 = vadd.f32 %v2165, %v2166
        %v2168 = vrot.slane %v2167, 2
        %v2169 = vadd.f32 %v2167, %v2168
        %v2170 = vrot.slane %v2169, 1
        %v2171 = vadd.f32 %v2169, %v2170
        %v2172 = vadd.f32 %v1972, %v1974
        %v2173 = vadd.f32 %v2172, %v1976
        %v2174 = vadd.f32 %v2173, %v1978
        %v2175 = vadd.f32 %v2174, %v1980
        %v2176 = vadd.f32 %v2175, %v1982
        %v2177 = vadd.f32 %v2176, %v1984
        %v2178 = vadd.f32 %v2177, %v1986
        %v2179 = vrot.slane %v2178, 4
        %v2180 = vadd.f32 %v2178, %v2179
        %v2181 = vrot.slane %v2180, 2
        %v2182 = vadd.f32 %v2180, %v2181
        %v2183 = vrot.slane %v2182, 1
        %v2184 = vadd.f32 %v2182, %v2183
        %v2185 = vadd.f32 %v1987, %v1989
        %v2186 = vadd.f32 %v2185, %v1991
        %v2187 = vadd.f32 %v2186, %v1993
        %v2188 = vadd.f32 %v2187, %v1995
        %v2189 = vadd.f32 %v2188, %v1997
        %v2190 = vadd.f32 %v2189, %v1999
        %v2191 = vadd.f32 %v2190, %v2001
        %v2192 = vrot.slane %v2191, 4
        %v2193 = vadd.f32 %v2191, %v2192
        %v2194 = vrot.slane %v2193, 2
        %v2195 = vadd.f32 %v2193, %v2194
        %v2196 = vrot.slane %v2195, 1
        %v2197 = vadd.f32 %v2195, %v2196
        %v2198 = vadd.f32 %v1988, %v1990
        %v2199 = vadd.f32 %v2198, %v1992
        %v2200 = vadd.f32 %v2199, %v1994
        %v2201 = vadd.f32 %v2200, %v1996
        %v2202 = vadd.f32 %v2201, %v1998
        %v2203 = vadd.f32 %v2202, %v2000
        %v2204 = vadd.f32 %v2203, %v2002
        %v2205 = vrot.slane %v2204, 4
        %v2206 = vadd.f32 %v2204, %v2205
        %v2207 = vrot.slane %v2206, 2
        %v2208 = vadd.f32 %v2206, %v2207
        %v2209 = vrot.slane %v2208, 1
        %v2210 = vadd.f32 %v2208, %v2209
        %vm2227 = vcmask 1041409
        %v2228 = vsel %vm2227, %v2041, %v2015
        %vm2229 = vcmask 1042434
        %v2230 = vsel %vm2229, %v2067, %v2228
        %vm2231 = vcmask 1043459
        %v2232 = vsel %vm2231, %v2093, %v2230
        %vm2233 = vcmask 1044484
        %v2234 = vsel %vm2233, %v2119, %v2232
        %vm2235 = vcmask 1045509
        %v2236 = vsel %vm2235, %v2145, %v2234
        %vm2237 = vcmask 1046534
        %v2238 = vsel %vm2237, %v2171, %v2236
        %vm2239 = vcmask 1047559
        %v2240 = vsel %vm2239, %v2197, %v2238
        %v2241 = vsel %vm2227, %v2054, %v2028
        %v2242 = vsel %vm2229, %v2080, %v2241
        %v2243 = vsel %vm2231, %v2106, %v2242
        %v2244 = vsel %vm2233, %v2132, %v2243
        %v2245 = vsel %vm2235, %v2158, %v2244
        %v2246 = vsel %vm2237, %v2184, %v2245
        %v2247 = vsel %vm2239, %v2210, %v2246
        %2250 = vst [vmem:[%s276] sm:$0xff] %v2240
        %2251 = vst [vmem:[%s276 + $0x8] sm:$0xff] %v2247
        %s2252 = sand.u32 %s166, 1
        %s2253 = scalar_lea.sflag [#allocation3], %s2252
        %s2254 = sand.u32 %s166, 1
        %s2255 = smul.addr %s2254, 16
        %s2256 = scalar_lea.vmem [#allocation2], %s2255
        // Predicated region
        $region41: #{tpu_custom_call.1} parent=39 // pred_check
          %p2257 = pneg %p176
        $region42: #{tpu_custom_call.1} parent=39 // pred_check_branch
          %2259 = sbr.rel (%p2257) target = $region44
        $region43: #{tpu_custom_call.1} parent=39 // pred_region
          %s2261 = ssub.s32 256, 256
          %2262 = vsyncadd %s2253, %s2261
          %s2263 = smul.addr %s24, 2
          %s2264 = smul.addr %s23, 4
          %s2265 = sadd.s32 %s2263, %s2264
          %s2266 = smul.addr %s2265, 128
          %s2267 = scalar_lea.hbm %s5, %s2266
          %s2269 = sshll.u32 %s2256, 4
          %s2270 = int_to_ptr.vmem [resolvable:$true] %s2269
          %2272 = dma.vmem_to_hbm [thread:$0]  %s2270, 256, %s2267, %s2253
        $region44: #{tpu_custom_call.1} parent=39 // pred_fallthru
          _
      $region40: #{tpu_custom_call.1} parent=5 // pred_fallthru
        _
      %p2273 = scmp.le.s32.totalorder 2, %s14
      // Predicated region
      $region45: #{tpu_custom_call.1} parent=5 // pred_check
        %p2274 = pneg %p2273
      $region46: #{tpu_custom_call.1} parent=5 // pred_check_branch
        %2276 = sbr.rel (%p2274) target = $region48
      $region47: #{tpu_custom_call.1} parent=5 // pred_region
        %s2277 = ssub.s32 %s14, 2
        // Predicated region
        $region49: #{tpu_custom_call.1} parent=47 // pred_check
          %p2278 = pneg %p182
        $region50: #{tpu_custom_call.1} parent=47 // pred_check_branch
          %2280 = sbr.rel (%p2278) target = $region52
        $region51: #{tpu_custom_call.1} parent=47 // pred_region
          %s2281 = sand.u32 %s167, 1
          %s2282 = scalar_lea.sflag [#allocation3], %s2281
          %s2283 = sand.u32 %s167, 1
          %s2284 = smul.addr %s2283, 16
          %s2285 = scalar_lea.vmem [#allocation2], %s2284
          %2286 = dma.done %s2282, 256
        $region52: #{tpu_custom_call.1} parent=47 // pred_fallthru
          _
      $region48: #{tpu_custom_call.1} parent=5 // pred_fallthru
        _
    $region6: #{tpu_custom_call.1} parent=1 // loop_footer
      %s18 = sadd.s32 1, %s14
    $region7: #{tpu_custom_call.1} parent=1 // loop_footer_branch
      %13 = sbr.rel target = $region3
    $region8: #{tpu_custom_call.1} parent=1 // loop_exit
      _
    %2287 = vsyncpa [#allocation3], 1
    %s2288 = scalar_lea.sflag [#allocation3], 1
    %2289 = vsyncpa %s2288, 1

// kernel: tpu_custom_call.1
$region0: #{tpu_custom_call.1}
  #allocation0 [shape = 'u32[]', space=smem, size = 0x4, offset = 0x4, fixed_abs, tag = 'smem constant byte address 0x4 - core index']
  #allocation1 [shape = 'u32[144,128]{1,0:T(1,128)}', space=vmem, size = 0x12000, scoped, tag = 'internal scratch']
  %s0 = inlined_call_operand.vmem [shape: f32[2,64,16], index: 0, kind: input, shape index: {}]
  %s1 = inlined_call_operand.vmem [shape: bf16[2,64,256], index: 1, kind: input, shape index: {}]
  %s2 = inlined_call_operand.vmem [shape: bf16[16,256], index: 2, kind: input, shape index: {}]
  %s3 = inlined_call_operand.vmem [shape: bf16[1,512,64], index: 3, kind: input, shape index: {}]
  %s4 = inlined_call_operand.vmem [shape: f32[1,512,1], index: 4, kind: input, shape index: {}]
  %s5 = inlined_call_operand.hbm [shape: f32[1,2,8,256], index: 5, kind: output, shape index: {}]
  %s6 = sld [smem:[#allocation0]]
  $region53: #{tpu_custom_call.1} parent=0
    _
  %s8 = ssub.s32 1, %s6
  %s9 = scalar_select 0, %s8, %s6
  $region1: #{tpu_custom_call.1} parent=0
    #allocation2 [shape = 'u8[16384]{0}', space=vmem, size = 0x4000, scoped, tag = 'output window, operand 0']
    #allocation3 [shape = 's32[2]{0}', space=sflag, size = 0x8, scoped, tag = 'scoped memory for tpu_custom_call.1']
    %10 = vsyncpa [#allocation3], 0
    %s11 = scalar_lea.sflag [#allocation3], 1
    %12 = vsyncpa %s11, 0
    loop: start=0, step=1, limit=4
    $region2: #{tpu_custom_call.1} parent=1 // loop_pre_header
      _
    $region3: #{tpu_custom_call.1} parent=1 // loop_header
      %s14 = sphi 0, %s18
      %p15 = scmp.ge.s32.totalorder %s14, 4
      %s21 = sphi 0, %s33
      %s22 = sphi 0, %s29
      %s23 = sphi 0, %s21
      %s24 = sphi 0, %s22
      %s25 = sphi 0, %s23
      %s26 = sphi 0, %s24
      %s36 = sphi 0, %s38
      %s39 = sphi 0, %s36
      %s40 = sphi 0, %s39
      %s56 = sphi 0, %s40
      %s62 = sphi 0, %s64
      %s65 = sphi 0, %s62
      %s66 = sphi 0, %s65
      %s82 = sphi 0, %s66
      %s86 = sphi 0, %s86
      %s88 = sphi 0, %s86
      %s89 = sphi 0, %s88
      %s103 = sphi 0, %s89
      %s109 = sphi 0, %s111
      %s112 = sphi 0, %s109
      %s113 = sphi 0, %s112
      %s129 = sphi 0, %s113
      %s135 = sphi 0, %s137
      %s138 = sphi 0, %s135
      %s139 = sphi 0, %s138
      %s155 = sphi 0, %s139
      %s163 = sphi 0, %s165
      %s166 = sphi 0, %s163
      %s167 = sphi 0, %s166
      %s183 = sphi 0, %s167
    $region4: #{tpu_custom_call.1} parent=1 // loop_header_branch
      %17 = sbr.rel (%p15) target = $region8
    $region5: #{tpu_custom_call.1} parent=1 // loop_body
      %s19 = ssub.s32 %s14, 1
      %s20 = ssub.s32 %s14, 2
      %s27 = sadd.s32 1, %s22
      %p28 = scmp.ge.s32.totalorder %s27, 2
      %s29 = scalar_select %p28, 0, %s27
      %s30 = sadd.s32 1, %s21
      %s31 = scalar_select %p28, %s30, %s21
      %p32 = scmp.ge.s32.totalorder %s31, 1
      %s33 = scalar_select %p32, 0, %s31
      %s34 = ssub.s32 %s22, %s29
      %p35 = scmp.eq.s32.totalorder %s34, 0
      %s37 = sadd.s32 %s36, 1
      %s38 = scalar_select %p35, %s36, %s37
      %p41 = pneg %p35
      %p42 = scmp.eq.s32.totalorder %s14, 1
      %p43 = por %p41, %p42
      %p44 = scmp.ne.s32.totalorder %s36, %s39
      %p45 = scmp.eq.s32.totalorder %s14, 0
      %p46 = por %p44, %p45
      %p47 = scmp.ne.s32.totalorder %s36, %s39
      %p48 = scmp.eq.s32.totalorder %s19, 1
      %p49 = por %p47, %p48
      %p50 = scmp.ne.s32.totalorder %s39, %s40
      %p51 = scmp.eq.s32.totalorder %s19, 0
      %p52 = por %p50, %p51
      %p53 = scmp.ne.s32.totalorder %s39, %s40
      %p54 = scmp.eq.s32.totalorder %s20, 1
      %p55 = por %p53, %p54
      %p57 = scmp.ne.s32.totalorder %s40, %s56
      %p58 = scmp.eq.s32.totalorder %s20, 0
      %p59 = por %p57, %p58
      %s60 = ssub.s32 %s22, %s29
      %p61 = scmp.eq.s32.totalorder %s60, 0
      %s63 = sadd.s32 %s62, 1
      %s64 = scalar_select %p61, %s62, %s63
      %p67 = pneg %p61
      %p68 = scmp.eq.s32.totalorder %s14, 1
      %p69 = por %p67, %p68
      %p70 = scmp.ne.s32.totalorder %s62, %s65
      %p71 = scmp.eq.s32.totalorder %s14, 0
      %p72 = por %p70, %p71
      %p73 = scmp.ne.s32.totalorder %s62, %s65
      %p74 = scmp.eq.s32.totalorder %s19, 1
      %p75 = por %p73, %p74
      %p76 = scmp.ne.s32.totalorder %s65, %s66
      %p77 = scmp.eq.s32.totalorder %s19, 0
      %p78 = por %p76, %p77
      %p79 = scmp.ne.s32.totalorder %s65, %s66
      %p80 = scmp.eq.s32.totalorder %s20, 1
      %p81 = por %p79, %p80
      %p83 = scmp.ne.s32.totalorder %s66, %s82
      %p84 = scmp.eq.s32.totalorder %s20, 0
      %p85 = por %p83, %p84
      %s87 = sadd.s32 %s86, 1
      %p90 = scmp.eq.s32.totalorder %s14, 1
      %p91 = scmp.ne.s32.totalorder %s86, %s88
      %p92 = scmp.eq.s32.totalorder %s14, 0
      %p93 = por %p91, %p92
      %p94 = scmp.ne.s32.totalorder %s86, %s88
      %p95 = scmp.eq.s32.totalorder %s19, 1
      %p96 = por %p94, %p95
      %p97 = scmp.ne.s32.totalorder %s88, %s89
      %p98 = scmp.eq.s32.totalorder %s19, 0
      %p99 = por %p97, %p98
      %p100 = scmp.ne.s32.totalorder %s88, %s89
      %p101 = scmp.eq.s32.totalorder %s20, 1
      %p102 = por %p100, %p101
      %p104 = scmp.ne.s32.totalorder %s89, %s103
      %p105 = scmp.eq.s32.totalorder %s20, 0
      %p106 = por %p104, %p105
      %s107 = ssub.s32 %s21, %s33
      %p108 = scmp.eq.s32.totalorder %s107, 0
      %s110 = sadd.s32 %s109, 1
      %s111 = scalar_select %p108, %s109, %s110
      %p114 = pneg %p108
      %p115 = scmp.eq.s32.totalorder %s14, 1
      %p116 = por %p114, %p115
      %p117 = scmp.ne.s32.totalorder %s109, %s112
      %p118 = scmp.eq.s32.totalorder %s14, 0
      %p119 = por %p117, %p118
      %p120 = scmp.ne.s32.totalorder %s109, %s112
      %p121 = scmp.eq.s32.totalorder %s19, 1
      %p122 = por %p120, %p121
      %p123 = scmp.ne.s32.totalorder %s112, %s113
      %p124 = scmp.eq.s32.totalorder %s19, 0
      %p125 = por %p123, %p124
      %p126 = scmp.ne.s32.totalorder %s112, %s113
      %p127 = scmp.eq.s32.totalorder %s20, 1
      %p128 = por %p126, %p127
      %p130 = scmp.ne.s32.totalorder %s113, %s129
      %p131 = scmp.eq.s32.totalorder %s20, 0
      %p132 = por %p130, %p131
      %s133 = ssub.s32 %s21, %s33
      %p134 = scmp.eq.s32.totalorder %s133, 0
      %s136 = sadd.s32 %s135, 1
      %s137 = scalar_select %p134, %s135, %s136
      %p140 = pneg %p134
      %p141 = scmp.eq.s32.totalorder %s14, 1
      %p142 = por %p140, %p141
      %p143 = scmp.ne.s32.totalorder %s135, %s138
      %p144 = scmp.eq.s32.totalorder %s14, 0
      %p145 = por %p143, %p144
      %p146 = scmp.ne.s32.totalorder %s135, %s138
      %p147 = scmp.eq.s32.totalorder %s19, 1
      %p148 = por %p146, %p147
      %p149 = scmp.ne.s32.totalorder %s138, %s139
      %p150 = scmp.eq.s32.totalorder %s19, 0
      %p151 = por %p149, %p150
      %p152 = scmp.ne.s32.totalorder %s138, %s139
      %p153 = scmp.eq.s32.totalorder %s20, 1
      %p154 = por %p152, %p153
      %p156 = scmp.ne.s32.totalorder %s139, %s155
      %p157 = scmp.eq.s32.totalorder %s20, 0
      %p158 = por %p156, %p157
      %s159 = ssub.s32 %s21, %s33
      %s160 = ssub.s32 %s22, %s29
      %s161 = sor.u32 %s159, %s160
      %p162 = scmp.eq.s32.totalorder %s161, 0
      %s164 = sadd.s32 %s163, 1
      %s165 = scalar_select %p162, %s163, %s164
      %p168 = pneg %p162
      %p169 = scmp.eq.s32.totalorder %s14, 1
      %p170 = por %p168, %p169
      %p171 = scmp.ne.s32.totalorder %s163, %s166
      %p172 = scmp.eq.s32.totalorder %s14, 0
      %p173 = por %p171, %p172
      %p174 = scmp.ne.s32.totalorder %s163, %s166
      %p175 = scmp.eq.s32.totalorder %s19, 1
      %p176 = por %p174, %p175
      %p177 = scmp.ne.s32.totalorder %s166, %s167
      %p178 = scmp.eq.s32.totalorder %s19, 0
      %p179 = por %p177, %p178
      %p180 = scmp.ne.s32.totalorder %s166, %s167
      %p181 = scmp.eq.s32.totalorder %s20, 1
      %p182 = por %p180, %p181
      %p184 = scmp.ne.s32.totalorder %s167, %s183
      %p185 = scmp.eq.s32.totalorder %s20, 0
      %p186 = por %p184, %p185
      %p187 = scmp.le.s32.totalorder 1, %s14
      %p188 = scmp.lt.s32.totalorder %s14, 3
      %p189 = pnand %p187, %p188
      %p190 = pneg %p189
      // Predicated region
      $region9: #{tpu_custom_call.1} parent=5 // pred_check
        _
      $region10: #{tpu_custom_call.1} parent=5 // pred_check_branch
        %192 = sbr.rel (%p189) target = $region12
      $region11: #{tpu_custom_call.1} parent=5 // pred_region
        %s193 = ssub.s32 %s14, 1
        // Predicated region
        $region13: #{tpu_custom_call.1} parent=11 // pred_check
          %p194 = pneg %p99
        $region14: #{tpu_custom_call.1} parent=11 // pred_check_branch
          %196 = sbr.rel (%p194) target = $region16
        $region15: #{tpu_custom_call.1} parent=11 // pred_region
          _
        $region16: #{tpu_custom_call.1} parent=11 // pred_fallthru
          _
        // Predicated region
        $region17: #{tpu_custom_call.1} parent=11 // pred_check
          %p197 = pneg %p125
        $region18: #{tpu_custom_call.1} parent=11 // pred_check_branch
          %199 = sbr.rel (%p197) target = $region20
        $region19: #{tpu_custom_call.1} parent=11 // pred_region
          %p200 = scmp.lt.s32.totalorder %s23, 0
          %s201 = scalar_select %p200, %s23, 0
          %s202 = smul.addr %s201, 64
          %s203 = smul.addr %s202, 4
          %s204 = scalar_lea.vmem %s3, %s203
        $region20: #{tpu_custom_call.1} parent=11 // pred_fallthru
          _
        // Predicated region
        $region21: #{tpu_custom_call.1} parent=11 // pred_check
          %p205 = pneg %p151
        $region22: #{tpu_custom_call.1} parent=11 // pred_check_branch
          %207 = sbr.rel (%p205) target = $region24
        $region23: #{tpu_custom_call.1} parent=11 // pred_region
          %p208 = scmp.lt.s32.totalorder %s23, 0
          %s209 = scalar_select %p208, %s23, 0
          %s210 = smul.addr %s209, 64
          %s211 = smul.addr %s210, 8
          %s212 = scalar_lea.vmem %s4, %s211
        $region24: #{tpu_custom_call.1} parent=11 // pred_fallthru
          _
      $region12: #{tpu_custom_call.1} parent=5 // pred_fallthru
        _
      %p213 = scmp.lt.s32.totalorder %s14, 2
      // Predicated region
      $region25: #{tpu_custom_call.1} parent=5 // pred_check
        %p214 = pneg %p213
      $region26: #{tpu_custom_call.1} parent=5 // pred_check_branch
        %216 = sbr.rel (%p214) target = $region28
      $region27: #{tpu_custom_call.1} parent=5 // pred_region
        // Predicated region
        $region29: #{tpu_custom_call.1} parent=27 // pred_check
          %p217 = pneg %p46
        $region30: #{tpu_custom_call.1} parent=27 // pred_check_branch
          %219 = sbr.rel (%p217) target = $region32
        $region31: #{tpu_custom_call.1} parent=27 // pred_region
          %p220 = scmp.lt.s32.totalorder %s22, 1
          %s221 = scalar_select %p220, %s22, 1
          %s222 = smul.addr %s221, 8
          %s223 = smul.addr %s222, 8
          %s224 = scalar_lea.vmem %s0, %s223
        $region32: #{tpu_custom_call.1} parent=27 // pred_fallthru
          _
        // Predicated region
        $region33: #{tpu_custom_call.1} parent=27 // pred_check
          %p225 = pneg %p72
        $region34: #{tpu_custom_call.1} parent=27 // pred_check_branch
          %227 = sbr.rel (%p225) target = $region36
        $region35: #{tpu_custom_call.1} parent=27 // pred_region
          %p228 = scmp.lt.s32.totalorder %s22, 1
          %s229 = scalar_select %p228, %s22, 1
          %s230 = smul.addr %s229, 16
          %s231 = smul.addr %s230, 4
          %s232 = scalar_lea.vmem %s1, %s231
        $region36: #{tpu_custom_call.1} parent=27 // pred_fallthru
          _
      $region28: #{tpu_custom_call.1} parent=5 // pred_fallthru
        _
      %p233 = scmp.le.s32.totalorder 1, %s14
      %p234 = scmp.lt.s32.totalorder %s14, 3
      %p235 = pnand %p233, %p234
      %p236 = pneg %p235
      // Predicated region
      $region37: #{tpu_custom_call.1} parent=5 // pred_check
        _
      $region38: #{tpu_custom_call.1} parent=5 // pred_check_branch
        %238 = sbr.rel (%p235) target = $region40
      $region39: #{tpu_custom_call.1} parent=5 // pred_region
        %s239 = ssub.s32 %s14, 1
        %p240 = scmp.lt.s32.totalorder %s24, 1
        %s241 = scalar_select %p240, %s24, 1
        %s242 = smul.addr %s241, 8
        %s243 = smul.addr %s242, 8
        %s244 = scalar_lea.vmem %s0, %s243
        %p245 = pneg %p52
        %p246 = pneg %p49
        %p247 = scmp.lt.s32.totalorder %s24, 1
        %s248 = scalar_select %p247, %s24, 1
        %s249 = smul.addr %s248, 16
        %s250 = smul.addr %s249, 4
        %s251 = scalar_lea.vmem %s1, %s250
        %p252 = pneg %p78
        %p253 = pneg %p75
        %p254 = pneg %p99
        %p255 = pneg %p96
        %p256 = scmp.lt.s32.totalorder %s23, 0
        %s257 = scalar_select %p256, %s23, 0
        %s258 = smul.addr %s257, 64
        %s259 = smul.addr %s258, 4
        %s260 = scalar_lea.vmem %s3, %s259
        %p261 = pneg %p125
        %p262 = pneg %p122
        %p263 = scmp.lt.s32.totalorder %s23, 0
        %s264 = scalar_select %p263, %s23, 0
        %s265 = smul.addr %s264, 64
        %s266 = smul.addr %s265, 8
        %s267 = scalar_lea.vmem %s4, %s266
        %p268 = pneg %p151
        %p269 = pneg %p148
        %p270 = pneg %p179
        %p271 = pneg %p176
        %s272 = sand.u32 %s166, 1
        %s273 = scalar_lea.sflag [#allocation3], %s272
        %s274 = sand.u32 %s166, 1
        %s275 = smul.addr %s274, 16
        %s276 = scalar_lea.vmem [#allocation2], %s275
        %p277 = scmp.lt.s32.totalorder %s24, 1
        %s278 = scalar_select %p277, %s24, 1
        %s279 = smul.addr %s278, 8
        %s280 = smul.addr %s279, 8
        %s281 = scalar_lea.vmem %s0, %s280
        %p282 = scmp.lt.s32.totalorder %s24, 1
        %s283 = scalar_select %p282, %s24, 1
        %s284 = smul.addr %s283, 16
        %s285 = smul.addr %s284, 4
        %s286 = scalar_lea.vmem %s1, %s285
        %p287 = scmp.lt.s32.totalorder %s23, 0
        %s288 = scalar_select %p287, %s23, 0
        %s289 = smul.addr %s288, 64
        %s290 = smul.addr %s289, 4
        %s291 = scalar_lea.vmem %s3, %s290
        %p292 = scmp.lt.s32.totalorder %s23, 0
        %s293 = scalar_select %p292, %s23, 0
        %s294 = smul.addr %s293, 64
        %s295 = smul.addr %s294, 8
        %s296 = scalar_lea.vmem %s4, %s295
        %v298 = vld [vmem:[%s291] sm:$0xf]
        %v299 = vld [vmem:[%s291 + $0x4] sm:$0xf]
        %v300 = vld [vmem:[%s291 + $0x8] sm:$0xf]
        %v301 = vld [vmem:[%s291 + $0xc] sm:$0xf]
        %v302 = vld [vmem:[%s291 + $0x10] sm:$0xf]
        %v303 = vld [vmem:[%s291 + $0x14] sm:$0xf]
        %v304 = vld [vmem:[%s291 + $0x18] sm:$0xf]
        %v305 = vld [vmem:[%s291 + $0x1c] sm:$0xf]
        %v306 = vld [vmem:[%s291 + $0x20] sm:$0xf]
        %v307 = vld [vmem:[%s291 + $0x24] sm:$0xf]
        %v308 = vld [vmem:[%s291 + $0x28] sm:$0xf]
        %v309 = vld [vmem:[%s291 + $0x2c] sm:$0xf]
        %v310 = vld [vmem:[%s291 + $0x30] sm:$0xf]
        %v311 = vld [vmem:[%s291 + $0x34] sm:$0xf]
        %v312 = vld [vmem:[%s291 + $0x38] sm:$0xf]
        %v313 = vld [vmem:[%s291 + $0x3c] sm:$0xf]
        %v314 = vld [vmem:[%s291 + $0x40] sm:$0xf]
        %v315 = vld [vmem:[%s291 + $0x44] sm:$0xf]
        %v316 = vld [vmem:[%s291 + $0x48] sm:$0xf]
        %v317 = vld [vmem:[%s291 + $0x4c] sm:$0xf]
        %v318 = vld [vmem:[%s291 + $0x50] sm:$0xf]
        %v319 = vld [vmem:[%s291 + $0x54] sm:$0xf]
        %v320 = vld [vmem:[%s291 + $0x58] sm:$0xf]
        %v321 = vld [vmem:[%s291 + $0x5c] sm:$0xf]
        %v322 = vld [vmem:[%s291 + $0x60] sm:$0xf]
        %v323 = vld [vmem:[%s291 + $0x64] sm:$0xf]
        %v324 = vld [vmem:[%s291 + $0x68] sm:$0xf]
        %v325 = vld [vmem:[%s291 + $0x6c] sm:$0xf]
        %v326 = vld [vmem:[%s291 + $0x70] sm:$0xf]
        %v327 = vld [vmem:[%s291 + $0x74] sm:$0xf]
        %v328 = vld [vmem:[%s291 + $0x78] sm:$0xf]
        %v329 = vld [vmem:[%s291 + $0x7c] sm:$0xf]
        %v330 = vld [vmem:[%s291 + $0x80] sm:$0xf]
        %v331 = vld [vmem:[%s291 + $0x84] sm:$0xf]
        %v332 = vld [vmem:[%s291 + $0x88] sm:$0xf]
        %v333 = vld [vmem:[%s291 + $0x8c] sm:$0xf]
        %v334 = vld [vmem:[%s291 + $0x90] sm:$0xf]
        %v335 = vld [vmem:[%s291 + $0x94] sm:$0xf]
        %v336 = vld [vmem:[%s291 + $0x98] sm:$0xf]
        %v337 = vld [vmem:[%s291 + $0x9c] sm:$0xf]
        %v338 = vld [vmem:[%s291 + $0xa0] sm:$0xf]
        %v339 = vld [vmem:[%s291 + $0xa4] sm:$0xf]
        %v340 = vld [vmem:[%s291 + $0xa8] sm:$0xf]
        %v341 = vld [vmem:[%s291 + $0xac] sm:$0xf]
        %v342 = vld [vmem:[%s291 + $0xb0] sm:$0xf]
        %v343 = vld [vmem:[%s291 + $0xb4] sm:$0xf]
        %v344 = vld [vmem:[%s291 + $0xb8] sm:$0xf]
        %v345 = vld [vmem:[%s291 + $0xbc] sm:$0xf]
        %v346 = vld [vmem:[%s291 + $0xc0] sm:$0xf]
        %v347 = vld [vmem:[%s291 + $0xc4] sm:$0xf]
        %v348 = vld [vmem:[%s291 + $0xc8] sm:$0xf]
        %v349 = vld [vmem:[%s291 + $0xcc] sm:$0xf]
        %v350 = vld [vmem:[%s291 + $0xd0] sm:$0xf]
        %v351 = vld [vmem:[%s291 + $0xd4] sm:$0xf]
        %v352 = vld [vmem:[%s291 + $0xd8] sm:$0xf]
        %v353 = vld [vmem:[%s291 + $0xdc] sm:$0xf]
        %v354 = vld [vmem:[%s291 + $0xe0] sm:$0xf]
        %v355 = vld [vmem:[%s291 + $0xe4] sm:$0xf]
        %v356 = vld [vmem:[%s291 + $0xe8] sm:$0xf]
        %v357 = vld [vmem:[%s291 + $0xec] sm:$0xf]
        %v358 = vld [vmem:[%s291 + $0xf0] sm:$0xf]
        %v359 = vld [vmem:[%s291 + $0xf4] sm:$0xf]
        %v360 = vld [vmem:[%s291 + $0xf8] sm:$0xf]
        %v361 = vld [vmem:[%s291 + $0xfc] sm:$0xf]
        %v362 = vld [vmem:[%s286] sm:$0xff]
        %v363 = vld [vmem:[%s286 + $0x8] sm:$0xff]
        %v364 = vld [vmem:[%s286 + $0x10] sm:$0xff]
        %v365 = vld [vmem:[%s286 + $0x18] sm:$0xff]
        %v366 = vld [vmem:[%s286 + $0x20] sm:$0xff]
        %v367 = vld [vmem:[%s286 + $0x28] sm:$0xff]
        %v368 = vld [vmem:[%s286 + $0x30] sm:$0xff]
        %v369 = vld [vmem:[%s286 + $0x38] sm:$0xff]
        %v434 = vunpack.c.l.b16 %v298
        %v435 = vunpack.c.l.b16 %v299
        %v436 = vunpack.c.l.b16 %v300
        %v437 = vunpack.c.l.b16 %v301
        %v438 = vunpack.c.l.b16 %v302
        %v439 = vunpack.c.l.b16 %v303
        %v440 = vunpack.c.l.b16 %v304
        %v441 = vunpack.c.l.b16 %v305
        %v442 = vunpack.c.l.b16 %v306
        %v443 = vunpack.c.l.b16 %v307
        %v444 = vunpack.c.l.b16 %v308
        %v445 = vunpack.c.l.b16 %v309
        %v446 = vunpack.c.l.b16 %v310
        %v447 = vunpack.c.l.b16 %v311
        %v448 = vunpack.c.l.b16 %v312
        %v449 = vunpack.c.l.b16 %v313
        %v450 = vunpack.c.l.b16 %v314
        %v451 = vunpack.c.l.b16 %v315
        %v452 = vunpack.c.l.b16 %v316
        %v453 = vunpack.c.l.b16 %v317
        %v454 = vunpack.c.l.b16 %v318
        %v455 = vunpack.c.l.b16 %v319
        %v456 = vunpack.c.l.b16 %v320
        %v457 = vunpack.c.l.b16 %v321
        %v458 = vunpack.c.l.b16 %v322
        %v459 = vunpack.c.l.b16 %v323
        %v460 = vunpack.c.l.b16 %v324
        %v461 = vunpack.c.l.b16 %v325
        %v462 = vunpack.c.l.b16 %v326
        %v463 = vunpack.c.l.b16 %v327
        %v464 = vunpack.c.l.b16 %v328
        %v465 = vunpack.c.l.b16 %v329
        %v466 = vunpack.c.l.b16 %v330
        %v467 = vunpack.c.l.b16 %v331
        %v468 = vunpack.c.l.b16 %v332
        %v469 = vunpack.c.l.b16 %v333
        %v470 = vunpack.c.l.b16 %v334
        %v471 = vunpack.c.l.b16 %v335
        %v472 = vunpack.c.l.b16 %v336
        %v473 = vunpack.c.l.b16 %v337
        %v474 = vunpack.c.l.b16 %v338
        %v475 = vunpack.c.l.b16 %v339
        %v476 = vunpack.c.l.b16 %v340
        %v477 = vunpack.c.l.b16 %v341
        %v478 = vunpack.c.l.b16 %v342
        %v479 = vunpack.c.l.b16 %v343
        %v480 = vunpack.c.l.b16 %v344
        %v481 = vunpack.c.l.b16 %v345
        %v482 = vunpack.c.l.b16 %v346
        %v483 = vunpack.c.l.b16 %v347
        %v484 = vunpack.c.l.b16 %v348
        %v485 = vunpack.c.l.b16 %v349
        %v486 = vunpack.c.l.b16 %v350
        %v487 = vunpack.c.l.b16 %v351
        %v488 = vunpack.c.l.b16 %v352
        %v489 = vunpack.c.l.b16 %v353
        %v490 = vunpack.c.l.b16 %v354
        %v491 = vunpack.c.l.b16 %v355
        %v492 = vunpack.c.l.b16 %v356
        %v493 = vunpack.c.l.b16 %v357
        %v494 = vunpack.c.l.b16 %v358
        %v495 = vunpack.c.l.b16 %v359
        %v496 = vunpack.c.l.b16 %v360
        %v497 = vunpack.c.l.b16 %v361
        %v498 = vpack.c.b16 %v435, %v434
        %v499 = vpack.c.b16 %v437, %v436
        %v500 = vpack.c.b16 %v439, %v438
        %v501 = vpack.c.b16 %v441, %v440
        %v502 = vpack.c.b16 %v443, %v442
        %v503 = vpack.c.b16 %v445, %v444
        %v504 = vpack.c.b16 %v447, %v446
        %v505 = vpack.c.b16 %v449, %v448
        %v506 = vpack.c.b16 %v451, %v450
        %v507 = vpack.c.b16 %v453, %v452
        %v508 = vpack.c.b16 %v455, %v454
        %v509 = vpack.c.b16 %v457, %v456
        %v510 = vpack.c.b16 %v459, %v458
        %v511 = vpack.c.b16 %v461, %v460
        %v512 = vpack.c.b16 %v463, %v462
        %v513 = vpack.c.b16 %v465, %v464
        %v514 = vpack.c.b16 %v467, %v466
        %v515 = vpack.c.b16 %v469, %v468
        %v516 = vpack.c.b16 %v471, %v470
        %v517 = vpack.c.b16 %v473, %v472
        %v518 = vpack.c.b16 %v475, %v474
        %v519 = vpack.c.b16 %v477, %v476
        %v520 = vpack.c.b16 %v479, %v478
        %v521 = vpack.c.b16 %v481, %v480
        %v522 = vpack.c.b16 %v483, %v482
        %v523 = vpack.c.b16 %v485, %v484
        %v524 = vpack.c.b16 %v487, %v486
        %v525 = vpack.c.b16 %v489, %v488
        %v526 = vpack.c.b16 %v491, %v490
        %v527 = vpack.c.b16 %v493, %v492
        %v528 = vpack.c.b16 %v495, %v494
        %v529 = vpack.c.b16 %v497, %v496
        %v538 = vunpack.c.l.b16 %v362
        %v539 = vunpack.c.h.b16 %v362
        %v540 = vunpack.c.l.b16 %v363
        %v541 = vunpack.c.h.b16 %v363
        %v542 = vunpack.c.l.b16 %v364
        %v543 = vunpack.c.h.b16 %v364
        %v544 = vunpack.c.l.b16 %v365
        %v545 = vunpack.c.h.b16 %v365
        %v546 = vunpack.c.l.b16 %v366
        %v547 = vunpack.c.h.b16 %v366
        %v548 = vunpack.c.l.b16 %v367
        %v549 = vunpack.c.h.b16 %v367
        %v550 = vunpack.c.l.b16 %v368
        %v551 = vunpack.c.h.b16 %v368
        %v552 = vunpack.c.l.b16 %v369
        %v553 = vunpack.c.h.b16 %v369
        %v554 = vpack.c.b16 %v540, %v538
        %v555 = vpack.c.b16 %v541, %v539
        %v556 = vpack.c.b16 %v544, %v542
        %v557 = vpack.c.b16 %v545, %v543
        %v558 = vpack.c.b16 %v548, %v546
        %v559 = vpack.c.b16 %v549, %v547
        %v560 = vpack.c.b16 %v552, %v550
        %v561 = vpack.c.b16 %v553, %v551
        %vm570 = vcmask 523264
        %v572 = vsel %vm570, %v498, 0
        %v575 = vsel %vm570, %v499, 0
        %v578 = vsel %vm570, %v500, 0
        %v581 = vsel %vm570, %v501, 0
        %v584 = vsel %vm570, %v502, 0
        %v587 = vsel %vm570, %v503, 0
        %v590 = vsel %vm570, %v504, 0
        %v593 = vsel %vm570, %v505, 0
        %v596 = vsel %vm570, %v506, 0
        %v599 = vsel %vm570, %v507, 0
        %v602 = vsel %vm570, %v508, 0
        %v605 = vsel %vm570, %v509, 0
        %v608 = vsel %vm570, %v510, 0
        %v611 = vsel %vm570, %v511, 0
        %v614 = vsel %vm570, %v512, 0
        %v617 = vsel %vm570, %v513, 0
        %v620 = vsel %vm570, %v514, 0
        %v623 = vsel %vm570, %v515, 0
        %v626 = vsel %vm570, %v516, 0
        %v629 = vsel %vm570, %v517, 0
        %v632 = vsel %vm570, %v518, 0
        %v635 = vsel %vm570, %v519, 0
        %v638 = vsel %vm570, %v520, 0
        %v641 = vsel %vm570, %v521, 0
        %v644 = vsel %vm570, %v522, 0
        %v647 = vsel %vm570, %v523, 0
        %v650 = vsel %vm570, %v524, 0
        %v653 = vsel %vm570, %v525, 0
        %v656 = vsel %vm570, %v526, 0
        %v659 = vsel %vm570, %v527, 0
        %v662 = vsel %vm570, %v528, 0
        %v665 = vsel %vm570, %v529, 0
        %667 = vmatprep.subr.bf16.mxu0 %v555
        %668 = vmatpush1.bf16.msra.mxu0 %v554
        %669 = vmatprep.subr.bf16.mxu0 %v557
        %670 = vmatpush1.bf16.msra.mxu0 %v556
        %671 = vmatprep.subr.bf16.mxu0 %v559
        %672 = vmatpush1.bf16.msra.mxu0 %v558
        %673 = vmatprep.subr.bf16.mxu0 %v561
        %674 = vmatpush1.bf16.msra.mxu0 %v560
        %675 = vmatprep.subr.bf16.mxu0 0
        %676 = vmatpush1.bf16.msra.mxu0 0
        %677 = vmatprep.subr.bf16.mxu0 0
        %678 = vmatpush1.bf16.msra.mxu0 0
        %679 = vmatprep.subr.bf16.mxu0 0
        %680 = vmatpush1.bf16.msra.mxu0 0
        %681 = vmatprep.subr.bf16.mxu0 0
        %682 = vmatpush1.bf16.msra.mxu0 0
        %683 = vmatprep.subr.bf16.mxu0 0
        %684 = vmatpush1.bf16.msra.mxu0 0
        %685 = vmatprep.subr.bf16.mxu0 0
        %686 = vmatpush1.bf16.msra.mxu0 0
        %687 = vmatprep.subr.bf16.mxu0 0
        %688 = vmatpush1.bf16.msra.mxu0 0
        %689 = vmatprep.subr.bf16.mxu0 0
        %690 = vmatpush1.bf16.msra.mxu0 0
        %691 = vmatprep.subr.bf16.mxu0 0
        %692 = vmatpush1.bf16.msra.mxu0 0
        %693 = vmatprep.subr.bf16.mxu0 0
        %694 = vmatpush1.bf16.msra.mxu0 0
        %695 = vmatprep.subr.bf16.mxu0 0
        %696 = vmatpush1.bf16.msra.mxu0 0
        %697 = vmatprep.subr.bf16.mxu0 0
        %698 = vmatpush1.bf16.msra.mxu0 0
        %699 = vmatprep.mubr.bf16.mxu0 0
        %700 = vmatmul.mubr.bf16.gmra.mrb[0].mxu0 %v572
        %v701 = vpop.f32.mrb[0].mxu0
        %v702 = vadd.f32 0.0, %v701
        %v703 = vpop.f32.mrb[0].mxu0
        %v704 = vadd.f32 0.0, %v703
        %v705 = vpop.f32.mrb[0].mxu0
        %v706 = vadd.f32 0.0, %v705
        %v707 = vpop.f32.mrb[0].mxu0
        %v708 = vadd.f32 0.0, %v707
        %709 = vmatprep.mubr.bf16.mxu0 0
        %710 = vmatmul.mubr.bf16.gmra.mrb[0].mxu0 %v575
        %v711 = vpop.f32.mrb[0].mxu0
        %v712 = vadd.f32 0.0, %v711
        %v713 = vpop.f32.mrb[0].mxu0
        %v714 = vadd.f32 0.0, %v713
        %v715 = vpop.f32.mrb[0].mxu0
        %v716 = vadd.f32 0.0, %v715
        %v717 = vpop.f32.mrb[0].mxu0
        %v718 = vadd.f32 0.0, %v717
        %719 = vmatprep.mubr.bf16.mxu0 0
        %720 = vmatmul.mubr.bf16.gmra.mrb[0].mxu0 %v578
        %v721 = vpop.f32.mrb[0].mxu0
        %v722 = vadd.f32 0.0, %v721
        %v723 = vpop.f32.mrb[0].mxu0
        %v724 = vadd.f32 0.0, %v723
        %v725 = vpop.f32.mrb[0].mxu0
        %v726 = vadd.f32 0.0, %v725
        %v727 = vpop.f32.mrb[0].mxu0
        %v728 = vadd.f32 0.0, %v727
        %729 = vmatprep.mubr.bf16.mxu0 0
        %730 = vmatmul.mubr.bf16.gmra.mrb[0].mxu0 %v581
        %v731 = vpop.f32.mrb[0].mxu0
        %v732 = vadd.f32 0.0, %v731
        %v733 = vpop.f32.mrb[0].mxu0
        %v734 = vadd.f32 0.0, %v733
        %v735 = vpop.f32.mrb[0].mxu0
        %v736 = vadd.f32 0.0, %v735
        %v737 = vpop.f32.mrb[0].mxu0
        %v738 = vadd.f32 0.0, %v737
        %739 = vmatprep.mubr.bf16.mxu0 0
        %740 = vmatmul.mubr.bf16.gmra.mrb[0].mxu0 %v584
        %v741 = vpop.f32.mrb[0].mxu0
        %v742 = vadd.f32 0.0, %v741
        %v743 = vpop.f32.mrb[0].mxu0
        %v744 = vadd.f32 0.0, %v743
        %v745 = vpop.f32.mrb[0].mxu0
        %v746 = vadd.f32 0.0, %v745
        %v747 = vpop.f32.mrb[0].mxu0
        %v748 = vadd.f32 0.0, %v747
        %749 = vmatprep.mubr.bf16.mxu0 0
        %750 = vmatmul.mubr.bf16.gmra.mrb[0].mxu0 %v587
        %v751 = vpop.f32.mrb[0].mxu0
        %v752 = vadd.f32 0.0, %v751
        %v753 = vpop.f32.mrb[0].mxu0
        %v754 = vadd.f32 0.0, %v753
        %v755 = vpop.f32.mrb[0].mxu0
        %v756 = vadd.f32 0.0, %v755
        %v757 = vpop.f32.mrb[0].mxu0
        %v758 = vadd.f32 0.0, %v757
        %759 = vmatprep.mubr.bf16.mxu0 0
        %760 = vmatmul.mubr.bf16.gmra.mrb[0].mxu0 %v590
        %v761 = vpop.f32.mrb[0].mxu0
        %v762 = vadd.f32 0.0, %v761
        %v763 = vpop.f32.mrb[0].mxu0
        %v764 = vadd.f32 0.0, %v763
        %v765 = vpop.f32.mrb[0].mxu0
        %v766 = vadd.f32 0.0, %v765
        %v767 = vpop.f32.mrb[0].mxu0
        %v768 = vadd.f32 0.0, %v767
        %769 = vmatprep.mubr.bf16.mxu0 0
        %770 = vmatmul.mubr.bf16.gmra.mrb[0].mxu0 %v593
        %v771 = vpop.f32.mrb[0].mxu0
        %v772 = vadd.f32 0.0, %v771
        %v773 = vpop.f32.mrb[0].mxu0
        %v774 = vadd.f32 0.0, %v773
        %v775 = vpop.f32.mrb[0].mxu0
        %v776 = vadd.f32 0.0, %v775
        %v777 = vpop.f32.mrb[0].mxu0
        %v778 = vadd.f32 0.0, %v777
        %779 = vmatprep.mubr.bf16.mxu0 0
        %780 = vmatmul.mubr.bf16.gmra.mrb[0].mxu0 %v596
        %v781 = vpop.f32.mrb[0].mxu0
        %v782 = vadd.f32 0.0, %v781
        %v783 = vpop.f32.mrb[0].mxu0
        %v784 = vadd.f32 0.0, %v783
        %v785 = vpop.f32.mrb[0].mxu0
        %v786 = vadd.f32 0.0, %v785
        %v787 = vpop.f32.mrb[0].mxu0
        %v788 = vadd.f32 0.0, %v787
        %789 = vmatprep.mubr.bf16.mxu0 0
        %790 = vmatmul.mubr.bf16.gmra.mrb[0].mxu0 %v599
        %v791 = vpop.f32.mrb[0].mxu0
        %v792 = vadd.f32 0.0, %v791
        %v793 = vpop.f32.mrb[0].mxu0
        %v794 = vadd.f32 0.0, %v793
        %v795 = vpop.f32.mrb[0].mxu0
        %v796 = vadd.f32 0.0, %v795
        %v797 = vpop.f32.mrb[0].mxu0
        %v798 = vadd.f32 0.0, %v797
        %799 = vmatprep.mubr.bf16.mxu0 0
        %800 = vmatmul.mubr.bf16.gmra.mrb[0].mxu0 %v602
        %v801 = vpop.f32.mrb[0].mxu0
        %v802 = vadd.f32 0.0, %v801
        %v803 = vpop.f32.mrb[0].mxu0
        %v804 = vadd.f32 0.0, %v803
        %v805 = vpop.f32.mrb[0].mxu0
        %v806 = vadd.f32 0.0, %v805
        %v807 = vpop.f32.mrb[0].mxu0
        %v808 = vadd.f32 0.0, %v807
        %809 = vmatprep.mubr.bf16.mxu0 0
        %810 = vmatmul.mubr.bf16.gmra.mrb[0].mxu0 %v605
        %v811 = vpop.f32.mrb[0].mxu0
        %v812 = vadd.f32 0.0, %v811
        %v813 = vpop.f32.mrb[0].mxu0
        %v814 = vadd.f32 0.0, %v813
        %v815 = vpop.f32.mrb[0].mxu0
        %v816 = vadd.f32 0.0, %v815
        %v817 = vpop.f32.mrb[0].mxu0
        %v818 = vadd.f32 0.0, %v817
        %819 = vmatprep.mubr.bf16.mxu0 0
        %820 = vmatmul.mubr.bf16.gmra.mrb[0].mxu0 %v608
        %v821 = vpop.f32.mrb[0].mxu0
        %v822 = vadd.f32 0.0, %v821
        %v823 = vpop.f32.mrb[0].mxu0
        %v824 = vadd.f32 0.0, %v823
        %v825 = vpop.f32.mrb[0].mxu0
        %v826 = vadd.f32 0.0, %v825
        %v827 = vpop.f32.mrb[0].mxu0
        %v828 = vadd.f32 0.0, %v827
        %829 = vmatprep.mubr.bf16.mxu0 0
        %830 = vmatmul.mubr.bf16.gmra.mrb[0].mxu0 %v611
        %v831 = vpop.f32.mrb[0].mxu0
        %v832 = vadd.f32 0.0, %v831
        %v833 = vpop.f32.mrb[0].mxu0
        %v834 = vadd.f32 0.0, %v833
        %v835 = vpop.f32.mrb[0].mxu0
        %v836 = vadd.f32 0.0, %v835
        %v837 = vpop.f32.mrb[0].mxu0
        %v838 = vadd.f32 0.0, %v837
        %839 = vmatprep.mubr.bf16.mxu0 0
        %840 = vmatmul.mubr.bf16.gmra.mrb[0].mxu0 %v614
        %v841 = vpop.f32.mrb[0].mxu0
        %v842 = vadd.f32 0.0, %v841
        %v843 = vpop.f32.mrb[0].mxu0
        %v844 = vadd.f32 0.0, %v843
        %v845 = vpop.f32.mrb[0].mxu0
        %v846 = vadd.f32 0.0, %v845
        %v847 = vpop.f32.mrb[0].mxu0
        %v848 = vadd.f32 0.0, %v847
        %849 = vmatprep.mubr.bf16.mxu0 0
        %850 = vmatmul.mubr.bf16.gmra.mrb[0].mxu0 %v617
        %v851 = vpop.f32.mrb[0].mxu0
        %v852 = vadd.f32 0.0, %v851
        %v853 = vpop.f32.mrb[0].mxu0
        %v854 = vadd.f32 0.0, %v853
        %v855 = vpop.f32.mrb[0].mxu0
        %v856 = vadd.f32 0.0, %v855
        %v857 = vpop.f32.mrb[0].mxu0
        %v858 = vadd.f32 0.0, %v857
        %859 = vmatprep.mubr.bf16.mxu0 0
        %860 = vmatmul.mubr.bf16.gmra.mrb[0].mxu0 %v620
        %v861 = vpop.f32.mrb[0].mxu0
        %v862 = vadd.f32 0.0, %v861
        %v863 = vpop.f32.mrb[0].mxu0
        %v864 = vadd.f32 0.0, %v863
        %v865 = vpop.f32.mrb[0].mxu0
        %v866 = vadd.f32 0.0, %v865
        %v867 = vpop.f32.mrb[0].mxu0
        %v868 = vadd.f32 0.0, %v867
        %869 = vmatprep.mubr.bf16.mxu0 0
        %870 = vmatmul.mubr.bf16.gmra.mrb[0].mxu0 %v623
        %v871 = vpop.f32.mrb[0].mxu0
        %v872 = vadd.f32 0.0, %v871
        %v873 = vpop.f32.mrb[0].mxu0
        %v874 = vadd.f32 0.0, %v873
        %v875 = vpop.f32.mrb[0].mxu0
        %v876 = vadd.f32 0.0, %v875
        %v877 = vpop.f32.mrb[0].mxu0
        %v878 = vadd.f32 0.0, %v877
        %879 = vmatprep.mubr.bf16.mxu0 0
        %880 = vmatmul.mubr.bf16.gmra.mrb[0].mxu0 %v626
        %v881 = vpop.f32.mrb[0].mxu0
        %v882 = vadd.f32 0.0, %v881
        %v883 = vpop.f32.mrb[0].mxu0
        %v884 = vadd.f32 0.0, %v883
        %v885 = vpop.f32.mrb[0].mxu0
        %v886 = vadd.f32 0.0, %v885
        %v887 = vpop.f32.mrb[0].mxu0
        %v888 = vadd.f32 0.0, %v887
        %889 = vmatprep.mubr.bf16.mxu0 0
        %890 = vmatmul.mubr.bf16.gmra.mrb[0].mxu0 %v629
        %v891 = vpop.f32.mrb[0].mxu0
        %v892 = vadd.f32 0.0, %v891
        %v893 = vpop.f32.mrb[0].mxu0
        %v894 = vadd.f32 0.0, %v893
        %v895 = vpop.f32.mrb[0].mxu0
        %v896 = vadd.f32 0.0, %v895
        %v897 = vpop.f32.mrb[0].mxu0
        %v898 = vadd.f32 0.0, %v897
        %899 = vmatprep.mubr.bf16.mxu0 0
        %900 = vmatmul.mubr.bf16.gmra.mrb[0].mxu0 %v632
        %v901 = vpop.f32.mrb[0].mxu0
        %v902 = vadd.f32 0.0, %v901
        %v903 = vpop.f32.mrb[0].mxu0
        %v904 = vadd.f32 0.0, %v903
        %v905 = vpop.f32.mrb[0].mxu0
        %v906 = vadd.f32 0.0, %v905
        %v907 = vpop.f32.mrb[0].mxu0
        %v908 = vadd.f32 0.0, %v907
        %909 = vmatprep.mubr.bf16.mxu0 0
        %910 = vmatmul.mubr.bf16.gmra.mrb[0].mxu0 %v635
        %v911 = vpop.f32.mrb[0].mxu0
        %v912 = vadd.f32 0.0, %v911
        %v913 = vpop.f32.mrb[0].mxu0
        %v914 = vadd.f32 0.0, %v913
        %v915 = vpop.f32.mrb[0].mxu0
        %v916 = vadd.f32 0.0, %v915
        %v917 = vpop.f32.mrb[0].mxu0
        %v918 = vadd.f32 0.0, %v917
        %919 = vmatprep.mubr.bf16.mxu0 0
        %920 = vmatmul.mubr.bf16.gmra.mrb[0].mxu0 %v638
        %v921 = vpop.f32.mrb[0].mxu0
        %v922 = vadd.f32 0.0, %v921
        %v923 = vpop.f32.mrb[0].mxu0
        %v924 = vadd.f32 0.0, %v923
        %v925 = vpop.f32.mrb[0].mxu0
        %v926 = vadd.f32 0.0, %v925
        %v927 = vpop.f32.mrb[0].mxu0
        %v928 = vadd.f32 0.0, %v927
        %929 = vmatprep.mubr.bf16.mxu0 0
        %930 = vmatmul.mubr.bf16.gmra.mrb[0].mxu0 %v641
        %v931 = vpop.f32.mrb[0].mxu0
        %v932 = vadd.f32 0.0, %v931
        %v933 = vpop.f32.mrb[0].mxu0
        %v934 = vadd.f32 0.0, %v933
        %v935 = vpop.f32.mrb[0].mxu0
        %v936 = vadd.f32 0.0, %v935
        %v937 = vpop.f32.mrb[0].mxu0
        %v938 = vadd.f32 0.0, %v937
        %939 = vmatprep.mubr.bf16.mxu0 0
        %940 = vmatmul.mubr.bf16.gmra.mrb[0].mxu0 %v644
        %v941 = vpop.f32.mrb[0].mxu0
        %v942 = vadd.f32 0.0, %v941
        %v943 = vpop.f32.mrb[0].mxu0
        %v944 = vadd.f32 0.0, %v943
        %v945 = vpop.f32.mrb[0].mxu0
        %v946 = vadd.f32 0.0, %v945
        %v947 = vpop.f32.mrb[0].mxu0
        %v948 = vadd.f32 0.0, %v947
        %949 = vmatprep.mubr.bf16.mxu0 0
        %950 = vmatmul.mubr.bf16.gmra.mrb[0].mxu0 %v647
        %v951 = vpop.f32.mrb[0].mxu0
        %v952 = vadd.f32 0.0, %v951
        %v953 = vpop.f32.mrb[0].mxu0
        %v954 = vadd.f32 0.0, %v953
        %v955 = vpop.f32.mrb[0].mxu0
        %v956 = vadd.f32 0.0, %v955
        %v957 = vpop.f32.mrb[0].mxu0
        %v958 = vadd.f32 0.0, %v957
        %959 = vmatprep.mubr.bf16.mxu0 0
        %960 = vmatmul.mubr.bf16.gmra.mrb[0].mxu0 %v650
        %v961 = vpop.f32.mrb[0].mxu0
        %v962 = vadd.f32 0.0, %v961
        %v963 = vpop.f32.mrb[0].mxu0
        %v964 = vadd.f32 0.0, %v963
        %v965 = vpop.f32.mrb[0].mxu0
        %v966 = vadd.f32 0.0, %v965
        %v967 = vpop.f32.mrb[0].mxu0
        %v968 = vadd.f32 0.0, %v967
        %969 = vmatprep.mubr.bf16.mxu0 0
        %970 = vmatmul.mubr.bf16.gmra.mrb[0].mxu0 %v653
        %v971 = vpop.f32.mrb[0].mxu0
        %v972 = vadd.f32 0.0, %v971
        %v973 = vpop.f32.mrb[0].mxu0
        %v974 = vadd.f32 0.0, %v973
        %v975 = vpop.f32.mrb[0].mxu0
        %v976 = vadd.f32 0.0, %v975
        %v977 = vpop.f32.mrb[0].mxu0
        %v978 = vadd.f32 0.0, %v977
        %979 = vmatprep.mubr.bf16.mxu0 0
        %980 = vmatmul.mubr.bf16.gmra.mrb[0].mxu0 %v656
        %v981 = vpop.f32.mrb[0].mxu0
        %v982 = vadd.f32 0.0, %v981
        %v983 = vpop.f32.mrb[0].mxu0
        %v984 = vadd.f32 0.0, %v983
        %v985 = vpop.f32.mrb[0].mxu0
        %v986 = vadd.f32 0.0, %v985
        %v987 = vpop.f32.mrb[0].mxu0
        %v988 = vadd.f32 0.0, %v987
        %989 = vmatprep.mubr.bf16.mxu0 0
        %990 = vmatmul.mubr.bf16.gmra.mrb[0].mxu0 %v659
        %v991 = vpop.f32.mrb[0].mxu0
        %v992 = vadd.f32 0.0, %v991
        %v993 = vpop.f32.mrb[0].mxu0
        %v994 = vadd.f32 0.0, %v993
        %v995 = vpop.f32.mrb[0].mxu0
        %v996 = vadd.f32 0.0, %v995
        %v997 = vpop.f32.mrb[0].mxu0
        %v998 = vadd.f32 0.0, %v997
        %999 = vmatprep.mubr.bf16.mxu0 0
        %1000 = vmatmul.mubr.bf16.gmra.mrb[0].mxu0 %v662
        %v1001 = vpop.f32.mrb[0].mxu0
        %v1002 = vadd.f32 0.0, %v1001
        %v1003 = vpop.f32.mrb[0].mxu0
        %v1004 = vadd.f32 0.0, %v1003
        %v1005 = vpop.f32.mrb[0].mxu0
        %v1006 = vadd.f32 0.0, %v1005
        %v1007 = vpop.f32.mrb[0].mxu0
        %v1008 = vadd.f32 0.0, %v1007
        %1009 = vmatprep.mubr.bf16.mxu0 0
        %1010 = vmatmul.mubr.bf16.gmra.mrb[0].mxu0 %v665
        %v1011 = vpop.f32.mrb[0].mxu0
        %v1012 = vadd.f32 0.0, %v1011
        %v1013 = vpop.f32.mrb[0].mxu0
        %v1014 = vadd.f32 0.0, %v1013
        %v1015 = vpop.f32.mrb[0].mxu0
        %v1016 = vadd.f32 0.0, %v1015
        %v1017 = vpop.f32.mrb[0].mxu0
        %v1018 = vadd.f32 0.0, %v1017
        %1019 = vdwg.mxu0
        %v1020 = vld [vmem:[%s281] sm:$0xff]
        %v1021 = vld [vmem:[%s281 + $0x8] sm:$0xff]
        %v1022 = vld [vmem:[%s281 + $0x10] sm:$0xff]
        %v1023 = vld [vmem:[%s281 + $0x18] sm:$0xff]
        %v1024 = vld [vmem:[%s281 + $0x20] sm:$0xff]
        %v1025 = vld [vmem:[%s281 + $0x28] sm:$0xff]
        %v1026 = vld [vmem:[%s281 + $0x30] sm:$0xff]
        %v1027 = vld [vmem:[%s281 + $0x38] sm:$0xff]
        %v1028 = vpack.c.bf16 %v1021, %v1020
        %v1029 = vpack.c.bf16 %v1023, %v1022
        %v1030 = vpack.c.bf16 %v1025, %v1024
        %v1031 = vpack.c.bf16 %v1027, %v1026
        %v1032 = vunpack.c.l.bf16 %v1028
        %v1033 = vunpack.c.h.bf16 %v1028
        %v1034 = vunpack.c.l.bf16 %v1029
        %v1035 = vunpack.c.h.bf16 %v1029
        %v1036 = vunpack.c.l.bf16 %v1030
        %v1037 = vunpack.c.h.bf16 %v1030
        %v1038 = vunpack.c.l.bf16 %v1031
        %v1039 = vunpack.c.h.bf16 %v1031
        %v1040 = vsub.f32 %v1020, %v1032
        %v1041 = vsub.f32 %v1021, %v1033
        %v1042 = vsub.f32 %v1022, %v1034
        %v1043 = vsub.f32 %v1023, %v1035
        %v1044 = vsub.f32 %v1024, %v1036
        %v1045 = vsub.f32 %v1025, %v1037
        %v1046 = vsub.f32 %v1026, %v1038
        %v1047 = vsub.f32 %v1027, %v1039
        %v1048 = vpack.c.bf16 %v1041, %v1040
        %v1049 = vpack.c.bf16 %v1043, %v1042
        %v1050 = vpack.c.bf16 %v1045, %v1044
        %v1051 = vpack.c.bf16 %v1047, %v1046
        %v1052 = vld [vmem:[%s2] sm:$0xff]
        %v1053 = vld [vmem:[%s2 + $0x8] sm:$0xff]
        %v1056 = vunpack.c.l.b16 %v1052
        %v1057 = vunpack.c.h.b16 %v1052
        %v1058 = vunpack.c.l.b16 %v1053
        %v1059 = vunpack.c.h.b16 %v1053
        %v1060 = vpack.c.b16 %v1058, %v1056
        %v1061 = vpack.c.b16 %v1059, %v1057
        %vm1064 = vcmask 130048
        %v1066 = vsel %vm1064, %v1048, 0
        %v1069 = vsel %vm1064, %v1049, 0
        %v1072 = vsel %vm1064, %v1050, 0
        %v1075 = vsel %vm1064, %v1051, 0
        %1077 = vmatprep.subr.bf16.mxu0 %v1061
        %1078 = vmatpush1.bf16.msra.mxu0 %v1060
        %1079 = vmatprep.subr.bf16.mxu0 0
        %1080 = vmatpush1.bf16.msra.mxu0 0
        %1081 = vmatprep.subr.bf16.mxu0 0
        %1082 = vmatpush1.bf16.msra.mxu0 0
        %1083 = vmatprep.subr.bf16.mxu0 0
        %1084 = vmatpush1.bf16.msra.mxu0 0
        %1085 = vmatprep.subr.bf16.mxu0 0
        %1086 = vmatpush1.bf16.msra.mxu0 0
        %1087 = vmatprep.subr.bf16.mxu0 0
        %1088 = vmatpush1.bf16.msra.mxu0 0
        %1089 = vmatprep.subr.bf16.mxu0 0
        %1090 = vmatpush1.bf16.msra.mxu0 0
        %1091 = vmatprep.subr.bf16.mxu0 0
        %1092 = vmatpush1.bf16.msra.mxu0 0
        %1093 = vmatprep.subr.bf16.mxu0 0
        %1094 = vmatpush1.bf16.msra.mxu0 0
        %1095 = vmatprep.subr.bf16.mxu0 0
        %1096 = vmatpush1.bf16.msra.mxu0 0
        %1097 = vmatprep.subr.bf16.mxu0 0
        %1098 = vmatpush1.bf16.msra.mxu0 0
        %1099 = vmatprep.subr.bf16.mxu0 0
        %1100 = vmatpush1.bf16.msra.mxu0 0
        %1101 = vmatprep.subr.bf16.mxu0 0
        %1102 = vmatpush1.bf16.msra.mxu0 0
        %1103 = vmatprep.subr.bf16.mxu0 0
        %1104 = vmatpush1.bf16.msra.mxu0 0
        %1105 = vmatprep.subr.bf16.mxu0 0
        %1106 = vmatpush1.bf16.msra.mxu0 0
        %1107 = vmatprep.subr.bf16.mxu0 0
        %1108 = vmatpush1.bf16.msra.mxu0 0
        %1109 = vmatprep.mubr.bf16.mxu0 0
        %1110 = vmatmul.mubr.bf16.gmra.mrb[0].mxu0 %v1066
        %v1111 = vpop.f32.mrb[0].mxu0
        %v1112 = vadd.f32 0.0, %v1111
        %v1113 = vpop.f32.mrb[0].mxu0
        %v1114 = vadd.f32 0.0, %v1113
        %v1115 = vpop.f32.mrb[0].mxu0
        %v1116 = vadd.f32 0.0, %v1115
        %v1117 = vpop.f32.mrb[0].mxu0
        %v1118 = vadd.f32 0.0, %v1117
        %1119 = vmatprep.mubr.bf16.mxu0 0
        %1120 = vmatmul.mubr.bf16.gmra.mrb[0].mxu0 %v1069
        %v1121 = vpop.f32.mrb[0].mxu0
        %v1122 = vadd.f32 0.0, %v1121
        %v1123 = vpop.f32.mrb[0].mxu0
        %v1124 = vadd.f32 0.0, %v1123
        %v1125 = vpop.f32.mrb[0].mxu0
        %v1126 = vadd.f32 0.0, %v1125
        %v1127 = vpop.f32.mrb[0].mxu0
        %v1128 = vadd.f32 0.0, %v1127
        %1129 = vmatprep.mubr.bf16.mxu0 0
        %1130 = vmatmul.mubr.bf16.gmra.mrb[0].mxu0 %v1072
        %v1131 = vpop.f32.mrb[0].mxu0
        %v1132 = vadd.f32 0.0, %v1131
        %v1133 = vpop.f32.mrb[0].mxu0
        %v1134 = vadd.f32 0.0, %v1133
        %v1135 = vpop.f32.mrb[0].mxu0
        %v1136 = vadd.f32 0.0, %v1135
        %v1137 = vpop.f32.mrb[0].mxu0
        %v1138 = vadd.f32 0.0, %v1137
        %1139 = vmatprep.mubr.bf16.mxu0 0
        %1140 = vmatmul.mubr.bf16.gmra.mrb[0].mxu0 %v1075
        %v1141 = vpop.f32.mrb[0].mxu0
        %v1142 = vadd.f32 0.0, %v1141
        %v1143 = vpop.f32.mrb[0].mxu0
        %v1144 = vadd.f32 0.0, %v1143
        %v1145 = vpop.f32.mrb[0].mxu0
        %v1146 = vadd.f32 0.0, %v1145
        %v1147 = vpop.f32.mrb[0].mxu0
        %v1148 = vadd.f32 0.0, %v1147
        %1149 = vdwg.mxu0
        %v1151 = vsel %vm1064, %v1028, 0
        %v1154 = vsel %vm1064, %v1029, 0
        %v1157 = vsel %vm1064, %v1030, 0
        %v1160 = vsel %vm1064, %v1031, 0
        %1162 = vmatprep.subr.bf16.mxu0 %v1061
        %1163 = vmatpush1.bf16.msra.mxu0 %v1060
        %1164 = vmatprep.subr.bf16.mxu0 0
        %1165 = vmatpush1.bf16.msra.mxu0 0
        %1166 = vmatprep.subr.bf16.mxu0 0
        %1167 = vmatpush1.bf16.msra.mxu0 0
        %1168 = vmatprep.subr.bf16.mxu0 0
        %1169 = vmatpush1.bf16.msra.mxu0 0
        %1170 = vmatprep.subr.bf16.mxu0 0
        %1171 = vmatpush1.bf16.msra.mxu0 0
        %1172 = vmatprep.subr.bf16.mxu0 0
        %1173 = vmatpush1.bf16.msra.mxu0 0
        %1174 = vmatprep.subr.bf16.mxu0 0
        %1175 = vmatpush1.bf16.msra.mxu0 0
        %1176 = vmatprep.subr.bf16.mxu0 0
        %1177 = vmatpush1.bf16.msra.mxu0 0
        %1178 = vmatprep.subr.bf16.mxu0 0
        %1179 = vmatpush1.bf16.msra.mxu0 0
        %1180 = vmatprep.subr.bf16.mxu0 0
        %1181 = vmatpush1.bf16.msra.mxu0 0
        %1182 = vmatprep.subr.bf16.mxu0 0
        %1183 = vmatpush1.bf16.msra.mxu0 0
        %1184 = vmatprep.subr.bf16.mxu0 0
        %1185 = vmatpush1.bf16.msra.mxu0 0
        %1186 = vmatprep.subr.bf16.mxu0 0
        %1187 = vmatpush1.bf16.msra.mxu0 0
        %1188 = vmatprep.subr.bf16.mxu0 0
        %1189 = vmatpush1.bf16.msra.mxu0 0
        %1190 = vmatprep.subr.bf16.mxu0 0
        %1191 = vmatpush1.bf16.msra.mxu0 0
        %1192 = vmatprep.subr.bf16.mxu0 0
        %1193 = vmatpush1.bf16.msra.mxu0 0
        %1194 = vmatprep.mubr.bf16.mxu0 0
        %1195 = vmatmul.mubr.bf16.gmra.mrb[0].mxu0 %v1151
        %v1196 = vpop.f32.mrb[0].mxu0
        %v1197 = vadd.f32 %v1112, %v1196
        %v1198 = vpop.f32.mrb[0].mxu0
        %v1199 = vadd.f32 %v1114, %v1198
        %v1200 = vpop.f32.mrb[0].mxu0
        %v1201 = vadd.f32 %v1116, %v1200
        %v1202 = vpop.f32.mrb[0].mxu0
        %v1203 = vadd.f32 %v1118, %v1202
        %1204 = vmatprep.mubr.bf16.mxu0 0
        %1205 = vmatmul.mubr.bf16.gmra.mrb[0].mxu0 %v1154
        %v1206 = vpop.f32.mrb[0].mxu0
        %v1207 = vadd.f32 %v1122, %v1206
        %v1208 = vpop.f32.mrb[0].mxu0
        %v1209 = vadd.f32 %v1124, %v1208
        %v1210 = vpop.f32.mrb[0].mxu0
        %v1211 = vadd.f32 %v1126, %v1210
        %v1212 = vpop.f32.mrb[0].mxu0
        %v1213 = vadd.f32 %v1128, %v1212
        %1214 = vmatprep.mubr.bf16.mxu0 0
        %1215 = vmatmul.mubr.bf16.gmra.mrb[0].mxu0 %v1157
        %v1216 = vpop.f32.mrb[0].mxu0
        %v1217 = vadd.f32 %v1132, %v1216
        %v1218 = vpop.f32.mrb[0].mxu0
        %v1219 = vadd.f32 %v1134, %v1218
        %v1220 = vpop.f32.mrb[0].mxu0
        %v1221 = vadd.f32 %v1136, %v1220
        %v1222 = vpop.f32.mrb[0].mxu0
        %v1223 = vadd.f32 %v1138, %v1222
        %1224 = vmatprep.mubr.bf16.mxu0 0
        %1225 = vmatmul.mubr.bf16.gmra.mrb[0].mxu0 %v1160
        %v1226 = vpop.f32.mrb[0].mxu0
        %v1227 = vadd.f32 %v1142, %v1226
        %v1228 = vpop.f32.mrb[0].mxu0
        %v1229 = vadd.f32 %v1144, %v1228
        %v1230 = vpop.f32.mrb[0].mxu0
        %v1231 = vadd.f32 %v1146, %v1230
        %v1232 = vpop.f32.mrb[0].mxu0
        %v1233 = vadd.f32 %v1148, %v1232
        %1234 = vdwg.mxu0
        %v1235 = vsub.f32 %v702, %v1197
        %v1236 = vsub.f32 %v704, %v1199
        %v1237 = vsub.f32 %v706, %v1201
        %v1238 = vsub.f32 %v708, %v1203
        %v1239 = vsub.f32 %v712, %v1207
        %v1240 = vsub.f32 %v714, %v1209
        %v1241 = vsub.f32 %v716, %v1211
        %v1242 = vsub.f32 %v718, %v1213
        %v1243 = vsub.f32 %v722, %v1217
        %v1244 = vsub.f32 %v724, %v1219
        %v1245 = vsub.f32 %v726, %v1221
        %v1246 = vsub.f32 %v728, %v1223
        %v1247 = vsub.f32 %v732, %v1227
        %v1248 = vsub.f32 %v734, %v1229
        %v1249 = vsub.f32 %v736, %v1231
        %v1250 = vsub.f32 %v738, %v1233
        %v1251 = vsub.f32 %v742, %v1197
        %v1252 = vsub.f32 %v744, %v1199
        %v1253 = vsub.f32 %v746, %v1201
        %v1254 = vsub.f32 %v748, %v1203
        %v1255 = vsub.f32 %v752, %v1207
        %v1256 = vsub.f32 %v754, %v1209
        %v1257 = vsub.f32 %v756, %v1211
        %v1258 = vsub.f32 %v758, %v1213
        %v1259 = vsub.f32 %v762, %v1217
        %v1260 = vsub.f32 %v764, %v1219
        %v1261 = vsub.f32 %v766, %v1221
        %v1262 = vsub.f32 %v768, %v1223
        %v1263 = vsub.f32 %v772, %v1227
        %v1264 = vsub.f32 %v774, %v1229
        %v1265 = vsub.f32 %v776, %v1231
        %v1266 = vsub.f32 %v778, %v1233
        %v1267 = vsub.f32 %v782, %v1197
        %v1268 = vsub.f32 %v784, %v1199
        %v1269 = vsub.f32 %v786, %v1201
        %v1270 = vsub.f32 %v788, %v1203
        %v1271 = vsub.f32 %v792, %v1207
        %v1272 = vsub.f32 %v794, %v1209
        %v1273 = vsub.f32 %v796, %v1211
        %v1274 = vsub.f32 %v798, %v1213
        %v1275 = vsub.f32 %v802, %v1217
        %v1276 = vsub.f32 %v804, %v1219
        %v1277 = vsub.f32 %v806, %v1221
        %v1278 = vsub.f32 %v808, %v1223
        %v1279 = vsub.f32 %v812, %v1227
        %v1280 = vsub.f32 %v814, %v1229
        %v1281 = vsub.f32 %v816, %v1231
        %v1282 = vsub.f32 %v818, %v1233
        %v1283 = vsub.f32 %v822, %v1197
        %v1284 = vsub.f32 %v824, %v1199
        %v1285 = vsub.f32 %v826, %v1201
        %v1286 = vsub.f32 %v828, %v1203
        %v1287 = vsub.f32 %v832, %v1207
        %v1288 = vsub.f32 %v834, %v1209
        %v1289 = vsub.f32 %v836, %v1211
        %v1290 = vsub.f32 %v838, %v1213
        %v1291 = vsub.f32 %v842, %v1217
        %v1292 = vsub.f32 %v844, %v1219
        %v1293 = vsub.f32 %v846, %v1221
        %v1294 = vsub.f32 %v848, %v1223
        %v1295 = vsub.f32 %v852, %v1227
        %v1296 = vsub.f32 %v854, %v1229
        %v1297 = vsub.f32 %v856, %v1231
        %v1298 = vsub.f32 %v858, %v1233
        %v1299 = vsub.f32 %v862, %v1197
        %v1300 = vsub.f32 %v864, %v1199
        %v1301 = vsub.f32 %v866, %v1201
        %v1302 = vsub.f32 %v868, %v1203
        %v1303 = vsub.f32 %v872, %v1207
        %v1304 = vsub.f32 %v874, %v1209
        %v1305 = vsub.f32 %v876, %v1211
        %v1306 = vsub.f32 %v878, %v1213
        %v1307 = vsub.f32 %v882, %v1217
        %v1308 = vsub.f32 %v884, %v1219
        %v1309 = vsub.f32 %v886, %v1221
        %v1310 = vsub.f32 %v888, %v1223
        %v1311 = vsub.f32 %v892, %v1227
        %v1312 = vsub.f32 %v894, %v1229
        %v1313 = vsub.f32 %v896, %v1231
        %v1314 = vsub.f32 %v898, %v1233
        %v1315 = vsub.f32 %v902, %v1197
        %v1316 = vsub.f32 %v904, %v1199
        %v1317 = vsub.f32 %v906, %v1201
        %v1318 = vsub.f32 %v908, %v1203
        %v1319 = vsub.f32 %v912, %v1207
        %v1320 = vsub.f32 %v914, %v1209
        %v1321 = vsub.f32 %v916, %v1211
        %v1322 = vsub.f32 %v918, %v1213
        %v1323 = vsub.f32 %v922, %v1217
        %v1324 = vsub.f32 %v924, %v1219
        %v1325 = vsub.f32 %v926, %v1221
        %v1326 = vsub.f32 %v928, %v1223
        %v1327 = vsub.f32 %v932, %v1227
        %v1328 = vsub.f32 %v934, %v1229
        %v1329 = vsub.f32 %v936, %v1231
        %v1330 = vsub.f32 %v938, %v1233
        %v1331 = vsub.f32 %v942, %v1197
        %v1332 = vsub.f32 %v944, %v1199
        %v1333 = vsub.f32 %v946, %v1201
        %v1334 = vsub.f32 %v948, %v1203
        %v1335 = vsub.f32 %v952, %v1207
        %v1336 = vsub.f32 %v954, %v1209
        %v1337 = vsub.f32 %v956, %v1211
        %v1338 = vsub.f32 %v958, %v1213
        %v1339 = vsub.f32 %v962, %v1217
        %v1340 = vsub.f32 %v964, %v1219
        %v1341 = vsub.f32 %v966, %v1221
        %v1342 = vsub.f32 %v968, %v1223
        %v1343 = vsub.f32 %v972, %v1227
        %v1344 = vsub.f32 %v974, %v1229
        %v1345 = vsub.f32 %v976, %v1231
        %v1346 = vsub.f32 %v978, %v1233
        %v1347 = vsub.f32 %v982, %v1197
        %v1348 = vsub.f32 %v984, %v1199
        %v1349 = vsub.f32 %v986, %v1201
        %v1350 = vsub.f32 %v988, %v1203
        %v1351 = vsub.f32 %v992, %v1207
        %v1352 = vsub.f32 %v994, %v1209
        %v1353 = vsub.f32 %v996, %v1211
        %v1354 = vsub.f32 %v998, %v1213
        %v1355 = vsub.f32 %v1002, %v1217
        %v1356 = vsub.f32 %v1004, %v1219
        %v1357 = vsub.f32 %v1006, %v1221
        %v1358 = vsub.f32 %v1008, %v1223
        %v1359 = vsub.f32 %v1012, %v1227
        %v1360 = vsub.f32 %v1014, %v1229
        %v1361 = vsub.f32 %v1016, %v1231
        %v1362 = vsub.f32 %v1018, %v1233
        %v1363 = vmul.f32 %v1235, %v1235
        %v1364 = vmul.f32 %v1236, %v1236
        %v1365 = vmul.f32 %v1237, %v1237
        %v1366 = vmul.f32 %v1238, %v1238
        %v1367 = vmul.f32 %v1239, %v1239
        %v1368 = vmul.f32 %v1240, %v1240
        %v1369 = vmul.f32 %v1241, %v1241
        %v1370 = vmul.f32 %v1242, %v1242
        %v1371 = vmul.f32 %v1243, %v1243
        %v1372 = vmul.f32 %v1244, %v1244
        %v1373 = vmul.f32 %v1245, %v1245
        %v1374 = vmul.f32 %v1246, %v1246
        %v1375 = vmul.f32 %v1247, %v1247
        %v1376 = vmul.f32 %v1248, %v1248
        %v1377 = vmul.f32 %v1249, %v1249
        %v1378 = vmul.f32 %v1250, %v1250
        %v1379 = vmul.f32 %v1251, %v1251
        %v1380 = vmul.f32 %v1252, %v1252
        %v1381 = vmul.f32 %v1253, %v1253
        %v1382 = vmul.f32 %v1254, %v1254
        %v1383 = vmul.f32 %v1255, %v1255
        %v1384 = vmul.f32 %v1256, %v1256
        %v1385 = vmul.f32 %v1257, %v1257
        %v1386 = vmul.f32 %v1258, %v1258
        %v1387 = vmul.f32 %v1259, %v1259
        %v1388 = vmul.f32 %v1260, %v1260
        %v1389 = vmul.f32 %v1261, %v1261
        %v1390 = vmul.f32 %v1262, %v1262
        %v1391 = vmul.f32 %v1263, %v1263
        %v1392 = vmul.f32 %v1264, %v1264
        %v1393 = vmul.f32 %v1265, %v1265
        %v1394 = vmul.f32 %v1266, %v1266
        %v1395 = vmul.f32 %v1267, %v1267
        %v1396 = vmul.f32 %v1268, %v1268
        %v1397 = vmul.f32 %v1269, %v1269
        %v1398 = vmul.f32 %v1270, %v1270
        %v1399 = vmul.f32 %v1271, %v1271
        %v1400 = vmul.f32 %v1272, %v1272
        %v1401 = vmul.f32 %v1273, %v1273
        %v1402 = vmul.f32 %v1274, %v1274
        %v1403 = vmul.f32 %v1275, %v1275
        %v1404 = vmul.f32 %v1276, %v1276
        %v1405 = vmul.f32 %v1277, %v1277
        %v1406 = vmul.f32 %v1278, %v1278
        %v1407 = vmul.f32 %v1279, %v1279
        %v1408 = vmul.f32 %v1280, %v1280
        %v1409 = vmul.f32 %v1281, %v1281
        %v1410 = vmul.f32 %v1282, %v1282
        %v1411 = vmul.f32 %v1283, %v1283
        %v1412 = vmul.f32 %v1284, %v1284
        %v1413 = vmul.f32 %v1285, %v1285
        %v1414 = vmul.f32 %v1286, %v1286
        %v1415 = vmul.f32 %v1287, %v1287
        %v1416 = vmul.f32 %v1288, %v1288
        %v1417 = vmul.f32 %v1289, %v1289
        %v1418 = vmul.f32 %v1290, %v1290
        %v1419 = vmul.f32 %v1291, %v1291
        %v1420 = vmul.f32 %v1292, %v1292
        %v1421 = vmul.f32 %v1293, %v1293
        %v1422 = vmul.f32 %v1294, %v1294
        %v1423 = vmul.f32 %v1295, %v1295
        %v1424 = vmul.f32 %v1296, %v1296
        %v1425 = vmul.f32 %v1297, %v1297
        %v1426 = vmul.f32 %v1298, %v1298
        %v1427 = vmul.f32 %v1299, %v1299
        %v1428 = vmul.f32 %v1300, %v1300
        %v1429 = vmul.f32 %v1301, %v1301
        %v1430 = vmul.f32 %v1302, %v1302
        %v1431 = vmul.f32 %v1303, %v1303
        %v1432 = vmul.f32 %v1304, %v1304
        %v1433 = vmul.f32 %v1305, %v1305
        %v1434 = vmul.f32 %v1306, %v1306
        %v1435 = vmul.f32 %v1307, %v1307
        %v1436 = vmul.f32 %v1308, %v1308
        %v1437 = vmul.f32 %v1309, %v1309
        %v1438 = vmul.f32 %v1310, %v1310
        %v1439 = vmul.f32 %v1311, %v1311
        %v1440 = vmul.f32 %v1312, %v1312
        %v1441 = vmul.f32 %v1313, %v1313
        %v1442 = vmul.f32 %v1314, %v1314
        %v1443 = vmul.f32 %v1315, %v1315
        %v1444 = vmul.f32 %v1316, %v1316
        %v1445 = vmul.f32 %v1317, %v1317
        %v1446 = vmul.f32 %v1318, %v1318
        %v1447 = vmul.f32 %v1319, %v1319
        %v1448 = vmul.f32 %v1320, %v1320
        %v1449 = vmul.f32 %v1321, %v1321
        %v1450 = vmul.f32 %v1322, %v1322
        %v1451 = vmul.f32 %v1323, %v1323
        %v1452 = vmul.f32 %v1324, %v1324
        %v1453 = vmul.f32 %v1325, %v1325
        %v1454 = vmul.f32 %v1326, %v1326
        %v1455 = vmul.f32 %v1327, %v1327
        %v1456 = vmul.f32 %v1328, %v1328
        %v1457 = vmul.f32 %v1329, %v1329
        %v1458 = vmul.f32 %v1330, %v1330
        %v1459 = vmul.f32 %v1331, %v1331
        %v1460 = vmul.f32 %v1332, %v1332
        %v1461 = vmul.f32 %v1333, %v1333
        %v1462 = vmul.f32 %v1334, %v1334
        %v1463 = vmul.f32 %v1335, %v1335
        %v1464 = vmul.f32 %v1336, %v1336
        %v1465 = vmul.f32 %v1337, %v1337
        %v1466 = vmul.f32 %v1338, %v1338
        %v1467 = vmul.f32 %v1339, %v1339
        %v1468 = vmul.f32 %v1340, %v1340
        %v1469 = vmul.f32 %v1341, %v1341
        %v1470 = vmul.f32 %v1342, %v1342
        %v1471 = vmul.f32 %v1343, %v1343
        %v1472 = vmul.f32 %v1344, %v1344
        %v1473 = vmul.f32 %v1345, %v1345
        %v1474 = vmul.f32 %v1346, %v1346
        %v1475 = vmul.f32 %v1347, %v1347
        %v1476 = vmul.f32 %v1348, %v1348
        %v1477 = vmul.f32 %v1349, %v1349
        %v1478 = vmul.f32 %v1350, %v1350
        %v1479 = vmul.f32 %v1351, %v1351
        %v1480 = vmul.f32 %v1352, %v1352
        %v1481 = vmul.f32 %v1353, %v1353
        %v1482 = vmul.f32 %v1354, %v1354
        %v1483 = vmul.f32 %v1355, %v1355
        %v1484 = vmul.f32 %v1356, %v1356
        %v1485 = vmul.f32 %v1357, %v1357
        %v1486 = vmul.f32 %v1358, %v1358
        %v1487 = vmul.f32 %v1359, %v1359
        %v1488 = vmul.f32 %v1360, %v1360
        %v1489 = vmul.f32 %v1361, %v1361
        %v1490 = vmul.f32 %v1362, %v1362
        %v1491 = vld [vmem:[%s296] sm:$0xff]
        %v1492 = vld [vmem:[%s296 + $0x8] sm:$0xff]
        %v1493 = vld [vmem:[%s296 + $0x10] sm:$0xff]
        %v1494 = vld [vmem:[%s296 + $0x18] sm:$0xff]
        %v1495 = vld [vmem:[%s296 + $0x20] sm:$0xff]
        %v1496 = vld [vmem:[%s296 + $0x28] sm:$0xff]
        %v1497 = vld [vmem:[%s296 + $0x30] sm:$0xff]
        %v1498 = vld [vmem:[%s296 + $0x38] sm:$0xff]
        %v1499 = vld [vmem:[%s296 + $0x40] sm:$0xff]
        %v1500 = vld [vmem:[%s296 + $0x48] sm:$0xff]
        %v1501 = vld [vmem:[%s296 + $0x50] sm:$0xff]
        %v1502 = vld [vmem:[%s296 + $0x58] sm:$0xff]
        %v1503 = vld [vmem:[%s296 + $0x60] sm:$0xff]
        %v1504 = vld [vmem:[%s296 + $0x68] sm:$0xff]
        %v1505 = vld [vmem:[%s296 + $0x70] sm:$0xff]
        %v1506 = vld [vmem:[%s296 + $0x78] sm:$0xff]
        %v1507 = vld [vmem:[%s296 + $0x80] sm:$0xff]
        %v1508 = vld [vmem:[%s296 + $0x88] sm:$0xff]
        %v1509 = vld [vmem:[%s296 + $0x90] sm:$0xff]
        %v1510 = vld [vmem:[%s296 + $0x98] sm:$0xff]
        %v1511 = vld [vmem:[%s296 + $0xa0] sm:$0xff]
        %v1512 = vld [vmem:[%s296 + $0xa8] sm:$0xff]
        %v1513 = vld [vmem:[%s296 + $0xb0] sm:$0xff]
        %v1514 = vld [vmem:[%s296 + $0xb8] sm:$0xff]
        %v1515 = vld [vmem:[%s296 + $0xc0] sm:$0xff]
        %v1516 = vld [vmem:[%s296 + $0xc8] sm:$0xff]
        %v1517 = vld [vmem:[%s296 + $0xd0] sm:$0xff]
        %v1518 = vld [vmem:[%s296 + $0xd8] sm:$0xff]
        %v1519 = vld [vmem:[%s296 + $0xe0] sm:$0xff]
        %v1520 = vld [vmem:[%s296 + $0xe8] sm:$0xff]
        %v1521 = vld [vmem:[%s296 + $0xf0] sm:$0xff]
        %v1522 = vld [vmem:[%s296 + $0xf8] sm:$0xff]
        %v1523 = vld [vmem:[%s296 + $0x100] sm:$0xff]
        %v1524 = vld [vmem:[%s296 + $0x108] sm:$0xff]
        %v1525 = vld [vmem:[%s296 + $0x110] sm:$0xff]
        %v1526 = vld [vmem:[%s296 + $0x118] sm:$0xff]
        %v1527 = vld [vmem:[%s296 + $0x120] sm:$0xff]
        %v1528 = vld [vmem:[%s296 + $0x128] sm:$0xff]
        %v1529 = vld [vmem:[%s296 + $0x130] sm:$0xff]
        %v1530 = vld [vmem:[%s296 + $0x138] sm:$0xff]
        %v1531 = vld [vmem:[%s296 + $0x140] sm:$0xff]
        %v1532 = vld [vmem:[%s296 + $0x148] sm:$0xff]
        %v1533 = vld [vmem:[%s296 + $0x150] sm:$0xff]
        %v1534 = vld [vmem:[%s296 + $0x158] sm:$0xff]
        %v1535 = vld [vmem:[%s296 + $0x160] sm:$0xff]
        %v1536 = vld [vmem:[%s296 + $0x168] sm:$0xff]
        %v1537 = vld [vmem:[%s296 + $0x170] sm:$0xff]
        %v1538 = vld [vmem:[%s296 + $0x178] sm:$0xff]
        %v1539 = vld [vmem:[%s296 + $0x180] sm:$0xff]
        %v1540 = vld [vmem:[%s296 + $0x188] sm:$0xff]
        %v1541 = vld [vmem:[%s296 + $0x190] sm:$0xff]
        %v1542 = vld [vmem:[%s296 + $0x198] sm:$0xff]
        %v1543 = vld [vmem:[%s296 + $0x1a0] sm:$0xff]
        %v1544 = vld [vmem:[%s296 + $0x1a8] sm:$0xff]
        %v1545 = vld [vmem:[%s296 + $0x1b0] sm:$0xff]
        %v1546 = vld [vmem:[%s296 + $0x1b8] sm:$0xff]
        %v1547 = vld [vmem:[%s296 + $0x1c0] sm:$0xff]
        %v1548 = vld [vmem:[%s296 + $0x1c8] sm:$0xff]
        %v1549 = vld [vmem:[%s296 + $0x1d0] sm:$0xff]
        %v1550 = vld [vmem:[%s296 + $0x1d8] sm:$0xff]
        %v1551 = vld [vmem:[%s296 + $0x1e0] sm:$0xff]
        %v1552 = vld [vmem:[%s296 + $0x1e8] sm:$0xff]
        %v1553 = vld [vmem:[%s296 + $0x1f0] sm:$0xff]
        %v1554 = vld [vmem:[%s296 + $0x1f8] sm:$0xff]
        %1556 = vset.pattern.permute.xlu0 0
        %1557 = vperm.xlu0 %1556, %v1491
        %v1558 = vpop.permute.xlu0 %1557
        %1561 = vset.pattern.permute.xlu0 0
        %1562 = vperm.xlu0 %1561, %v1492
        %v1563 = vpop.permute.xlu0 %1562
        %1566 = vset.pattern.permute.xlu0 0
        %1567 = vperm.xlu0 %1566, %v1493
        %v1568 = vpop.permute.xlu0 %1567
        %1571 = vset.pattern.permute.xlu0 0
        %1572 = vperm.xlu0 %1571, %v1494
        %v1573 = vpop.permute.xlu0 %1572
        %1576 = vset.pattern.permute.xlu0 0
        %1577 = vperm.xlu0 %1576, %v1495
        %v1578 = vpop.permute.xlu0 %1577
        %1581 = vset.pattern.permute.xlu0 0
        %1582 = vperm.xlu0 %1581, %v1496
        %v1583 = vpop.permute.xlu0 %1582
        %1586 = vset.pattern.permute.xlu0 0
        %1587 = vperm.xlu0 %1586, %v1497
        %v1588 = vpop.permute.xlu0 %1587
        %1591 = vset.pattern.permute.xlu0 0
        %1592 = vperm.xlu0 %1591, %v1498
        %v1593 = vpop.permute.xlu0 %1592
        %1596 = vset.pattern.permute.xlu0 0
        %1597 = vperm.xlu0 %1596, %v1499
        %v1598 = vpop.permute.xlu0 %1597
        %1601 = vset.pattern.permute.xlu0 0
        %1602 = vperm.xlu0 %1601, %v1500
        %v1603 = vpop.permute.xlu0 %1602
        %1606 = vset.pattern.permute.xlu0 0
        %1607 = vperm.xlu0 %1606, %v1501
        %v1608 = vpop.permute.xlu0 %1607
        %1611 = vset.pattern.permute.xlu0 0
        %1612 = vperm.xlu0 %1611, %v1502
        %v1613 = vpop.permute.xlu0 %1612
        %1616 = vset.pattern.permute.xlu0 0
        %1617 = vperm.xlu0 %1616, %v1503
        %v1618 = vpop.permute.xlu0 %1617
        %1621 = vset.pattern.permute.xlu0 0
        %1622 = vperm.xlu0 %1621, %v1504
        %v1623 = vpop.permute.xlu0 %1622
        %1626 = vset.pattern.permute.xlu0 0
        %1627 = vperm.xlu0 %1626, %v1505
        %v1628 = vpop.permute.xlu0 %1627
        %1631 = vset.pattern.permute.xlu0 0
        %1632 = vperm.xlu0 %1631, %v1506
        %v1633 = vpop.permute.xlu0 %1632
        %1636 = vset.pattern.permute.xlu0 0
        %1637 = vperm.xlu0 %1636, %v1507
        %v1638 = vpop.permute.xlu0 %1637
        %1641 = vset.pattern.permute.xlu0 0
        %1642 = vperm.xlu0 %1641, %v1508
        %v1643 = vpop.permute.xlu0 %1642
        %1646 = vset.pattern.permute.xlu0 0
        %1647 = vperm.xlu0 %1646, %v1509
        %v1648 = vpop.permute.xlu0 %1647
        %1651 = vset.pattern.permute.xlu0 0
        %1652 = vperm.xlu0 %1651, %v1510
        %v1653 = vpop.permute.xlu0 %1652
        %1656 = vset.pattern.permute.xlu0 0
        %1657 = vperm.xlu0 %1656, %v1511
        %v1658 = vpop.permute.xlu0 %1657
        %1661 = vset.pattern.permute.xlu0 0
        %1662 = vperm.xlu0 %1661, %v1512
        %v1663 = vpop.permute.xlu0 %1662
        %1666 = vset.pattern.permute.xlu0 0
        %1667 = vperm.xlu0 %1666, %v1513
        %v1668 = vpop.permute.xlu0 %1667
        %1671 = vset.pattern.permute.xlu0 0
        %1672 = vperm.xlu0 %1671, %v1514
        %v1673 = vpop.permute.xlu0 %1672
        %1676 = vset.pattern.permute.xlu0 0
        %1677 = vperm.xlu0 %1676, %v1515
        %v1678 = vpop.permute.xlu0 %1677
        %1681 = vset.pattern.permute.xlu0 0
        %1682 = vperm.xlu0 %1681, %v1516
        %v1683 = vpop.permute.xlu0 %1682
        %1686 = vset.pattern.permute.xlu0 0
        %1687 = vperm.xlu0 %1686, %v1517
        %v1688 = vpop.permute.xlu0 %1687
        %1691 = vset.pattern.permute.xlu0 0
        %1692 = vperm.xlu0 %1691, %v1518
        %v1693 = vpop.permute.xlu0 %1692
        %1696 = vset.pattern.permute.xlu0 0
        %1697 = vperm.xlu0 %1696, %v1519
        %v1698 = vpop.permute.xlu0 %1697
        %1701 = vset.pattern.permute.xlu0 0
        %1702 = vperm.xlu0 %1701, %v1520
        %v1703 = vpop.permute.xlu0 %1702
        %1706 = vset.pattern.permute.xlu0 0
        %1707 = vperm.xlu0 %1706, %v1521
        %v1708 = vpop.permute.xlu0 %1707
        %1711 = vset.pattern.permute.xlu0 0
        %1712 = vperm.xlu0 %1711, %v1522
        %v1713 = vpop.permute.xlu0 %1712
        %1716 = vset.pattern.permute.xlu0 0
        %1717 = vperm.xlu0 %1716, %v1523
        %v1718 = vpop.permute.xlu0 %1717
        %1721 = vset.pattern.permute.xlu0 0
        %1722 = vperm.xlu0 %1721, %v1524
        %v1723 = vpop.permute.xlu0 %1722
        %1726 = vset.pattern.permute.xlu0 0
        %1727 = vperm.xlu0 %1726, %v1525
        %v1728 = vpop.permute.xlu0 %1727
        %1731 = vset.pattern.permute.xlu0 0
        %1732 = vperm.xlu0 %1731, %v1526
        %v1733 = vpop.permute.xlu0 %1732
        %1736 = vset.pattern.permute.xlu0 0
        %1737 = vperm.xlu0 %1736, %v1527
        %v1738 = vpop.permute.xlu0 %1737
        %1741 = vset.pattern.permute.xlu0 0
        %1742 = vperm.xlu0 %1741, %v1528
        %v1743 = vpop.permute.xlu0 %1742
        %1746 = vset.pattern.permute.xlu0 0
        %1747 = vperm.xlu0 %1746, %v1529
        %v1748 = vpop.permute.xlu0 %1747
        %1751 = vset.pattern.permute.xlu0 0
        %1752 = vperm.xlu0 %1751, %v1530
        %v1753 = vpop.permute.xlu0 %1752
        %1756 = vset.pattern.permute.xlu0 0
        %1757 = vperm.xlu0 %1756, %v1531
        %v1758 = vpop.permute.xlu0 %1757
        %1761 = vset.pattern.permute.xlu0 0
        %1762 = vperm.xlu0 %1761, %v1532
        %v1763 = vpop.permute.xlu0 %1762
        %1766 = vset.pattern.permute.xlu0 0
        %1767 = vperm.xlu0 %1766, %v1533
        %v1768 = vpop.permute.xlu0 %1767
        %1771 = vset.pattern.permute.xlu0 0
        %1772 = vperm.xlu0 %1771, %v1534
        %v1773 = vpop.permute.xlu0 %1772
        %1776 = vset.pattern.permute.xlu0 0
        %1777 = vperm.xlu0 %1776, %v1535
        %v1778 = vpop.permute.xlu0 %1777
        %1781 = vset.pattern.permute.xlu0 0
        %1782 = vperm.xlu0 %1781, %v1536
        %v1783 = vpop.permute.xlu0 %1782
        %1786 = vset.pattern.permute.xlu0 0
        %1787 = vperm.xlu0 %1786, %v1537
        %v1788 = vpop.permute.xlu0 %1787
        %1791 = vset.pattern.permute.xlu0 0
        %1792 = vperm.xlu0 %1791, %v1538
        %v1793 = vpop.permute.xlu0 %1792
        %1796 = vset.pattern.permute.xlu0 0
        %1797 = vperm.xlu0 %1796, %v1539
        %v1798 = vpop.permute.xlu0 %1797
        %1801 = vset.pattern.permute.xlu0 0
        %1802 = vperm.xlu0 %1801, %v1540
        %v1803 = vpop.permute.xlu0 %1802
        %1806 = vset.pattern.permute.xlu0 0
        %1807 = vperm.xlu0 %1806, %v1541
        %v1808 = vpop.permute.xlu0 %1807
        %1811 = vset.pattern.permute.xlu0 0
        %1812 = vperm.xlu0 %1811, %v1542
        %v1813 = vpop.permute.xlu0 %1812
        %1816 = vset.pattern.permute.xlu0 0
        %1817 = vperm.xlu0 %1816, %v1543
        %v1818 = vpop.permute.xlu0 %1817
        %1821 = vset.pattern.permute.xlu0 0
        %1822 = vperm.xlu0 %1821, %v1544
        %v1823 = vpop.permute.xlu0 %1822
        %1826 = vset.pattern.permute.xlu0 0
        %1827 = vperm.xlu0 %1826, %v1545
        %v1828 = vpop.permute.xlu0 %1827
        %1831 = vset.pattern.permute.xlu0 0
        %1832 = vperm.xlu0 %1831, %v1546
        %v1833 = vpop.permute.xlu0 %1832
        %1836 = vset.pattern.permute.xlu0 0
        %1837 = vperm.xlu0 %1836, %v1547
        %v1838 = vpop.permute.xlu0 %1837
        %1841 = vset.pattern.permute.xlu0 0
        %1842 = vperm.xlu0 %1841, %v1548
        %v1843 = vpop.permute.xlu0 %1842
        %1846 = vset.pattern.permute.xlu0 0
        %1847 = vperm.xlu0 %1846, %v1549
        %v1848 = vpop.permute.xlu0 %1847
        %1851 = vset.pattern.permute.xlu0 0
        %1852 = vperm.xlu0 %1851, %v1550
        %v1853 = vpop.permute.xlu0 %1852
        %1856 = vset.pattern.permute.xlu0 0
        %1857 = vperm.xlu0 %1856, %v1551
        %v1858 = vpop.permute.xlu0 %1857
        %1861 = vset.pattern.permute.xlu0 0
        %1862 = vperm.xlu0 %1861, %v1552
        %v1863 = vpop.permute.xlu0 %1862
        %1866 = vset.pattern.permute.xlu0 0
        %1867 = vperm.xlu0 %1866, %v1553
        %v1868 = vpop.permute.xlu0 %1867
        %1871 = vset.pattern.permute.xlu0 0
        %1872 = vperm.xlu0 %1871, %v1554
        %v1873 = vpop.permute.xlu0 %1872
        %v1875 = vmul.f32 %v1363, %v1558
        %v1876 = vmul.f32 %v1364, %v1558
        %v1877 = vmul.f32 %v1365, %v1563
        %v1878 = vmul.f32 %v1366, %v1563
        %v1879 = vmul.f32 %v1367, %v1568
        %v1880 = vmul.f32 %v1368, %v1568
        %v1881 = vmul.f32 %v1369, %v1573
        %v1882 = vmul.f32 %v1370, %v1573
        %v1883 = vmul.f32 %v1371, %v1578
        %v1884 = vmul.f32 %v1372, %v1578
        %v1885 = vmul.f32 %v1373, %v1583
        %v1886 = vmul.f32 %v1374, %v1583
        %v1887 = vmul.f32 %v1375, %v1588
        %v1888 = vmul.f32 %v1376, %v1588
        %v1889 = vmul.f32 %v1377, %v1593
        %v1890 = vmul.f32 %v1378, %v1593
        %v1891 = vmul.f32 %v1379, %v1598
        %v1892 = vmul.f32 %v1380, %v1598
        %v1893 = vmul.f32 %v1381, %v1603
        %v1894 = vmul.f32 %v1382, %v1603
        %v1895 = vmul.f32 %v1383, %v1608
        %v1896 = vmul.f32 %v1384, %v1608
        %v1897 = vmul.f32 %v1385, %v1613
        %v1898 = vmul.f32 %v1386, %v1613
        %v1899 = vmul.f32 %v1387, %v1618
        %v1900 = vmul.f32 %v1388, %v1618
        %v1901 = vmul.f32 %v1389, %v1623
        %v1902 = vmul.f32 %v1390, %v1623
        %v1903 = vmul.f32 %v1391, %v1628
        %v1904 = vmul.f32 %v1392, %v1628
        %v1905 = vmul.f32 %v1393, %v1633
        %v1906 = vmul.f32 %v1394, %v1633
        %v1907 = vmul.f32 %v1395, %v1638
        %v1908 = vmul.f32 %v1396, %v1638
        %v1909 = vmul.f32 %v1397, %v1643
        %v1910 = vmul.f32 %v1398, %v1643
        %v1911 = vmul.f32 %v1399, %v1648
        %v1912 = vmul.f32 %v1400, %v1648
        %v1913 = vmul.f32 %v1401, %v1653
        %v1914 = vmul.f32 %v1402, %v1653
        %v1915 = vmul.f32 %v1403, %v1658
        %v1916 = vmul.f32 %v1404, %v1658
        %v1917 = vmul.f32 %v1405, %v1663
        %v1918 = vmul.f32 %v1406, %v1663
        %v1919 = vmul.f32 %v1407, %v1668
        %v1920 = vmul.f32 %v1408, %v1668
        %v1921 = vmul.f32 %v1409, %v1673
        %v1922 = vmul.f32 %v1410, %v1673
        %v1923 = vmul.f32 %v1411, %v1678
        %v1924 = vmul.f32 %v1412, %v1678
        %v1925 = vmul.f32 %v1413, %v1683
        %v1926 = vmul.f32 %v1414, %v1683
        %v1927 = vmul.f32 %v1415, %v1688
        %v1928 = vmul.f32 %v1416, %v1688
        %v1929 = vmul.f32 %v1417, %v1693
        %v1930 = vmul.f32 %v1418, %v1693
        %v1931 = vmul.f32 %v1419, %v1698
        %v1932 = vmul.f32 %v1420, %v1698
        %v1933 = vmul.f32 %v1421, %v1703
        %v1934 = vmul.f32 %v1422, %v1703
        %v1935 = vmul.f32 %v1423, %v1708
        %v1936 = vmul.f32 %v1424, %v1708
        %v1937 = vmul.f32 %v1425, %v1713
        %v1938 = vmul.f32 %v1426, %v1713
        %v1939 = vmul.f32 %v1427, %v1718
        %v1940 = vmul.f32 %v1428, %v1718
        %v1941 = vmul.f32 %v1429, %v1723
        %v1942 = vmul.f32 %v1430, %v1723
        %v1943 = vmul.f32 %v1431, %v1728
        %v1944 = vmul.f32 %v1432, %v1728
        %v1945 = vmul.f32 %v1433, %v1733
        %v1946 = vmul.f32 %v1434, %v1733
        %v1947 = vmul.f32 %v1435, %v1738
        %v1948 = vmul.f32 %v1436, %v1738
        %v1949 = vmul.f32 %v1437, %v1743
        %v1950 = vmul.f32 %v1438, %v1743
        %v1951 = vmul.f32 %v1439, %v1748
        %v1952 = vmul.f32 %v1440, %v1748
        %v1953 = vmul.f32 %v1441, %v1753
        %v1954 = vmul.f32 %v1442, %v1753
        %v1955 = vmul.f32 %v1443, %v1758
        %v1956 = vmul.f32 %v1444, %v1758
        %v1957 = vmul.f32 %v1445, %v1763
        %v1958 = vmul.f32 %v1446, %v1763
        %v1959 = vmul.f32 %v1447, %v1768
        %v1960 = vmul.f32 %v1448, %v1768
        %v1961 = vmul.f32 %v1449, %v1773
        %v1962 = vmul.f32 %v1450, %v1773
        %v1963 = vmul.f32 %v1451, %v1778
        %v1964 = vmul.f32 %v1452, %v1778
        %v1965 = vmul.f32 %v1453, %v1783
        %v1966 = vmul.f32 %v1454, %v1783
        %v1967 = vmul.f32 %v1455, %v1788
        %v1968 = vmul.f32 %v1456, %v1788
        %v1969 = vmul.f32 %v1457, %v1793
        %v1970 = vmul.f32 %v1458, %v1793
        %v1971 = vmul.f32 %v1459, %v1798
        %v1972 = vmul.f32 %v1460, %v1798
        %v1973 = vmul.f32 %v1461, %v1803
        %v1974 = vmul.f32 %v1462, %v1803
        %v1975 = vmul.f32 %v1463, %v1808
        %v1976 = vmul.f32 %v1464, %v1808
        %v1977 = vmul.f32 %v1465, %v1813
        %v1978 = vmul.f32 %v1466, %v1813
        %v1979 = vmul.f32 %v1467, %v1818
        %v1980 = vmul.f32 %v1468, %v1818
        %v1981 = vmul.f32 %v1469, %v1823
        %v1982 = vmul.f32 %v1470, %v1823
        %v1983 = vmul.f32 %v1471, %v1828
        %v1984 = vmul.f32 %v1472, %v1828
        %v1985 = vmul.f32 %v1473, %v1833
        %v1986 = vmul.f32 %v1474, %v1833
        %v1987 = vmul.f32 %v1475, %v1838
        %v1988 = vmul.f32 %v1476, %v1838
        %v1989 = vmul.f32 %v1477, %v1843
        %v1990 = vmul.f32 %v1478, %v1843
        %v1991 = vmul.f32 %v1479, %v1848
        %v1992 = vmul.f32 %v1480, %v1848
        %v1993 = vmul.f32 %v1481, %v1853
        %v1994 = vmul.f32 %v1482, %v1853
        %v1995 = vmul.f32 %v1483, %v1858
        %v1996 = vmul.f32 %v1484, %v1858
        %v1997 = vmul.f32 %v1485, %v1863
        %v1998 = vmul.f32 %v1486, %v1863
        %v1999 = vmul.f32 %v1487, %v1868
        %v2000 = vmul.f32 %v1488, %v1868
        %v2001 = vmul.f32 %v1489, %v1873
        %v2002 = vmul.f32 %v1490, %v1873
        %v2003 = vadd.f32 %v1875, %v1877
        %v2004 = vadd.f32 %v2003, %v1879
        %v2005 = vadd.f32 %v2004, %v1881
        %v2006 = vadd.f32 %v2005, %v1883
        %v2007 = vadd.f32 %v2006, %v1885
        %v2008 = vadd.f32 %v2007, %v1887
        %v2009 = vadd.f32 %v2008, %v1889
        %v2010 = vrot.slane %v2009, 4
        %v2011 = vadd.f32 %v2009, %v2010
        %v2012 = vrot.slane %v2011, 2
        %v2013 = vadd.f32 %v2011, %v2012
        %v2014 = vrot.slane %v2013, 1
        %v2015 = vadd.f32 %v2013, %v2014
        %v2016 = vadd.f32 %v1876, %v1878
        %v2017 = vadd.f32 %v2016, %v1880
        %v2018 = vadd.f32 %v2017, %v1882
        %v2019 = vadd.f32 %v2018, %v1884
        %v2020 = vadd.f32 %v2019, %v1886
        %v2021 = vadd.f32 %v2020, %v1888
        %v2022 = vadd.f32 %v2021, %v1890
        %v2023 = vrot.slane %v2022, 4
        %v2024 = vadd.f32 %v2022, %v2023
        %v2025 = vrot.slane %v2024, 2
        %v2026 = vadd.f32 %v2024, %v2025
        %v2027 = vrot.slane %v2026, 1
        %v2028 = vadd.f32 %v2026, %v2027
        %v2029 = vadd.f32 %v1891, %v1893
        %v2030 = vadd.f32 %v2029, %v1895
        %v2031 = vadd.f32 %v2030, %v1897
        %v2032 = vadd.f32 %v2031, %v1899
        %v2033 = vadd.f32 %v2032, %v1901
        %v2034 = vadd.f32 %v2033, %v1903
        %v2035 = vadd.f32 %v2034, %v1905
        %v2036 = vrot.slane %v2035, 4
        %v2037 = vadd.f32 %v2035, %v2036
        %v2038 = vrot.slane %v2037, 2
        %v2039 = vadd.f32 %v2037, %v2038
        %v2040 = vrot.slane %v2039, 1
        %v2041 = vadd.f32 %v2039, %v2040
        %v2042 = vadd.f32 %v1892, %v1894
        %v2043 = vadd.f32 %v2042, %v1896
        %v2044 = vadd.f32 %v2043, %v1898
        %v2045 = vadd.f32 %v2044, %v1900
        %v2046 = vadd.f32 %v2045, %v1902
        %v2047 = vadd.f32 %v2046, %v1904
        %v2048 = vadd.f32 %v2047, %v1906
        %v2049 = vrot.slane %v2048, 4
        %v2050 = vadd.f32 %v2048, %v2049
        %v2051 = vrot.slane %v2050, 2
        %v2052 = vadd.f32 %v2050, %v2051
        %v2053 = vrot.slane %v2052, 1
        %v2054 = vadd.f32 %v2052, %v2053
        %v2055 = vadd.f32 %v1907, %v1909
        %v2056 = vadd.f32 %v2055, %v1911
        %v2057 = vadd.f32 %v2056, %v1913
        %v2058 = vadd.f32 %v2057, %v1915
        %v2059 = vadd.f32 %v2058, %v1917
        %v2060 = vadd.f32 %v2059, %v1919
        %v2061 = vadd.f32 %v2060, %v1921
        %v2062 = vrot.slane %v2061, 4
        %v2063 = vadd.f32 %v2061, %v2062
        %v2064 = vrot.slane %v2063, 2
        %v2065 = vadd.f32 %v2063, %v2064
        %v2066 = vrot.slane %v2065, 1
        %v2067 = vadd.f32 %v2065, %v2066
        %v2068 = vadd.f32 %v1908, %v1910
        %v2069 = vadd.f32 %v2068, %v1912
        %v2070 = vadd.f32 %v2069, %v1914
        %v2071 = vadd.f32 %v2070, %v1916
        %v2072 = vadd.f32 %v2071, %v1918
        %v2073 = vadd.f32 %v2072, %v1920
        %v2074 = vadd.f32 %v2073, %v1922
        %v2075 = vrot.slane %v2074, 4
        %v2076 = vadd.f32 %v2074, %v2075
        %v2077 = vrot.slane %v2076, 2
        %v2078 = vadd.f32 %v2076, %v2077
        %v2079 = vrot.slane %v2078, 1
        %v2080 = vadd.f32 %v2078, %v2079
        %v2081 = vadd.f32 %v1923, %v1925
        %v2082 = vadd.f32 %v2081, %v1927
        %v2083 = vadd.f32 %v2082, %v1929
        %v2084 = vadd.f32 %v2083, %v1931
        %v2085 = vadd.f32 %v2084, %v1933
        %v2086 = vadd.f32 %v2085, %v1935
        %v2087 = vadd.f32 %v2086, %v1937
        %v2088 = vrot.slane %v2087, 4
        %v2089 = vadd.f32 %v2087, %v2088
        %v2090 = vrot.slane %v2089, 2
        %v2091 = vadd.f32 %v2089, %v2090
        %v2092 = vrot.slane %v2091, 1
        %v2093 = vadd.f32 %v2091, %v2092
        %v2094 = vadd.f32 %v1924, %v1926
        %v2095 = vadd.f32 %v2094, %v1928
        %v2096 = vadd.f32 %v2095, %v1930
        %v2097 = vadd.f32 %v2096, %v1932
        %v2098 = vadd.f32 %v2097, %v1934
        %v2099 = vadd.f32 %v2098, %v1936
        %v2100 = vadd.f32 %v2099, %v1938
        %v2101 = vrot.slane %v2100, 4
        %v2102 = vadd.f32 %v2100, %v2101
        %v2103 = vrot.slane %v2102, 2
        %v2104 = vadd.f32 %v2102, %v2103
        %v2105 = vrot.slane %v2104, 1
        %v2106 = vadd.f32 %v2104, %v2105
        %v2107 = vadd.f32 %v1939, %v1941
        %v2108 = vadd.f32 %v2107, %v1943
        %v2109 = vadd.f32 %v2108, %v1945
        %v2110 = vadd.f32 %v2109, %v1947
        %v2111 = vadd.f32 %v2110, %v1949
        %v2112 = vadd.f32 %v2111, %v1951
        %v2113 = vadd.f32 %v2112, %v1953
        %v2114 = vrot.slane %v2113, 4
        %v2115 = vadd.f32 %v2113, %v2114
        %v2116 = vrot.slane %v2115, 2
        %v2117 = vadd.f32 %v2115, %v2116
        %v2118 = vrot.slane %v2117, 1
        %v2119 = vadd.f32 %v2117, %v2118
        %v2120 = vadd.f32 %v1940, %v1942
        %v2121 = vadd.f32 %v2120, %v1944
        %v2122 = vadd.f32 %v2121, %v1946
        %v2123 = vadd.f32 %v2122, %v1948
        %v2124 = vadd.f32 %v2123, %v1950
        %v2125 = vadd.f32 %v2124, %v1952
        %v2126 = vadd.f32 %v2125, %v1954
        %v2127 = vrot.slane %v2126, 4
        %v2128 = vadd.f32 %v2126, %v2127
        %v2129 = vrot.slane %v2128, 2
        %v2130 = vadd.f32 %v2128, %v2129
        %v2131 = vrot.slane %v2130, 1
        %v2132 = vadd.f32 %v2130, %v2131
        %v2133 = vadd.f32 %v1955, %v1957
        %v2134 = vadd.f32 %v2133, %v1959
        %v2135 = vadd.f32 %v2134, %v1961
        %v2136 = vadd.f32 %v2135, %v1963
        %v2137 = vadd.f32 %v2136, %v1965
        %v2138 = vadd.f32 %v2137, %v1967
        %v2139 = vadd.f32 %v2138, %v1969
        %v2140 = vrot.slane %v2139, 4
        %v2141 = vadd.f32 %v2139, %v2140
        %v2142 = vrot.slane %v2141, 2
        %v2143 = vadd.f32 %v2141, %v2142
        %v2144 = vrot.slane %v2143, 1
        %v2145 = vadd.f32 %v2143, %v2144
        %v2146 = vadd.f32 %v1956, %v1958
        %v2147 = vadd.f32 %v2146, %v1960
        %v2148 = vadd.f32 %v2147, %v1962
        %v2149 = vadd.f32 %v2148, %v1964
        %v2150 = vadd.f32 %v2149, %v1966
        %v2151 = vadd.f32 %v2150, %v1968
        %v2152 = vadd.f32 %v2151, %v1970
        %v2153 = vrot.slane %v2152, 4
        %v2154 = vadd.f32 %v2152, %v2153
        %v2155 = vrot.slane %v2154, 2
        %v2156 = vadd.f32 %v2154, %v2155
        %v2157 = vrot.slane %v2156, 1
        %v2158 = vadd.f32 %v2156, %v2157
        %v2159 = vadd.f32 %v1971, %v1973
        %v2160 = vadd.f32 %v2159, %v1975
        %v2161 = vadd.f32 %v2160, %v1977
        %v2162 = vadd.f32 %v2161, %v1979
        %v2163 = vadd.f32 %v2162, %v1981
        %v2164 = vadd.f32 %v2163, %v1983
        %v2165 = vadd.f32 %v2164, %v1985
        %v2166 = vrot.slane %v2165, 4
        %v2167 = vadd.f32 %v2165, %v2166
        %v2168 = vrot.slane %v2167, 2
        %v2169 = vadd.f32 %v2167, %v2168
        %v2170 = vrot.slane %v2169, 1
        %v2171 = vadd.f32 %v2169, %v2170
        %v2172 = vadd.f32 %v1972, %v1974
        %v2173 = vadd.f32 %v2172, %v1976
        %v2174 = vadd.f32 %v2173, %v1978
        %v2175 = vadd.f32 %v2174, %v1980
        %v2176 = vadd.f32 %v2175, %v1982
        %v2177 = vadd.f32 %v2176, %v1984
        %v2178 = vadd.f32 %v2177, %v1986
        %v2179 = vrot.slane %v2178, 4
        %v2180 = vadd.f32 %v2178, %v2179
        %v2181 = vrot.slane %v2180, 2
        %v2182 = vadd.f32 %v2180, %v2181
        %v2183 = vrot.slane %v2182, 1
        %v2184 = vadd.f32 %v2182, %v2183
        %v2185 = vadd.f32 %v1987, %v1989
        %v2186 = vadd.f32 %v2185, %v1991
        %v2187 = vadd.f32 %v2186, %v1993
        %v2188 = vadd.f32 %v2187, %v1995
        %v2189 = vadd.f32 %v2188, %v1997
        %v2190 = vadd.f32 %v2189, %v1999
        %v2191 = vadd.f32 %v2190, %v2001
        %v2192 = vrot.slane %v2191, 4
        %v2193 = vadd.f32 %v2191, %v2192
        %v2194 = vrot.slane %v2193, 2
        %v2195 = vadd.f32 %v2193, %v2194
        %v2196 = vrot.slane %v2195, 1
        %v2197 = vadd.f32 %v2195, %v2196
        %v2198 = vadd.f32 %v1988, %v1990
        %v2199 = vadd.f32 %v2198, %v1992
        %v2200 = vadd.f32 %v2199, %v1994
        %v2201 = vadd.f32 %v2200, %v1996
        %v2202 = vadd.f32 %v2201, %v1998
        %v2203 = vadd.f32 %v2202, %v2000
        %v2204 = vadd.f32 %v2203, %v2002
        %v2205 = vrot.slane %v2204, 4
        %v2206 = vadd.f32 %v2204, %v2205
        %v2207 = vrot.slane %v2206, 2
        %v2208 = vadd.f32 %v2206, %v2207
        %v2209 = vrot.slane %v2208, 1
        %v2210 = vadd.f32 %v2208, %v2209
        %vm2227 = vcmask 1041409
        %v2228 = vsel %vm2227, %v2041, %v2015
        %vm2229 = vcmask 1042434
        %v2230 = vsel %vm2229, %v2067, %v2228
        %vm2231 = vcmask 1043459
        %v2232 = vsel %vm2231, %v2093, %v2230
        %vm2233 = vcmask 1044484
        %v2234 = vsel %vm2233, %v2119, %v2232
        %vm2235 = vcmask 1045509
        %v2236 = vsel %vm2235, %v2145, %v2234
        %vm2237 = vcmask 1046534
        %v2238 = vsel %vm2237, %v2171, %v2236
        %vm2239 = vcmask 1047559
        %v2240 = vsel %vm2239, %v2197, %v2238
        %v2241 = vsel %vm2227, %v2054, %v2028
        %v2242 = vsel %vm2229, %v2080, %v2241
        %v2243 = vsel %vm2231, %v2106, %v2242
        %v2244 = vsel %vm2233, %v2132, %v2243
        %v2245 = vsel %vm2235, %v2158, %v2244
        %v2246 = vsel %vm2237, %v2184, %v2245
        %v2247 = vsel %vm2239, %v2210, %v2246
        %2250 = vst [vmem:[%s276] sm:$0xff] %v2240
        %2251 = vst [vmem:[%s276 + $0x8] sm:$0xff] %v2247
        %s2252 = sand.u32 %s166, 1
        %s2253 = scalar_lea.sflag [#allocation3], %s2252
        %s2254 = sand.u32 %s166, 1
        %s2255 = smul.addr %s2254, 16
        %s2256 = scalar_lea.vmem [#allocation2], %s2255
        // Predicated region
        $region41: #{tpu_custom_call.1} parent=39 // pred_check
          %p2257 = pneg %p176
        $region42: #{tpu_custom_call.1} parent=39 // pred_check_branch
          %2259 = sbr.rel (%p2257) target = $region44
        $region43: #{tpu_custom_call.1} parent=39 // pred_region
          %s2261 = ssub.s32 256, 256
          %2262 = vsyncadd %s2253, %s2261
          %s2263 = smul.addr %s24, 2
          %s2264 = smul.addr %s23, 4
          %s2265 = sadd.s32 %s2263, %s2264
          %s2266 = smul.addr %s2265, 128
          %s2267 = scalar_lea.hbm %s5, %s2266
          %s2269 = sshll.u32 %s2256, 4
          %s2270 = int_to_ptr.vmem [resolvable:$true] %s2269
          %2272 = dma.vmem_to_hbm [thread:$0]  %s2270, 256, %s2267, %s2253
        $region44: #{tpu_custom_call.1} parent=39 // pred_fallthru
          _
      $region40: #{tpu_custom_call.1} parent=5 // pred_fallthru
        _
      %p2273 = scmp.le.s32.totalorder 2, %s14
      // Predicated region
      $region45: #{tpu_custom_call.1} parent=5 // pred_check
        %p2274 = pneg %p2273
      $region46: #{tpu_custom_call.1} parent=5 // pred_check_branch
        %2276 = sbr.rel (%p2274) target = $region48
      $region47: #{tpu_custom_call.1} parent=5 // pred_region
        %s2277 = ssub.s32 %s14, 2
        // Predicated region
        $region49: #{tpu_custom_call.1} parent=47 // pred_check
          %p2278 = pneg %p182
        $region50: #{tpu_custom_call.1} parent=47 // pred_check_branch
          %2280 = sbr.rel (%p2278) target = $region52
        $region51: #{tpu_custom_call.1} parent=47 // pred_region
          %s2281 = sand.u32 %s167, 1
          %s2282 = scalar_lea.sflag [#allocation3], %s2281
          %s2283 = sand.u32 %s167, 1
          %s2284 = smul.addr %s2283, 16
          %s2285 = scalar_lea.vmem [#allocation2], %s2284
          %2286 = dma.done %s2282, 256
        $region52: #{tpu_custom_call.1} parent=47 // pred_fallthru
          _
      $region48: #{tpu_custom_call.1} parent=5 // pred_fallthru
        _
    $region6: #{tpu_custom_call.1} parent=1 // loop_footer
      %s18 = sadd.s32 1, %s14
    $region7: #{tpu_custom_call.1} parent=1 // loop_footer_branch
      %13 = sbr.rel target = $region3
    $region8: #{tpu_custom_call.1} parent=1 // loop_exit
      _
    %2287 = vsyncpa [#allocation3], 1
    %s2288 = scalar_lea.sflag [#allocation3], 1
    %2289 = vsyncpa %s2288, 1

</llo_original>
